<compile_context>
chip_gen: v7x
topology: tpu7x:2x2x1
jax: 0.10.0
libtpu: 0.0.40
codegen_flags: <defaults>
</compile_context>

<pallas_src>
import functools
import math

import jax
import jax.numpy as jnp
from jax import lax
from jax.experimental import pallas as pl
from jax.experimental.pallas import tpu as pltpu

MASK_VALUE = -3.4028234663852886e+38   # -torch.finfo(torch.float32).max
LN_EPS = 1e-5                          # F.layer_norm default eps
L2_EPS_SQ = 1e-24                      # F.normalize eps=1e-12, squared
VMEM_LIMIT = 48 * 1024 * 1024          # safe on v5e/v6e (128 MiB) and v7x (64 MiB)

PROJ_BLOCK = 512                       # row tile for the projection kernels
Q_BLOCK = 256                          # query row tile for attention
KV_BLOCK = 512                         # kv tile for attention (when J is large)


def _round_up(x, m):
    return ((x + m - 1) // m) * m


def _pad_axis(a, axis, target):
    pad = target - a.shape[axis]
    if pad == 0:
        return a
    widths = [(0, 0)] * a.ndim
    widths[axis] = (0, pad)
    return jnp.pad(a, widths)


def _row_plan(m, block):
    """(tile, padded_extent): full extent when small, else `block` tiles."""
    if m <= block:
        return m, m
    return block, _round_up(m, block)


# ----------------------------------------------------------------------------
# Fused projection kernel: optional LayerNorm, N matmuls sharing the input,
# optional per-head l2norm + learned scale (done in f32, no per-head slicing:
# sum-of-squares via two small "head expand" matmuls).
# ----------------------------------------------------------------------------
def _proj_kernel(*refs, n_w, do_ln, norm_mask):
    it = iter(refs)
    x = next(it)[...]                                     # (tm, D) f32
    if do_ln:
        g = next(it)[...]                                 # (1, D) f32
        mean = jnp.mean(x, axis=-1, keepdims=True)
        xc = x - mean
        var = jnp.mean(xc * xc, axis=-1, keepdims=True)
        x = xc * lax.rsqrt(var + LN_EPS) * g              # beta buffer is zero
    exp_hd = next(it)[...]                                # (H, inner) f32
    exp_dh = next(it)[...]                                # (inner, H) f32
    scales = [next(it)[...] if f else None for f in norm_mask]   # (1, inner)
    w_refs = [next(it) for _ in range(n_w)]
    o_refs = [next(it) for _ in range(n_w)]

    xb = x.astype(jnp.bfloat16)
    for w_ref, o_ref, sc, do_norm in zip(w_refs, o_refs, scales, norm_mask):
        y = jnp.dot(xb, w_ref[...], preferred_element_type=jnp.float32)
        if do_norm:
            # per-head sum of squares broadcast back across each head's lanes
            ss = jnp.dot(
                jnp.dot(y * y, exp_dh, preferred_element_type=jnp.float32),
                exp_hd, preferred_element_type=jnp.float32)
            y = y * lax.rsqrt(jnp.maximum(ss, L2_EPS_SQ)) * sc
        o_ref[...] = y.astype(o_ref.dtype)


def _fused_proj(x2d, weights, scales, gamma, expand, expand_t):
    """y_i = [LayerNorm](x) @ W_i, optionally per-head-normalized/scaled."""
    m, d = x2d.shape
    do_ln = gamma is not None
    tm, m_p = _row_plan(m, PROJ_BLOCK)
    xp = _pad_axis(x2d, 0, m_p)
    norm_mask = tuple(s is not None for s in scales)
    kernel = functools.partial(_proj_kernel, n_w=len(weights), do_ln=do_ln,
                               norm_mask=norm_mask)

    row = lambda i: (i, 0)
    const = lambda i: (0, 0)
    args = [xp]
    in_specs = [pl.BlockSpec((tm, d), row)]
    if do_ln:
        args.append(gamma)
        in_specs.append(pl.BlockSpec((1, d), const))
    args += [expand, expand_t]
    in_specs += [pl.BlockSpec(expand.shape, const),
                 pl.BlockSpec(expand_t.shape, const)]
    for s in scales:
        if s is not None:
            args.append(s)
            in_specs.append(pl.BlockSpec(s.shape, const))
    for w in weights:
        args.append(w)
        in_specs.append(pl.BlockSpec(w.shape, const))

    out_shape = tuple(jax.ShapeDtypeStruct((m_p, w.shape[1]), jnp.bfloat16)
                      for w in weights)
    out_specs = tuple(pl.BlockSpec((tm, w.shape[1]), row) for w in weights)

    outs = pl.pallas_call(
        kernel, out_shape=out_shape, grid=(m_p // tm,),
        in_specs=in_specs, out_specs=out_specs,
        compiler_params=pltpu.CompilerParams(
            dimension_semantics=("parallel",),
            vmem_limit_bytes=VMEM_LIMIT),
    )(*args)
    outs = tuple(outs)
    if m_p != m:
        outs = tuple(o[:m] for o in outs)
    return outs


# ----------------------------------------------------------------------------
# Attention core: grid (batch, q-tile, kv-tile["arbitrary"]), all heads per
# step, online softmax with null-kv folded into the init, fused to_out in the
# finalize (lane-dense (tq, dim) output).
# ----------------------------------------------------------------------------
def _attn_kernel(q_ref, k_ref, v_ref, mask_ref, nkbd_ref, nvrow_ref, exp_ref,
                 wo_ref, o_ref, m_scr, l_scr, acc_scr, *, heads, dim_head):
    # q_ref   : (1, tq, inner)  bf16 (already l2-normalized * q_scale*sqrt(s))
    # k_ref   : (1, tkv, inner) bf16 (already l2-normalized * k_scale*sqrt(s))
    # v_ref   : (1, tkv, inner) bf16
    # mask_ref: (1, 1, tkv) int32 (1 = attend)
    # nkbd_ref: (inner, H) bf16  block-diag packed null keys (norm * scale)
    # nvrow   : (1, inner) f32   packed null values
    # exp_ref : (H, inner) f32   head -> lane-group expansion (ones pattern)
    # wo_ref  : (inner, dim) bf16
    # m_scr/l_scr : (H, tq, 1) f32 running max / denom, acc_scr: (tq, inner) f32
    kv_i = pl.program_id(2)
    nkv = pl.num_programs(2)

    @pl.when(kv_i == 0)
    def _init():
        # the null key/value is an always-attended extra column
        sim_null = jnp.dot(q_ref[0], nkbd_ref[...],
                           preferred_element_type=jnp.float32)      # (tq, H)
        ones = jnp.ones_like(sim_null[:, 0:1])
        for h in range(heads):
            m_scr[h] = sim_null[:, h:h + 1]
            l_scr[h] = ones
        acc_scr[...] = jnp.broadcast_to(nvrow_ref[...], acc_scr.shape)

    attend = mask_ref[0] != 0                                        # (1, tkv)
    for h in range(heads):
        sl = slice(h * dim_head, (h + 1) * dim_head)
        qh = q_ref[0, :, sl]                                         # (tq, Dh)
        kh = k_ref[0, :, sl]                                         # (tkv, Dh)
        vh = v_ref[0, :, sl]                                         # (tkv, Dh)
        sim = lax.dot_general(qh, kh, (((1,), (1,)), ((), ())),
                              preferred_element_type=jnp.float32)    # (tq, tkv)
        sim = jnp.where(attend, sim, MASK_VALUE)
        m_prev = m_scr[h]                                            # (tq, 1)
        m_new = jnp.maximum(m_prev, jnp.max(sim, axis=-1, keepdims=True))
        alpha = jnp.exp(m_prev - m_new)
        p = jnp.exp(sim - m_new)
        l_scr[h] = alpha * l_scr[h] + jnp.sum(p, axis=-1, keepdims=True)
        pv = lax.dot_general(p.astype(jnp.bfloat16), vh,
                             (((1,), (0,)), ((), ())),
                             preferred_element_type=jnp.float32)     # (tq, Dh)
        acc_scr[:, sl] = alpha * acc_scr[:, sl] + pv
        m_scr[h] = m_new

    @pl.when(kv_i == nkv - 1)
    def _finalize():
        l_all = jnp.concatenate([l_scr[h] for h in range(heads)], axis=-1)
        l_exp = jnp.dot(l_all, exp_ref[...],
                        preferred_element_type=jnp.float32)          # (tq, inner)
        out = acc_scr[...] * pl.reciprocal(l_exp, approx=True)
        o_ref[0] = jnp.dot(out.astype(jnp.bfloat16), wo_ref[...],
                           preferred_element_type=jnp.float32).astype(o_ref.dtype)


def attention_core(q, k, v, mask, nkbd, nv_row, expand, wo, *,
                   heads, dim_head, tq, tkv):
    b, n_p, inner = q.shape
    j_p = k.shape[1]
    dim = wo.shape[1]
    kernel = functools.partial(_attn_kernel, heads=heads, dim_head=dim_head)
    return pl.pallas_call(
        kernel,
        out_shape=jax.ShapeDtypeStruct((b, n_p, dim), jnp.float32),
        grid=(b, n_p // tq, j_p // tkv),
        in_specs=[
            pl.BlockSpec((1, tq, inner), lambda ib, iq, ik: (ib, iq, 0)),
            pl.BlockSpec((1, tkv, inner), lambda ib, iq, ik: (ib, ik, 0)),
            pl.BlockSpec((1, tkv, inner), lambda ib, iq, ik: (ib, ik, 0)),
            pl.BlockSpec((1, 1, tkv), lambda ib, iq, ik: (ib, 0, ik)),
            pl.BlockSpec(nkbd.shape, lambda ib, iq, ik: (0, 0)),
            pl.BlockSpec(nv_row.shape, lambda ib, iq, ik: (0, 0)),
            pl.BlockSpec(expand.shape, lambda ib, iq, ik: (0, 0)),
            pl.BlockSpec(wo.shape, lambda ib, iq, ik: (0, 0)),
        ],
        out_specs=pl.BlockSpec((1, tq, dim), lambda ib, iq, ik: (ib, iq, 0)),
        scratch_shapes=[pltpu.VMEM((heads, tq, 1), jnp.float32),
                        pltpu.VMEM((heads, tq, 1), jnp.float32),
                        pltpu.VMEM((tq, inner), jnp.float32)],
        compiler_params=pltpu.CompilerParams(
            dimension_semantics=("parallel", "parallel", "arbitrary"),
            vmem_limit_bytes=VMEM_LIMIT),
    )(q, k, v, mask, nkbd, nv_row, expand, wo)


# ----------------------------------------------------------------------------
# Attention.forward glue (matches the PyTorch module, dropout=0 / eval)
# ----------------------------------------------------------------------------
def attention_forward(params, x, context=None, context_mask=None, *,
                      heads, dim_head, scale=8.0, cross_attend=False):
    assert (context is not None) == cross_attend
    b, n, dim = x.shape
    inner = heads * dim_head
    f32 = jnp.float32

    # --- constants (folded under jit when params are captured) ---------------
    wq = params['to_q'].astype(jnp.bfloat16)
    wk = params['to_kv'][:, :inner].astype(jnp.bfloat16)
    wv = params['to_kv'][:, inner:].astype(jnp.bfloat16)
    wo = params['to_out'].astype(jnp.bfloat16)
    gamma = params['norm_g'].reshape(1, dim).astype(f32)

    root_scale = math.sqrt(scale)          # fold sqrt(scale) into both scales
    qs_row = jnp.tile(params['q_scale'] * root_scale, heads).reshape(1, inner).astype(f32)
    ks_row = jnp.tile(params['k_scale'] * root_scale, heads).reshape(1, inner).astype(f32)

    hid = jnp.arange(inner) // dim_head                          # lane -> head
    expand = (jnp.arange(heads)[:, None] == hid[None, :]).astype(f32)   # (H, inner)
    expand_t = expand.T                                                  # (inner, H)

    nk = params['null_kv'][0, :, 0, :]                           # (H, Dh)
    nv = params['null_kv'][1, :, 0, :]                           # (H, Dh)
    nk_n = nk * lax.rsqrt(jnp.maximum(jnp.sum(nk * nk, -1, keepdims=True), L2_EPS_SQ))
    nk_n = nk_n * (params['k_scale'] * root_scale)
    nkbd = jnp.where(hid[:, None] == jnp.arange(heads)[None, :],
                     nk_n.reshape(inner)[:, None], 0.0).astype(jnp.bfloat16)  # (inner, H)
    nv_row = nv.reshape(1, inner).astype(f32)

    # --- tiling / padding plans ----------------------------------------------
    if n <= Q_BLOCK:
        n_p, tq = n, n
    else:
        n_p, tq = _round_up(n, Q_BLOCK), Q_BLOCK

    if cross_attend:
        j = context.shape[1]
        if j <= KV_BLOCK:
            j_p, tkv = j, j
        else:
            j_p, tkv = _round_up(j, KV_BLOCK), KV_BLOCK
    else:
        j = n
        j_p = n_p
        tkv = n_p if n_p <= KV_BLOCK else Q_BLOCK   # Q_BLOCK divides n_p

    x_p = _pad_axis(x, 1, n_p)

    # --- projections (LayerNorm + matmuls + q/k head-norm fused) -------------
    if cross_attend:
        ctx_p = _pad_axis(context, 1, j_p)
        (q,) = _fused_proj(x_p.reshape(b * n_p, dim), (wq,), (qs_row,),
                           gamma, expand, expand_t)
        k, v = _fused_proj(ctx_p.reshape(b * j_p, dim), (wk, wv),
                           (ks_row, None), None, expand, expand_t)
    else:
        q, k, v = _fused_proj(x_p.reshape(b * n_p, dim), (wq, wk, wv),
                              (qs_row, ks_row, None), gamma, expand, expand_t)
    q = q.reshape(b, n_p, inner)
    k = k.reshape(b, j_p, inner)
    v = v.reshape(b, j_p, inner)

    # --- mask (real keys only; null key always attended, padding masked) -----
    if context_mask is None:
        base = jnp.ones((b, j), bool)
    else:
        base = context_mask.astype(bool).reshape(b, j)
    mask = _pad_axis(base, 1, j_p).astype(jnp.int32).reshape(b, 1, j_p)

    out = attention_core(q, k, v, mask, nkbd, nv_row, expand, wo,
                         heads=heads, dim_head=dim_head, tq=tq, tkv=tkv)
    if n_p != n:
        out = out[:, :n]
    return out


def init_attention_params(key, dim, heads, dim_head):
    inner = heads * dim_head
    k_null, k_q, k_kv, k_out = jax.random.split(key, 4)

    def linear(k, fan_in, fan_out):   # nn.Linear default init, stored (in, out)
        bound = 1.0 / math.sqrt(fan_in)
        return jax.random.uniform(k, (fan_in, fan_out), jnp.float32, -bound, bound)

    return dict(
        norm_g=jnp.ones((dim,), jnp.float32),
        null_kv=jax.random.normal(k_null, (2, heads, 1, dim_head), jnp.float32),
        to_q=linear(k_q, dim, inner),
        to_kv=linear(k_kv, dim, 2 * inner),
        q_scale=jnp.ones((dim_head,), jnp.float32),
        k_scale=jnp.ones((dim_head,), jnp.float32),
        to_out=linear(k_out, inner, dim),
    )


# ----------------------------------------------------------------------------
# Pure-JAX reference (mirrors the PyTorch module) for a loose numerical check
# ----------------------------------------------------------------------------
def reference_forward(params, x, context=None, context_mask=None, *,
                      heads, dim_head, scale=8.0, cross_attend=False):
    b, n, dim = x.shape
    inner = heads * dim_head
    mean = x.mean(-1, keepdims=True)
    var = ((x - mean) ** 2).mean(-1, keepdims=True)
    xn = (x - mean) / jnp.sqrt(var + LN_EPS) * params['norm_g']
    kv_in = context if cross_attend else xn
    q = xn @ params['to_q']
    kv = kv_in @ params['to_kv']
    k, v = kv[..., :inner], kv[..., inner:]

    def split(t):
        return t.reshape(t.shape[0], t.shape[1], heads, dim_head).transpose(0, 2, 1, 3)

    q, k, v = split(q), split(k), split(v)
    nk = jnp.broadcast_to(params['null_kv'][0][None], (b, heads, 1, dim_head))
    nv = jnp.broadcast_to(params['null_kv'][1][None], (b, heads, 1, dim_head))
    k = jnp.concatenate([nk, k], axis=2)
    v = jnp.concatenate([nv, v], axis=2)

    def l2n(t):
        return t / jnp.maximum(jnp.sqrt(jnp.sum(t * t, -1, keepdims=True)), 1e-12)

    q = l2n(q) * params['q_scale']
    k = l2n(k) * params['k_scale']
    sim = jnp.einsum('bhid,bhjd->bhij', q, k) * scale
    if context_mask is not None:
        m = jnp.pad(context_mask.astype(bool), ((0, 0), (1, 0)), constant_values=True)
        sim = jnp.where(m[:, None, None, :], sim, MASK_VALUE)
    attn = jax.nn.softmax(sim, axis=-1)
    out = jnp.einsum('bhij,bhjd->bhid', attn, v)
    out = out.transpose(0, 2, 1, 3).reshape(b, n, inner)
    return out @ params['to_out']


if __name__ == "__main__":
    dim, heads, dim_head, scale = 128, 4, 32, 8.0
    b, n, ctx_len = 2, 16, 8

    key = jax.random.PRNGKey(0)
    kp1, kp2, kx, kc = jax.random.split(key, 4)
    p_self = init_attention_params(kp1, dim, heads, dim_head)
    p_cross = init_attention_params(kp2, dim, heads, dim_head)

    x = jax.random.normal(kx, (b, n, dim), jnp.float32)
    context = jax.random.normal(kc, (b, ctx_len, dim), jnp.float32)
    # per-batch context mask (second sample has 3 masked positions)
    context_mask = (jnp.arange(ctx_len)[None, :]
                    < jnp.array([[ctx_len], [ctx_len - 3]]))

    self_fwd = jax.jit(lambda xx: attention_forward(
        p_self, xx, heads=heads, dim_head=dim_head, scale=scale,
        cross_attend=False))
    cross_fwd = jax.jit(lambda xx, cc, mm: attention_forward(
        p_cross, xx, context=cc, context_mask=mm,
        heads=heads, dim_head=dim_head, scale=scale, cross_attend=True))

    y_self = self_fwd(x)
    y_cross = cross_fwd(x, context, context_mask)
    jax.block_until_ready((y_self, y_cross))

    assert y_self.shape == (b, n, dim)
    assert y_cross.shape == (b, n, dim)
    assert bool(jnp.all(jnp.isfinite(y_self)))
    assert bool(jnp.all(jnp.isfinite(y_cross)))

    # loose check vs an f32 JAX reference (kernel uses bf16 MXU operands)
    r_self = reference_forward(p_self, x, heads=heads, dim_head=dim_head,
                               scale=scale, cross_attend=False)
    r_cross = reference_forward(p_cross, x, context=context,
                                context_mask=context_mask, heads=heads,
                                dim_head=dim_head, scale=scale,
                                cross_attend=True)

    def rel_err(a, ref):
        return float(jnp.sqrt(jnp.sum((a - ref) ** 2))
                     / (jnp.sqrt(jnp.sum(ref ** 2)) + 1e-6))

    assert rel_err(y_self, r_self) < 0.1
    assert rel_err(y_cross, r_cross) < 0.1
    print("KERNEL_OK")
</pallas_src>

<mosaic_0001>
module attributes {stable_mosaic.version = 11 : i64} {
  func.func @_attn_kernel(%arg0: i32, %arg1: i32, %arg2: i32, %arg3: memref<1x16x128xbf16, #tpu.memory_space<vmem>>, %arg4: memref<1x16x128xbf16, #tpu.memory_space<vmem>>, %arg5: memref<1x16x128xbf16, #tpu.memory_space<vmem>>, %arg6: memref<1x1x16xi32, #tpu.memory_space<vmem>>, %arg7: memref<128x4xbf16, #tpu.memory_space<vmem>>, %arg8: memref<1x128xf32, #tpu.memory_space<vmem>>, %arg9: memref<4x128xf32, #tpu.memory_space<vmem>>, %arg10: memref<128x128xbf16, #tpu.memory_space<vmem>>, %arg11: memref<1x16x128xf32, #tpu.memory_space<vmem>>, %arg12: memref<4x16x1xf32, #tpu.memory_space<vmem>>, %arg13: memref<4x16x1xf32, #tpu.memory_space<vmem>>, %arg14: memref<16x128xf32, #tpu.memory_space<vmem>>) attributes {dimension_semantics = [#tpu.dimension_semantics<parallel>, #tpu.dimension_semantics<parallel>, #tpu.dimension_semantics<arbitrary>], iteration_bounds = array<i64: 2, 1, 1>, scalar_prefetch = 0 : i64, scratch_operands = 3 : i64, tpu.core_type = #tpu.core_type<tc>, window_params = [{transform_indices = @transform_0, window_bounds = array<i64: 1, 16, 128>}, {transform_indices = @transform_1, window_bounds = array<i64: 1, 16, 128>}, {transform_indices = @transform_2, window_bounds = array<i64: 1, 16, 128>}, {transform_indices = @transform_3, window_bounds = array<i64: 1, 1, 16>}, {pipeline_mode = #tpu.pipeline_mode<synchronous>, transform_indices = @transform_4, window_bounds = array<i64: 128, 4>}, {pipeline_mode = #tpu.pipeline_mode<synchronous>, transform_indices = @transform_5, window_bounds = array<i64: 1, 128>}, {pipeline_mode = #tpu.pipeline_mode<synchronous>, transform_indices = @transform_6, window_bounds = array<i64: 4, 128>}, {pipeline_mode = #tpu.pipeline_mode<synchronous>, transform_indices = @transform_7, window_bounds = array<i64: 128, 128>}, {transform_indices = @transform_8, window_bounds = array<i64: 1, 16, 128>}]} {
    %c0_i32 = arith.constant 0 : i32
    %0 = arith.cmpi eq, %arg2, %c0_i32 : i32
    %1 = arith.extui %0 : i1 to i32
    %c0_i32_0 = arith.constant 0 : i32
    %2 = arith.cmpi ne, %1, %c0_i32_0 : i32
    scf.if %2 {
      %c0_119 = arith.constant 0 : index
      %c0_120 = arith.constant 0 : index
      %c0_121 = arith.constant 0 : index
      %170 = vector.load %arg3[%c0_119, %c0_120, %c0_121] : memref<1x16x128xbf16, #tpu.memory_space<vmem>>, vector<1x16x128xbf16>
      %171 = vector.shape_cast %170 : vector<1x16x128xbf16> to vector<16x128xbf16>
      %c0_122 = arith.constant 0 : index
      %c0_123 = arith.constant 0 : index
      %172 = vector.load %arg7[%c0_122, %c0_123] : memref<128x4xbf16, #tpu.memory_space<vmem>>, vector<128x4xbf16>
      %cst_124 = arith.constant dense<0.000000e+00> : vector<16x4xf32>
      %173 = tpu.matmul %171, %172, %cst_124 {dimension_numbers = #tpu.dot_dimension_numbers<[1], [0], [0], [1], [0, 0, 1, 1], [], []>} : vector<16x128xbf16>, vector<128x4xbf16>, vector<16x4xf32> -> vector<16x4xf32>
      %cst_125 = arith.constant 1.000000e+00 : f32
      %174 = vector.broadcast %cst_125 : f32 to vector<16x1xf32>
      %175 = vector.extract_strided_slice %173 {offsets = [0, 0], sizes = [16, 1], strides = [1, 1]} : vector<16x4xf32> to vector<16x1xf32>
      %c0_126 = arith.constant 0 : index
      %c0_127 = arith.constant 0 : index
      %c0_128 = arith.constant 0 : index
      %176 = vector.load %arg12[%c0_126, %c0_127, %c0_128] : memref<4x16x1xf32, #tpu.memory_space<vmem>>, vector<1x16x1xf32>
      %177 = vector.shape_cast %176 : vector<1x16x1xf32> to vector<16x1xf32>
      %178 = vector.shape_cast %175 : vector<16x1xf32> to vector<1x16x1xf32>
      tpu.vector_store %arg12[%c0_126, %c0_127, %c0_128], %178 {strides = array<i32>} : memref<4x16x1xf32, #tpu.memory_space<vmem>>, vector<1x16x1xf32>,
      %c0_129 = arith.constant 0 : index
      %c0_130 = arith.constant 0 : index
      %c0_131 = arith.constant 0 : index
      %179 = vector.load %arg13[%c0_129, %c0_130, %c0_131] : memref<4x16x1xf32, #tpu.memory_space<vmem>>, vector<1x16x1xf32>
      %180 = vector.shape_cast %179 : vector<1x16x1xf32> to vector<16x1xf32>
      %181 = vector.shape_cast %174 : vector<16x1xf32> to vector<1x16x1xf32>
      tpu.vector_store %arg13[%c0_129, %c0_130, %c0_131], %181 {strides = array<i32>} : memref<4x16x1xf32, #tpu.memory_space<vmem>>, vector<1x16x1xf32>,
      %182 = vector.extract_strided_slice %173 {offsets = [0, 1], sizes = [16, 1], strides = [1, 1]} : vector<16x4xf32> to vector<16x1xf32>
      %c1_132 = arith.constant 1 : index
      %c0_133 = arith.constant 0 : index
      %c0_134 = arith.constant 0 : index
      %183 = vector.load %arg12[%c1_132, %c0_133, %c0_134] : memref<4x16x1xf32, #tpu.memory_space<vmem>>, vector<1x16x1xf32>
      %184 = vector.shape_cast %183 : vector<1x16x1xf32> to vector<16x1xf32>
      %185 = vector.shape_cast %182 : vector<16x1xf32> to vector<1x16x1xf32>
      tpu.vector_store %arg12[%c1_132, %c0_133, %c0_134], %185 {strides = array<i32>} : memref<4x16x1xf32, #tpu.memory_space<vmem>>, vector<1x16x1xf32>,
      %c1_135 = arith.constant 1 : index
      %c0_136 = arith.constant 0 : index
      %c0_137 = arith.constant 0 : index
      %186 = vector.load %arg13[%c1_135, %c0_136, %c0_137] : memref<4x16x1xf32, #tpu.memory_space<vmem>>, vector<1x16x1xf32>
      %187 = vector.shape_cast %186 : vector<1x16x1xf32> to vector<16x1xf32>
      %188 = vector.shape_cast %174 : vector<16x1xf32> to vector<1x16x1xf32>
      tpu.vector_store %arg13[%c1_135, %c0_136, %c0_137], %188 {strides = array<i32>} : memref<4x16x1xf32, #tpu.memory_space<vmem>>, vector<1x16x1xf32>,
      %189 = vector.extract_strided_slice %173 {offsets = [0, 2], sizes = [16, 1], strides = [1, 1]} : vector<16x4xf32> to vector<16x1xf32>
      %c2_138 = arith.constant 2 : index
      %c0_139 = arith.constant 0 : index
      %c0_140 = arith.constant 0 : index
      %190 = vector.load %arg12[%c2_138, %c0_139, %c0_140] : memref<4x16x1xf32, #tpu.memory_space<vmem>>, vector<1x16x1xf32>
      %191 = vector.shape_cast %190 : vector<1x16x1xf32> to vector<16x1xf32>
      %192 = vector.shape_cast %189 : vector<16x1xf32> to vector<1x16x1xf32>
      tpu.vector_store %arg12[%c2_138, %c0_139, %c0_140], %192 {strides = array<i32>} : memref<4x16x1xf32, #tpu.memory_space<vmem>>, vector<1x16x1xf32>,
      %c2_141 = arith.constant 2 : index
      %c0_142 = arith.constant 0 : index
      %c0_143 = arith.constant 0 : index
      %193 = vector.load %arg13[%c2_141, %c0_142, %c0_143] : memref<4x16x1xf32, #tpu.memory_space<vmem>>, vector<1x16x1xf32>
      %194 = vector.shape_cast %193 : vector<1x16x1xf32> to vector<16x1xf32>
      %195 = vector.shape_cast %174 : vector<16x1xf32> to vector<1x16x1xf32>
      tpu.vector_store %arg13[%c2_141, %c0_142, %c0_143], %195 {strides = array<i32>} : memref<4x16x1xf32, #tpu.memory_space<vmem>>, vector<1x16x1xf32>,
      %196 = vector.extract_strided_slice %173 {offsets = [0, 3], sizes = [16, 1], strides = [1, 1]} : vector<16x4xf32> to vector<16x1xf32>
      %c3_144 = arith.constant 3 : index
      %c0_145 = arith.constant 0 : index
      %c0_146 = arith.constant 0 : index
      %197 = vector.load %arg12[%c3_144, %c0_145, %c0_146] : memref<4x16x1xf32, #tpu.memory_space<vmem>>, vector<1x16x1xf32>
      %198 = vector.shape_cast %197 : vector<1x16x1xf32> to vector<16x1xf32>
      %199 = vector.shape_cast %196 : vector<16x1xf32> to vector<1x16x1xf32>
      tpu.vector_store %arg12[%c3_144, %c0_145, %c0_146], %199 {strides = array<i32>} : memref<4x16x1xf32, #tpu.memory_space<vmem>>, vector<1x16x1xf32>,
      %c3_147 = arith.constant 3 : index
      %c0_148 = arith.constant 0 : index
      %c0_149 = arith.constant 0 : index
      %200 = vector.load %arg13[%c3_147, %c0_148, %c0_149] : memref<4x16x1xf32, #tpu.memory_space<vmem>>, vector<1x16x1xf32>
      %201 = vector.shape_cast %200 : vector<1x16x1xf32> to vector<16x1xf32>
      %202 = vector.shape_cast %174 : vector<16x1xf32> to vector<1x16x1xf32>
      tpu.vector_store %arg13[%c3_147, %c0_148, %c0_149], %202 {strides = array<i32>} : memref<4x16x1xf32, #tpu.memory_space<vmem>>, vector<1x16x1xf32>,
      %c0_150 = arith.constant 0 : index
      %c0_151 = arith.constant 0 : index
      %203 = vector.load %arg8[%c0_150, %c0_151] : memref<1x128xf32, #tpu.memory_space<vmem>>, vector<1x128xf32>
      %204 = vector.shape_cast %203 : vector<1x128xf32> to vector<1x128xf32>
      %205 = vector.broadcast %204 : vector<1x128xf32> to vector<16x128xf32>
      %c0_152 = arith.constant 0 : index
      %c0_153 = arith.constant 0 : index
      %206 = vector.load %arg14[%c0_152, %c0_153] : memref<16x128xf32, #tpu.memory_space<vmem>>, vector<16x128xf32>
      tpu.vector_store %arg14[%c0_152, %c0_153], %205 {strides = array<i32>} : memref<16x128xf32, #tpu.memory_space<vmem>>, vector<16x128xf32>,
    } else {
    }
    %c0 = arith.constant 0 : index
    %c0_1 = arith.constant 0 : index
    %c0_2 = arith.constant 0 : index
    %3 = vector.load %arg6[%c0, %c0_1, %c0_2] : memref<1x1x16xi32, #tpu.memory_space<vmem>>, vector<1x1x16xi32>
    %4 = vector.shape_cast %3 : vector<1x1x16xi32> to vector<1x16xi32>
    %c0_i32_3 = arith.constant 0 : i32
    %5 = vector.broadcast %c0_i32_3 : i32 to vector<1x16xi32>
    %6 = arith.cmpi ne, %4, %5 : vector<1x16xi32>
    %c0_4 = arith.constant 0 : index
    %c0_5 = arith.constant 0 : index
    %c0_6 = arith.constant 0 : index
    %7 = vector.load %arg3[%c0_4, %c0_5, %c0_6] : memref<1x16x128xbf16, #tpu.memory_space<vmem>>, vector<1x16x32xbf16>
    %8 = vector.shape_cast %7 : vector<1x16x32xbf16> to vector<16x32xbf16>
    %c0_7 = arith.constant 0 : index
    %c0_8 = arith.constant 0 : index
    %c0_9 = arith.constant 0 : index
    %9 = vector.load %arg4[%c0_7, %c0_8, %c0_9] : memref<1x16x128xbf16, #tpu.memory_space<vmem>>, vector<1x16x32xbf16>
    %10 = vector.shape_cast %9 : vector<1x16x32xbf16> to vector<16x32xbf16>
    %c0_10 = arith.constant 0 : index
    %c0_11 = arith.constant 0 : index
    %c0_12 = arith.constant 0 : index
    %11 = vector.load %arg5[%c0_10, %c0_11, %c0_12] : memref<1x16x128xbf16, #tpu.memory_space<vmem>>, vector<1x16x32xbf16>
    %12 = vector.shape_cast %11 : vector<1x16x32xbf16> to vector<16x32xbf16>
    %cst = arith.constant dense<0.000000e+00> : vector<16x16xf32>
    %13 = tpu.matmul %8, %10, %cst {dimension_numbers = #tpu.dot_dimension_numbers<[1], [1], [0], [0], [0, 0, 1, 0], [], []>} : vector<16x32xbf16>, vector<16x32xbf16>, vector<16x16xf32> -> vector<16x16xf32>
    %cst_13 = arith.constant -3.40282347E+38 : f32
    %14 = vector.shape_cast %6 : vector<1x16xi1> to vector<1x16xi1>
    %15 = vector.broadcast %14 : vector<1x16xi1> to vector<16x16xi1>
    %16 = vector.broadcast %cst_13 : f32 to vector<16x16xf32>
    %17 = arith.select %15, %13, %16 : vector<16x16xi1>, vector<16x16xf32>
    %c0_14 = arith.constant 0 : index
    %c0_15 = arith.constant 0 : index
    %c0_16 = arith.constant 0 : index
    %18 = vector.load %arg12[%c0_14, %c0_15, %c0_16] : memref<4x16x1xf32, #tpu.memory_space<vmem>>, vector<1x16x1xf32>
    %19 = vector.shape_cast %18 : vector<1x16x1xf32> to vector<16x1xf32>
    %cst_17 = arith.constant dense<0xFF800000> : vector<16xf32>
    %20 = vector.multi_reduction <maximumf>, %17, %cst_17 [1] : vector<16x16xf32> to vector<16xf32>
    %21 = vector.shape_cast %20 : vector<16xf32> to vector<16x1xf32>
    %22 = arith.maximumf %19, %21 : vector<16x1xf32>
    %23 = arith.subf %19, %22 : vector<16x1xf32>
    %24 = math.exp %23 : vector<16x1xf32>
    %25 = vector.broadcast %22 : vector<16x1xf32> to vector<16x16xf32>
    %26 = arith.subf %17, %25 : vector<16x16xf32>
    %27 = math.exp %26 : vector<16x16xf32>
    %c0_18 = arith.constant 0 : index
    %c0_19 = arith.constant 0 : index
    %c0_20 = arith.constant 0 : index
    %28 = vector.load %arg13[%c0_18, %c0_19, %c0_20] : memref<4x16x1xf32, #tpu.memory_space<vmem>>, vector<1x16x1xf32>
    %29 = vector.shape_cast %28 : vector<1x16x1xf32> to vector<16x1xf32>
    %30 = arith.mulf %24, %29 : vector<16x1xf32>
    %cst_21 = arith.constant dense<0.000000e+00> : vector<16xf32>
    %31 = vector.multi_reduction <add>, %27, %cst_21 [1] : vector<16x16xf32> to vector<16xf32>
    %32 = vector.shape_cast %31 : vector<16xf32> to vector<16x1xf32>
    %33 = arith.addf %30, %32 : vector<16x1xf32>
    %c0_22 = arith.constant 0 : index
    %c0_23 = arith.constant 0 : index
    %c0_24 = arith.constant 0 : index
    %34 = vector.load %arg13[%c0_22, %c0_23, %c0_24] : memref<4x16x1xf32, #tpu.memory_space<vmem>>, vector<1x16x1xf32>
    %35 = vector.shape_cast %34 : vector<1x16x1xf32> to vector<16x1xf32>
    %36 = vector.shape_cast %33 : vector<16x1xf32> to vector<1x16x1xf32>
    tpu.vector_store %arg13[%c0_22, %c0_23, %c0_24], %36 {strides = array<i32>} : memref<4x16x1xf32, #tpu.memory_space<vmem>>, vector<1x16x1xf32>,
    %37 = arith.truncf %27 : vector<16x16xf32> to vector<16x16xbf16>
    %cst_25 = arith.constant dense<0.000000e+00> : vector<16x32xf32>
    %38 = tpu.matmul %37, %12, %cst_25 {dimension_numbers = #tpu.dot_dimension_numbers<[1], [0], [0], [1], [0, 0, 1, 1], [], []>} : vector<16x16xbf16>, vector<16x32xbf16>, vector<16x32xf32> -> vector<16x32xf32>
    %c0_26 = arith.constant 0 : index
    %c0_27 = arith.constant 0 : index
    %39 = vector.load %arg14[%c0_26, %c0_27] : memref<16x128xf32, #tpu.memory_space<vmem>>, vector<16x32xf32>
    %40 = vector.broadcast %24 : vector<16x1xf32> to vector<16x32xf32>
    %41 = arith.mulf %40, %39 : vector<16x32xf32>
    %42 = arith.addf %41, %38 : vector<16x32xf32>
    %c0_28 = arith.constant 0 : index
    %c0_29 = arith.constant 0 : index
    %43 = vector.load %arg14[%c0_28, %c0_29] : memref<16x128xf32, #tpu.memory_space<vmem>>, vector<16x32xf32>
    tpu.vector_store %arg14[%c0_28, %c0_29], %42 {strides = array<i32>} : memref<16x128xf32, #tpu.memory_space<vmem>>, vector<16x32xf32>,
    %c0_30 = arith.constant 0 : index
    %c0_31 = arith.constant 0 : index
    %c0_32 = arith.constant 0 : index
    %44 = vector.load %arg12[%c0_30, %c0_31, %c0_32] : memref<4x16x1xf32, #tpu.memory_space<vmem>>, vector<1x16x1xf32>
    %45 = vector.shape_cast %44 : vector<1x16x1xf32> to vector<16x1xf32>
    %46 = vector.shape_cast %22 : vector<16x1xf32> to vector<1x16x1xf32>
    tpu.vector_store %arg12[%c0_30, %c0_31, %c0_32], %46 {strides = array<i32>} : memref<4x16x1xf32, #tpu.memory_space<vmem>>, vector<1x16x1xf32>,
    %c0_33 = arith.constant 0 : index
    %c0_34 = arith.constant 0 : index
    %c32 = arith.constant 32 : index
    %47 = vector.load %arg3[%c0_33, %c0_34, %c32] : memref<1x16x128xbf16, #tpu.memory_space<vmem>>, vector<1x16x32xbf16>
    %48 = vector.shape_cast %47 : vector<1x16x32xbf16> to vector<16x32xbf16>
    %c0_35 = arith.constant 0 : index
    %c0_36 = arith.constant 0 : index
    %c32_37 = arith.constant 32 : index
    %49 = vector.load %arg4[%c0_35, %c0_36, %c32_37] : memref<1x16x128xbf16, #tpu.memory_space<vmem>>, vector<1x16x32xbf16>
    %50 = vector.shape_cast %49 : vector<1x16x32xbf16> to vector<16x32xbf16>
    %c0_38 = arith.constant 0 : index
    %c0_39 = arith.constant 0 : index
    %c32_40 = arith.constant 32 : index
    %51 = vector.load %arg5[%c0_38, %c0_39, %c32_40] : memref<1x16x128xbf16, #tpu.memory_space<vmem>>, vector<1x16x32xbf16>
    %52 = vector.shape_cast %51 : vector<1x16x32xbf16> to vector<16x32xbf16>
    %cst_41 = arith.constant dense<0.000000e+00> : vector<16x16xf32>
    %53 = tpu.matmul %48, %50, %cst_41 {dimension_numbers = #tpu.dot_dimension_numbers<[1], [1], [0], [0], [0, 0, 1, 0], [], []>} : vector<16x32xbf16>, vector<16x32xbf16>, vector<16x16xf32> -> vector<16x16xf32>
    %cst_42 = arith.constant -3.40282347E+38 : f32
    %54 = vector.shape_cast %6 : vector<1x16xi1> to vector<1x16xi1>
    %55 = vector.broadcast %54 : vector<1x16xi1> to vector<16x16xi1>
    %56 = vector.broadcast %cst_42 : f32 to vector<16x16xf32>
    %57 = arith.select %55, %53, %56 : vector<16x16xi1>, vector<16x16xf32>
    %c1 = arith.constant 1 : index
    %c0_43 = arith.constant 0 : index
    %c0_44 = arith.constant 0 : index
    %58 = vector.load %arg12[%c1, %c0_43, %c0_44] : memref<4x16x1xf32, #tpu.memory_space<vmem>>, vector<1x16x1xf32>
    %59 = vector.shape_cast %58 : vector<1x16x1xf32> to vector<16x1xf32>
    %cst_45 = arith.constant dense<0xFF800000> : vector<16xf32>
    %60 = vector.multi_reduction <maximumf>, %57, %cst_45 [1] : vector<16x16xf32> to vector<16xf32>
    %61 = vector.shape_cast %60 : vector<16xf32> to vector<16x1xf32>
    %62 = arith.maximumf %59, %61 : vector<16x1xf32>
    %63 = arith.subf %59, %62 : vector<16x1xf32>
    %64 = math.exp %63 : vector<16x1xf32>
    %65 = vector.broadcast %62 : vector<16x1xf32> to vector<16x16xf32>
    %66 = arith.subf %57, %65 : vector<16x16xf32>
    %67 = math.exp %66 : vector<16x16xf32>
    %c1_46 = arith.constant 1 : index
    %c0_47 = arith.constant 0 : index
    %c0_48 = arith.constant 0 : index
    %68 = vector.load %arg13[%c1_46, %c0_47, %c0_48] : memref<4x16x1xf32, #tpu.memory_space<vmem>>, vector<1x16x1xf32>
    %69 = vector.shape_cast %68 : vector<1x16x1xf32> to vector<16x1xf32>
    %70 = arith.mulf %64, %69 : vector<16x1xf32>
    %cst_49 = arith.constant dense<0.000000e+00> : vector<16xf32>
    %71 = vector.multi_reduction <add>, %67, %cst_49 [1] : vector<16x16xf32> to vector<16xf32>
    %72 = vector.shape_cast %71 : vector<16xf32> to vector<16x1xf32>
    %73 = arith.addf %70, %72 : vector<16x1xf32>
    %c1_50 = arith.constant 1 : index
    %c0_51 = arith.constant 0 : index
    %c0_52 = arith.constant 0 : index
    %74 = vector.load %arg13[%c1_50, %c0_51, %c0_52] : memref<4x16x1xf32, #tpu.memory_space<vmem>>, vector<1x16x1xf32>
    %75 = vector.shape_cast %74 : vector<1x16x1xf32> to vector<16x1xf32>
    %76 = vector.shape_cast %73 : vector<16x1xf32> to vector<1x16x1xf32>
    tpu.vector_store %arg13[%c1_50, %c0_51, %c0_52], %76 {strides = array<i32>} : memref<4x16x1xf32, #tpu.memory_space<vmem>>, vector<1x16x1xf32>,
    %77 = arith.truncf %67 : vector<16x16xf32> to vector<16x16xbf16>
    %cst_53 = arith.constant dense<0.000000e+00> : vector<16x32xf32>
    %78 = tpu.matmul %77, %52, %cst_53 {dimension_numbers = #tpu.dot_dimension_numbers<[1], [0], [0], [1], [0, 0, 1, 1], [], []>} : vector<16x16xbf16>, vector<16x32xbf16>, vector<16x32xf32> -> vector<16x32xf32>
    %c0_54 = arith.constant 0 : index
    %c32_55 = arith.constant 32 : index
    %79 = vector.load %arg14[%c0_54, %c32_55] : memref<16x128xf32, #tpu.memory_space<vmem>>, vector<16x32xf32>
    %80 = vector.broadcast %64 : vector<16x1xf32> to vector<16x32xf32>
    %81 = arith.mulf %80, %79 : vector<16x32xf32>
    %82 = arith.addf %81, %78 : vector<16x32xf32>
    %c0_56 = arith.constant 0 : index
    %c32_57 = arith.constant 32 : index
    %83 = vector.load %arg14[%c0_56, %c32_57] : memref<16x128xf32, #tpu.memory_space<vmem>>, vector<16x32xf32>
    tpu.vector_store %arg14[%c0_56, %c32_57], %82 {strides = array<i32>} : memref<16x128xf32, #tpu.memory_space<vmem>>, vector<16x32xf32>,
    %c1_58 = arith.constant 1 : index
    %c0_59 = arith.constant 0 : index
    %c0_60 = arith.constant 0 : index
    %84 = vector.load %arg12[%c1_58, %c0_59, %c0_60] : memref<4x16x1xf32, #tpu.memory_space<vmem>>, vector<1x16x1xf32>
    %85 = vector.shape_cast %84 : vector<1x16x1xf32> to vector<16x1xf32>
    %86 = vector.shape_cast %62 : vector<16x1xf32> to vector<1x16x1xf32>
    tpu.vector_store %arg12[%c1_58, %c0_59, %c0_60], %86 {strides = array<i32>} : memref<4x16x1xf32, #tpu.memory_space<vmem>>, vector<1x16x1xf32>,
    %c0_61 = arith.constant 0 : index
    %c0_62 = arith.constant 0 : index
    %c64 = arith.constant 64 : index
    %87 = vector.load %arg3[%c0_61, %c0_62, %c64] : memref<1x16x128xbf16, #tpu.memory_space<vmem>>, vector<1x16x32xbf16>
    %88 = vector.shape_cast %87 : vector<1x16x32xbf16> to vector<16x32xbf16>
    %c0_63 = arith.constant 0 : index
    %c0_64 = arith.constant 0 : index
    %c64_65 = arith.constant 64 : index
    %89 = vector.load %arg4[%c0_63, %c0_64, %c64_65] : memref<1x16x128xbf16, #tpu.memory_space<vmem>>, vector<1x16x32xbf16>
    %90 = vector.shape_cast %89 : vector<1x16x32xbf16> to vector<16x32xbf16>
    %c0_66 = arith.constant 0 : index
    %c0_67 = arith.constant 0 : index
    %c64_68 = arith.constant 64 : index
    %91 = vector.load %arg5[%c0_66, %c0_67, %c64_68] : memref<1x16x128xbf16, #tpu.memory_space<vmem>>, vector<1x16x32xbf16>
    %92 = vector.shape_cast %91 : vector<1x16x32xbf16> to vector<16x32xbf16>
    %cst_69 = arith.constant dense<0.000000e+00> : vector<16x16xf32>
    %93 = tpu.matmul %88, %90, %cst_69 {dimension_numbers = #tpu.dot_dimension_numbers<[1], [1], [0], [0], [0, 0, 1, 0], [], []>} : vector<16x32xbf16>, vector<16x32xbf16>, vector<16x16xf32> -> vector<16x16xf32>
    %cst_70 = arith.constant -3.40282347E+38 : f32
    %94 = vector.shape_cast %6 : vector<1x16xi1> to vector<1x16xi1>
    %95 = vector.broadcast %94 : vector<1x16xi1> to vector<16x16xi1>
    %96 = vector.broadcast %cst_70 : f32 to vector<16x16xf32>
    %97 = arith.select %95, %93, %96 : vector<16x16xi1>, vector<16x16xf32>
    %c2 = arith.constant 2 : index
    %c0_71 = arith.constant 0 : index
    %c0_72 = arith.constant 0 : index
    %98 = vector.load %arg12[%c2, %c0_71, %c0_72] : memref<4x16x1xf32, #tpu.memory_space<vmem>>, vector<1x16x1xf32>
    %99 = vector.shape_cast %98 : vector<1x16x1xf32> to vector<16x1xf32>
    %cst_73 = arith.constant dense<0xFF800000> : vector<16xf32>
    %100 = vector.multi_reduction <maximumf>, %97, %cst_73 [1] : vector<16x16xf32> to vector<16xf32>
    %101 = vector.shape_cast %100 : vector<16xf32> to vector<16x1xf32>
    %102 = arith.maximumf %99, %101 : vector<16x1xf32>
    %103 = arith.subf %99, %102 : vector<16x1xf32>
    %104 = math.exp %103 : vector<16x1xf32>
    %105 = vector.broadcast %102 : vector<16x1xf32> to vector<16x16xf32>
    %106 = arith.subf %97, %105 : vector<16x16xf32>
    %107 = math.exp %106 : vector<16x16xf32>
    %c2_74 = arith.constant 2 : index
    %c0_75 = arith.constant 0 : index
    %c0_76 = arith.constant 0 : index
    %108 = vector.load %arg13[%c2_74, %c0_75, %c0_76] : memref<4x16x1xf32, #tpu.memory_space<vmem>>, vector<1x16x1xf32>
    %109 = vector.shape_cast %108 : vector<1x16x1xf32> to vector<16x1xf32>
    %110 = arith.mulf %104, %109 : vector<16x1xf32>
    %cst_77 = arith.constant dense<0.000000e+00> : vector<16xf32>
    %111 = vector.multi_reduction <add>, %107, %cst_77 [1] : vector<16x16xf32> to vector<16xf32>
    %112 = vector.shape_cast %111 : vector<16xf32> to vector<16x1xf32>
    %113 = arith.addf %110, %112 : vector<16x1xf32>
    %c2_78 = arith.constant 2 : index
    %c0_79 = arith.constant 0 : index
    %c0_80 = arith.constant 0 : index
    %114 = vector.load %arg13[%c2_78, %c0_79, %c0_80] : memref<4x16x1xf32, #tpu.memory_space<vmem>>, vector<1x16x1xf32>
    %115 = vector.shape_cast %114 : vector<1x16x1xf32> to vector<16x1xf32>
    %116 = vector.shape_cast %113 : vector<16x1xf32> to vector<1x16x1xf32>
    tpu.vector_store %arg13[%c2_78, %c0_79, %c0_80], %116 {strides = array<i32>} : memref<4x16x1xf32, #tpu.memory_space<vmem>>, vector<1x16x1xf32>,
    %117 = arith.truncf %107 : vector<16x16xf32> to vector<16x16xbf16>
    %cst_81 = arith.constant dense<0.000000e+00> : vector<16x32xf32>
    %118 = tpu.matmul %117, %92, %cst_81 {dimension_numbers = #tpu.dot_dimension_numbers<[1], [0], [0], [1], [0, 0, 1, 1], [], []>} : vector<16x16xbf16>, vector<16x32xbf16>, vector<16x32xf32> -> vector<16x32xf32>
    %c0_82 = arith.constant 0 : index
    %c64_83 = arith.constant 64 : index
    %119 = vector.load %arg14[%c0_82, %c64_83] : memref<16x128xf32, #tpu.memory_space<vmem>>, vector<16x32xf32>
    %120 = vector.broadcast %104 : vector<16x1xf32> to vector<16x32xf32>
    %121 = arith.mulf %120, %119 : vector<16x32xf32>
    %122 = arith.addf %121, %118 : vector<16x32xf32>
    %c0_84 = arith.constant 0 : index
    %c64_85 = arith.constant 64 : index
    %123 = vector.load %arg14[%c0_84, %c64_85] : memref<16x128xf32, #tpu.memory_space<vmem>>, vector<16x32xf32>
    tpu.vector_store %arg14[%c0_84, %c64_85], %122 {strides = array<i32>} : memref<16x128xf32, #tpu.memory_space<vmem>>, vector<16x32xf32>,
    %c2_86 = arith.constant 2 : index
    %c0_87 = arith.constant 0 : index
    %c0_88 = arith.constant 0 : index
    %124 = vector.load %arg12[%c2_86, %c0_87, %c0_88] : memref<4x16x1xf32, #tpu.memory_space<vmem>>, vector<1x16x1xf32>
    %125 = vector.shape_cast %124 : vector<1x16x1xf32> to vector<16x1xf32>
    %126 = vector.shape_cast %102 : vector<16x1xf32> to vector<1x16x1xf32>
    tpu.vector_store %arg12[%c2_86, %c0_87, %c0_88], %126 {strides = array<i32>} : memref<4x16x1xf32, #tpu.memory_space<vmem>>, vector<1x16x1xf32>,
    %c0_89 = arith.constant 0 : index
    %c0_90 = arith.constant 0 : index
    %c96 = arith.constant 96 : index
    %127 = vector.load %arg3[%c0_89, %c0_90, %c96] : memref<1x16x128xbf16, #tpu.memory_space<vmem>>, vector<1x16x32xbf16>
    %128 = vector.shape_cast %127 : vector<1x16x32xbf16> to vector<16x32xbf16>
    %c0_91 = arith.constant 0 : index
    %c0_92 = arith.constant 0 : index
    %c96_93 = arith.constant 96 : index
    %129 = vector.load %arg4[%c0_91, %c0_92, %c96_93] : memref<1x16x128xbf16, #tpu.memory_space<vmem>>, vector<1x16x32xbf16>
    %130 = vector.shape_cast %129 : vector<1x16x32xbf16> to vector<16x32xbf16>
    %c0_94 = arith.constant 0 : index
    %c0_95 = arith.constant 0 : index
    %c96_96 = arith.constant 96 : index
    %131 = vector.load %arg5[%c0_94, %c0_95, %c96_96] : memref<1x16x128xbf16, #tpu.memory_space<vmem>>, vector<1x16x32xbf16>
    %132 = vector.shape_cast %131 : vector<1x16x32xbf16> to vector<16x32xbf16>
    %cst_97 = arith.constant dense<0.000000e+00> : vector<16x16xf32>
    %133 = tpu.matmul %128, %130, %cst_97 {dimension_numbers = #tpu.dot_dimension_numbers<[1], [1], [0], [0], [0, 0, 1, 0], [], []>} : vector<16x32xbf16>, vector<16x32xbf16>, vector<16x16xf32> -> vector<16x16xf32>
    %cst_98 = arith.constant -3.40282347E+38 : f32
    %134 = vector.shape_cast %6 : vector<1x16xi1> to vector<1x16xi1>
    %135 = vector.broadcast %134 : vector<1x16xi1> to vector<16x16xi1>
    %136 = vector.broadcast %cst_98 : f32 to vector<16x16xf32>
    %137 = arith.select %135, %133, %136 : vector<16x16xi1>, vector<16x16xf32>
    %c3 = arith.constant 3 : index
    %c0_99 = arith.constant 0 : index
    %c0_100 = arith.constant 0 : index
    %138 = vector.load %arg12[%c3, %c0_99, %c0_100] : memref<4x16x1xf32, #tpu.memory_space<vmem>>, vector<1x16x1xf32>
    %139 = vector.shape_cast %138 : vector<1x16x1xf32> to vector<16x1xf32>
    %cst_101 = arith.constant dense<0xFF800000> : vector<16xf32>
    %140 = vector.multi_reduction <maximumf>, %137, %cst_101 [1] : vector<16x16xf32> to vector<16xf32>
    %141 = vector.shape_cast %140 : vector<16xf32> to vector<16x1xf32>
    %142 = arith.maximumf %139, %141 : vector<16x1xf32>
    %143 = arith.subf %139, %142 : vector<16x1xf32>
    %144 = math.exp %143 : vector<16x1xf32>
    %145 = vector.broadcast %142 : vector<16x1xf32> to vector<16x16xf32>
    %146 = arith.subf %137, %145 : vector<16x16xf32>
    %147 = math.exp %146 : vector<16x16xf32>
    %c3_102 = arith.constant 3 : index
    %c0_103 = arith.constant 0 : index
    %c0_104 = arith.constant 0 : index
    %148 = vector.load %arg13[%c3_102, %c0_103, %c0_104] : memref<4x16x1xf32, #tpu.memory_space<vmem>>, vector<1x16x1xf32>
    %149 = vector.shape_cast %148 : vector<1x16x1xf32> to vector<16x1xf32>
    %150 = arith.mulf %144, %149 : vector<16x1xf32>
    %cst_105 = arith.constant dense<0.000000e+00> : vector<16xf32>
    %151 = vector.multi_reduction <add>, %147, %cst_105 [1] : vector<16x16xf32> to vector<16xf32>
    %152 = vector.shape_cast %151 : vector<16xf32> to vector<16x1xf32>
    %153 = arith.addf %150, %152 : vector<16x1xf32>
    %c3_106 = arith.constant 3 : index
    %c0_107 = arith.constant 0 : index
    %c0_108 = arith.constant 0 : index
    %154 = vector.load %arg13[%c3_106, %c0_107, %c0_108] : memref<4x16x1xf32, #tpu.memory_space<vmem>>, vector<1x16x1xf32>
    %155 = vector.shape_cast %154 : vector<1x16x1xf32> to vector<16x1xf32>
    %156 = vector.shape_cast %153 : vector<16x1xf32> to vector<1x16x1xf32>
    tpu.vector_store %arg13[%c3_106, %c0_107, %c0_108], %156 {strides = array<i32>} : memref<4x16x1xf32, #tpu.memory_space<vmem>>, vector<1x16x1xf32>,
    %157 = arith.truncf %147 : vector<16x16xf32> to vector<16x16xbf16>
    %cst_109 = arith.constant dense<0.000000e+00> : vector<16x32xf32>
    %158 = tpu.matmul %157, %132, %cst_109 {dimension_numbers = #tpu.dot_dimension_numbers<[1], [0], [0], [1], [0, 0, 1, 1], [], []>} : vector<16x16xbf16>, vector<16x32xbf16>, vector<16x32xf32> -> vector<16x32xf32>
    %c0_110 = arith.constant 0 : index
    %c96_111 = arith.constant 96 : index
    %159 = vector.load %arg14[%c0_110, %c96_111] : memref<16x128xf32, #tpu.memory_space<vmem>>, vector<16x32xf32>
    %160 = vector.broadcast %144 : vector<16x1xf32> to vector<16x32xf32>
    %161 = arith.mulf %160, %159 : vector<16x32xf32>
    %162 = arith.addf %161, %158 : vector<16x32xf32>
    %c0_112 = arith.constant 0 : index
    %c96_113 = arith.constant 96 : index
    %163 = vector.load %arg14[%c0_112, %c96_113] : memref<16x128xf32, #tpu.memory_space<vmem>>, vector<16x32xf32>
    tpu.vector_store %arg14[%c0_112, %c96_113], %162 {strides = array<i32>} : memref<16x128xf32, #tpu.memory_space<vmem>>, vector<16x32xf32>,
    %c3_114 = arith.constant 3 : index
    %c0_115 = arith.constant 0 : index
    %c0_116 = arith.constant 0 : index
    %164 = vector.load %arg12[%c3_114, %c0_115, %c0_116] : memref<4x16x1xf32, #tpu.memory_space<vmem>>, vector<1x16x1xf32>
    %165 = vector.shape_cast %164 : vector<1x16x1xf32> to vector<16x1xf32>
    %166 = vector.shape_cast %142 : vector<16x1xf32> to vector<1x16x1xf32>
    tpu.vector_store %arg12[%c3_114, %c0_115, %c0_116], %166 {strides = array<i32>} : memref<4x16x1xf32, #tpu.memory_space<vmem>>, vector<1x16x1xf32>,
    %c0_i32_117 = arith.constant 0 : i32
    %167 = arith.cmpi eq, %arg2, %c0_i32_117 : i32
    %168 = arith.extui %167 : i1 to i32
    %c0_i32_118 = arith.constant 0 : i32
    %169 = arith.cmpi ne, %168, %c0_i32_118 : i32
    scf.if %169 {
      %c0_119 = arith.constant 0 : index
      %c0_120 = arith.constant 0 : index
      %c0_121 = arith.constant 0 : index
      %170 = vector.load %arg13[%c0_119, %c0_120, %c0_121] : memref<4x16x1xf32, #tpu.memory_space<vmem>>, vector<1x16x1xf32>
      %171 = vector.shape_cast %170 : vector<1x16x1xf32> to vector<16x1xf32>
      %c1_122 = arith.constant 1 : index
      %c0_123 = arith.constant 0 : index
      %c0_124 = arith.constant 0 : index
      %172 = vector.load %arg13[%c1_122, %c0_123, %c0_124] : memref<4x16x1xf32, #tpu.memory_space<vmem>>, vector<1x16x1xf32>
      %173 = vector.shape_cast %172 : vector<1x16x1xf32> to vector<16x1xf32>
      %c2_125 = arith.constant 2 : index
      %c0_126 = arith.constant 0 : index
      %c0_127 = arith.constant 0 : index
      %174 = vector.load %arg13[%c2_125, %c0_126, %c0_127] : memref<4x16x1xf32, #tpu.memory_space<vmem>>, vector<1x16x1xf32>
      %175 = vector.shape_cast %174 : vector<1x16x1xf32> to vector<16x1xf32>
      %c3_128 = arith.constant 3 : index
      %c0_129 = arith.constant 0 : index
      %c0_130 = arith.constant 0 : index
      %176 = vector.load %arg13[%c3_128, %c0_129, %c0_130] : memref<4x16x1xf32, #tpu.memory_space<vmem>>, vector<1x16x1xf32>
      %177 = vector.shape_cast %176 : vector<1x16x1xf32> to vector<16x1xf32>
      %178 = tpu.concatenate %171, %173, %175, %177 in 1 : vector<16x1xf32>, vector<16x1xf32>, vector<16x1xf32>, vector<16x1xf32> -> vector<16x4xf32>
      %c0_131 = arith.constant 0 : index
      %c0_132 = arith.constant 0 : index
      %179 = vector.load %arg9[%c0_131, %c0_132] : memref<4x128xf32, #tpu.memory_space<vmem>>, vector<4x128xf32>
      %cst_133 = arith.constant dense<0.000000e+00> : vector<16x128xf32>
      %180 = tpu.matmul %178, %179, %cst_133 {dimension_numbers = #tpu.dot_dimension_numbers<[1], [0], [0], [1], [0, 0, 1, 1], [], []>} : vector<16x4xf32>, vector<4x128xf32>, vector<16x128xf32> -> vector<16x128xf32>
      %c0_134 = arith.constant 0 : index
      %c0_135 = arith.constant 0 : index
      %181 = vector.load %arg14[%c0_134, %c0_135] : memref<16x128xf32, #tpu.memory_space<vmem>>, vector<16x128xf32>
      %182 = tpu.reciprocal %180 {approx = true} : vector<16x128xf32> -> vector<16x128xf32>
      %183 = arith.mulf %181, %182 : vector<16x128xf32>
      %184 = arith.truncf %183 : vector<16x128xf32> to vector<16x128xbf16>
      %c0_136 = arith.constant 0 : index
      %c0_137 = arith.constant 0 : index
      %185 = vector.load %arg10[%c0_136, %c0_137] : memref<128x128xbf16, #tpu.memory_space<vmem>>, vector<128x128xbf16>
      %cst_138 = arith.constant dense<0.000000e+00> : vector<16x128xf32>
      %186 = tpu.matmul %184, %185, %cst_138 {dimension_numbers = #tpu.dot_dimension_numbers<[1], [0], [0], [1], [0, 0, 1, 1], [], []>} : vector<16x128xbf16>, vector<128x128xbf16>, vector<16x128xf32> -> vector<16x128xf32>
      %c0_139 = arith.constant 0 : index
      %c0_140 = arith.constant 0 : index
      %c0_141 = arith.constant 0 : index
      %187 = vector.load %arg11[%c0_139, %c0_140, %c0_141] : memref<1x16x128xf32, #tpu.memory_space<vmem>>, vector<1x16x128xf32>
      %188 = vector.shape_cast %187 : vector<1x16x128xf32> to vector<16x128xf32>
      %189 = vector.shape_cast %186 : vector<16x128xf32> to vector<1x16x128xf32>
      tpu.vector_store %arg11[%c0_139, %c0_140, %c0_141], %189 {strides = array<i32>} : memref<1x16x128xf32, #tpu.memory_space<vmem>>, vector<1x16x128xf32>,
    } else {
    }
    return
  }
  func.func @transform_0(%arg0: i32, %arg1: i32, %arg2: i32) -> (i32, i32, i32) {
    %c0_i32 = arith.constant 0 : i32
    %c0_i32_0 = arith.constant 0 : i32
    return %arg0, %arg1, %c0_i32 : i32, i32, i32
  }
  func.func @transform_1(%arg0: i32, %arg1: i32, %arg2: i32) -> (i32, i32, i32) {
    %c0_i32 = arith.constant 0 : i32
    %c0_i32_0 = arith.constant 0 : i32
    return %arg0, %arg2, %c0_i32 : i32, i32, i32
  }
  func.func @transform_2(%arg0: i32, %arg1: i32, %arg2: i32) -> (i32, i32, i32) {
    %c0_i32 = arith.constant 0 : i32
    %c0_i32_0 = arith.constant 0 : i32
    return %arg0, %arg2, %c0_i32 : i32, i32, i32
  }
  func.func @transform_3(%arg0: i32, %arg1: i32, %arg2: i32) -> (i32, i32, i32) {
    %c0_i32 = arith.constant 0 : i32
    %c0_i32_0 = arith.constant 0 : i32
    return %arg0, %c0_i32, %arg2 : i32, i32, i32
  }
  func.func @transform_4(%arg0: i32, %arg1: i32, %arg2: i32) -> (i32, i32) {
    %c0_i32 = arith.constant 0 : i32
    %c0_i32_0 = arith.constant 0 : i32
    %c0_i32_1 = arith.constant 0 : i32
    return %c0_i32, %c0_i32_0 : i32, i32
  }
  func.func @transform_5(%arg0: i32, %arg1: i32, %arg2: i32) -> (i32, i32) {
    %c0_i32 = arith.constant 0 : i32
    %c0_i32_0 = arith.constant 0 : i32
    %c0_i32_1 = arith.constant 0 : i32
    return %c0_i32, %c0_i32_0 : i32, i32
  }
  func.func @transform_6(%arg0: i32, %arg1: i32, %arg2: i32) -> (i32, i32) {
    %c0_i32 = arith.constant 0 : i32
    %c0_i32_0 = arith.constant 0 : i32
    %c0_i32_1 = arith.constant 0 : i32
    return %c0_i32, %c0_i32_0 : i32, i32
  }
  func.func @transform_7(%arg0: i32, %arg1: i32, %arg2: i32) -> (i32, i32) {
    %c0_i32 = arith.constant 0 : i32
    %c0_i32_0 = arith.constant 0 : i32
    %c0_i32_1 = arith.constant 0 : i32
    return %c0_i32, %c0_i32_0 : i32, i32
  }
  func.func @transform_8(%arg0: i32, %arg1: i32, %arg2: i32) -> (i32, i32, i32) {
    %c0_i32 = arith.constant 0 : i32
    %c0_i32_0 = arith.constant 0 : i32
    return %arg0, %arg1, %c0_i32 : i32, i32, i32
  }
}

module attributes {stable_mosaic.version = 11 : i64} {
  func.func @_proj_kernel(%arg0: i32, %arg1: memref<32x128xf32, #tpu.memory_space<vmem>>, %arg2: memref<1x128xf32, #tpu.memory_space<vmem>>, %arg3: memref<4x128xf32, #tpu.memory_space<vmem>>, %arg4: memref<128x4xf32, #tpu.memory_space<vmem>>, %arg5: memref<1x128xf32, #tpu.memory_space<vmem>>, %arg6: memref<1x128xf32, #tpu.memory_space<vmem>>, %arg7: memref<128x128xbf16, #tpu.memory_space<vmem>>, %arg8: memref<128x128xbf16, #tpu.memory_space<vmem>>, %arg9: memref<128x128xbf16, #tpu.memory_space<vmem>>, %arg10: memref<32x128xbf16, #tpu.memory_space<vmem>>, %arg11: memref<32x128xbf16, #tpu.memory_space<vmem>>, %arg12: memref<32x128xbf16, #tpu.memory_space<vmem>>) attributes {dimension_semantics = [#tpu.dimension_semantics<parallel>], iteration_bounds = array<i64: 1>, scalar_prefetch = 0 : i64, scratch_operands = 0 : i64, tpu.core_type = #tpu.core_type<tc>, window_params = [{transform_indices = @transform_0, window_bounds = array<i64: 32, 128>}, {pipeline_mode = #tpu.pipeline_mode<synchronous>, transform_indices = @transform_1, window_bounds = array<i64: 1, 128>}, {pipeline_mode = #tpu.pipeline_mode<synchronous>, transform_indices = @transform_2, window_bounds = array<i64: 4, 128>}, {pipeline_mode = #tpu.pipeline_mode<synchronous>, transform_indices = @transform_3, window_bounds = array<i64: 128, 4>}, {pipeline_mode = #tpu.pipeline_mode<synchronous>, transform_indices = @transform_4, window_bounds = array<i64: 1, 128>}, {pipeline_mode = #tpu.pipeline_mode<synchronous>, transform_indices = @transform_5, window_bounds = array<i64: 1, 128>}, {pipeline_mode = #tpu.pipeline_mode<synchronous>, transform_indices = @transform_6, window_bounds = array<i64: 128, 128>}, {pipeline_mode = #tpu.pipeline_mode<synchronous>, transform_indices = @transform_7, window_bounds = array<i64: 128, 128>}, {pipeline_mode = #tpu.pipeline_mode<synchronous>, transform_indices = @transform_8, window_bounds = array<i64: 128, 128>}, {transform_indices = @transform_9, window_bounds = array<i64: 32, 128>}, {transform_indices = @transform_10, window_bounds = array<i64: 32, 128>}, {transform_indices = @transform_11, window_bounds = array<i64: 32, 128>}]} {
    %c0 = arith.constant 0 : index
    %c0_0 = arith.constant 0 : index
    %0 = vector.load %arg1[%c0, %c0_0] : memref<32x128xf32, #tpu.memory_space<vmem>>, vector<32x128xf32>
    %c0_1 = arith.constant 0 : index
    %c0_2 = arith.constant 0 : index
    %1 = vector.load %arg2[%c0_1, %c0_2] : memref<1x128xf32, #tpu.memory_space<vmem>>, vector<1x128xf32>
    %cst = arith.constant dense<0.000000e+00> : vector<32xf32>
    %2 = vector.multi_reduction <add>, %0, %cst [1] : vector<32x128xf32> to vector<32xf32>
    %3 = vector.shape_cast %2 : vector<32xf32> to vector<32x1xf32>
    %cst_3 = arith.constant 1.280000e+02 : f32
    %4 = vector.broadcast %cst_3 : f32 to vector<32x1xf32>
    %5 = arith.divf %3, %4 : vector<32x1xf32>
    %6 = vector.broadcast %5 : vector<32x1xf32> to vector<32x128xf32>
    %7 = arith.subf %0, %6 : vector<32x128xf32>
    %8 = arith.mulf %7, %7 : vector<32x128xf32>
    %cst_4 = arith.constant dense<0.000000e+00> : vector<32xf32>
    %9 = vector.multi_reduction <add>, %8, %cst_4 [1] : vector<32x128xf32> to vector<32xf32>
    %10 = vector.shape_cast %9 : vector<32xf32> to vector<32x1xf32>
    %cst_5 = arith.constant 1.280000e+02 : f32
    %11 = vector.broadcast %cst_5 : f32 to vector<32x1xf32>
    %12 = arith.divf %10, %11 : vector<32x1xf32>
    %cst_6 = arith.constant 9.99999974E-6 : f32
    %13 = vector.broadcast %cst_6 : f32 to vector<32x1xf32>
    %14 = arith.addf %12, %13 : vector<32x1xf32>
    %15 = math.rsqrt %14 : vector<32x1xf32>
    %16 = vector.broadcast %15 : vector<32x1xf32> to vector<32x128xf32>
    %17 = arith.mulf %7, %16 : vector<32x128xf32>
    %18 = vector.broadcast %1 : vector<1x128xf32> to vector<32x128xf32>
    %19 = arith.mulf %17, %18 : vector<32x128xf32>
    %c0_7 = arith.constant 0 : index
    %c0_8 = arith.constant 0 : index
    %20 = vector.load %arg3[%c0_7, %c0_8] : memref<4x128xf32, #tpu.memory_space<vmem>>, vector<4x128xf32>
    %c0_9 = arith.constant 0 : index
    %c0_10 = arith.constant 0 : index
    %21 = vector.load %arg4[%c0_9, %c0_10] : memref<128x4xf32, #tpu.memory_space<vmem>>, vector<128x4xf32>
    %c0_11 = arith.constant 0 : index
    %c0_12 = arith.constant 0 : index
    %22 = vector.load %arg5[%c0_11, %c0_12] : memref<1x128xf32, #tpu.memory_space<vmem>>, vector<1x128xf32>
    %c0_13 = arith.constant 0 : index
    %c0_14 = arith.constant 0 : index
    %23 = vector.load %arg6[%c0_13, %c0_14] : memref<1x128xf32, #tpu.memory_space<vmem>>, vector<1x128xf32>
    %24 = arith.truncf %19 : vector<32x128xf32> to vector<32x128xbf16>
    %c0_15 = arith.constant 0 : index
    %c0_16 = arith.constant 0 : index
    %25 = vector.load %arg7[%c0_15, %c0_16] : memref<128x128xbf16, #tpu.memory_space<vmem>>, vector<128x128xbf16>
    %cst_17 = arith.constant dense<0.000000e+00> : vector<32x128xf32>
    %26 = tpu.matmul %24, %25, %cst_17 {dimension_numbers = #tpu.dot_dimension_numbers<[1], [0], [0], [1], [0, 0, 1, 1], [], []>} : vector<32x128xbf16>, vector<128x128xbf16>, vector<32x128xf32> -> vector<32x128xf32>
    %27 = arith.mulf %26, %26 : vector<32x128xf32>
    %cst_18 = arith.constant dense<0.000000e+00> : vector<32x4xf32>
    %28 = tpu.matmul %27, %21, %cst_18 {dimension_numbers = #tpu.dot_dimension_numbers<[1], [0], [0], [1], [0, 0, 1, 1], [], []>} : vector<32x128xf32>, vector<128x4xf32>, vector<32x4xf32> -> vector<32x4xf32>
    %cst_19 = arith.constant dense<0.000000e+00> : vector<32x128xf32>
    %29 = tpu.matmul %28, %20, %cst_19 {dimension_numbers = #tpu.dot_dimension_numbers<[1], [0], [0], [1], [0, 0, 1, 1], [], []>} : vector<32x4xf32>, vector<4x128xf32>, vector<32x128xf32> -> vector<32x128xf32>
    %cst_20 = arith.constant 1.000000e-24 : f32
    %30 = vector.broadcast %cst_20 : f32 to vector<32x128xf32>
    %31 = arith.maximumf %29, %30 : vector<32x128xf32>
    %32 = math.rsqrt %31 : vector<32x128xf32>
    %33 = arith.mulf %26, %32 : vector<32x128xf32>
    %34 = vector.broadcast %22 : vector<1x128xf32> to vector<32x128xf32>
    %35 = arith.mulf %33, %34 : vector<32x128xf32>
    %36 = arith.truncf %35 : vector<32x128xf32> to vector<32x128xbf16>
    %c0_21 = arith.constant 0 : index
    %c0_22 = arith.constant 0 : index
    %37 = vector.load %arg10[%c0_21, %c0_22] : memref<32x128xbf16, #tpu.memory_space<vmem>>, vector<32x128xbf16>
    tpu.vector_store %arg10[%c0_21, %c0_22], %36 {strides = array<i32>} : memref<32x128xbf16, #tpu.memory_space<vmem>>, vector<32x128xbf16>,
    %c0_23 = arith.constant 0 : index
    %c0_24 = arith.constant 0 : index
    %38 = vector.load %arg8[%c0_23, %c0_24] : memref<128x128xbf16, #tpu.memory_space<vmem>>, vector<128x128xbf16>
    %cst_25 = arith.constant dense<0.000000e+00> : vector<32x128xf32>
    %39 = tpu.matmul %24, %38, %cst_25 {dimension_numbers = #tpu.dot_dimension_numbers<[1], [0], [0], [1], [0, 0, 1, 1], [], []>} : vector<32x128xbf16>, vector<128x128xbf16>, vector<32x128xf32> -> vector<32x128xf32>
    %40 = arith.mulf %39, %39 : vector<32x128xf32>
    %cst_26 = arith.constant dense<0.000000e+00> : vector<32x4xf32>
    %41 = tpu.matmul %40, %21, %cst_26 {dimension_numbers = #tpu.dot_dimension_numbers<[1], [0], [0], [1], [0, 0, 1, 1], [], []>} : vector<32x128xf32>, vector<128x4xf32>, vector<32x4xf32> -> vector<32x4xf32>
    %cst_27 = arith.constant dense<0.000000e+00> : vector<32x128xf32>
    %42 = tpu.matmul %41, %20, %cst_27 {dimension_numbers = #tpu.dot_dimension_numbers<[1], [0], [0], [1], [0, 0, 1, 1], [], []>} : vector<32x4xf32>, vector<4x128xf32>, vector<32x128xf32> -> vector<32x128xf32>
    %cst_28 = arith.constant 1.000000e-24 : f32
    %43 = vector.broadcast %cst_28 : f32 to vector<32x128xf32>
    %44 = arith.maximumf %42, %43 : vector<32x128xf32>
    %45 = math.rsqrt %44 : vector<32x128xf32>
    %46 = arith.mulf %39, %45 : vector<32x128xf32>
    %47 = vector.broadcast %23 : vector<1x128xf32> to vector<32x128xf32>
    %48 = arith.mulf %46, %47 : vector<32x128xf32>
    %49 = arith.truncf %48 : vector<32x128xf32> to vector<32x128xbf16>
    %c0_29 = arith.constant 0 : index
    %c0_30 = arith.constant 0 : index
    %50 = vector.load %arg11[%c0_29, %c0_30] : memref<32x128xbf16, #tpu.memory_space<vmem>>, vector<32x128xbf16>
    tpu.vector_store %arg11[%c0_29, %c0_30], %49 {strides = array<i32>} : memref<32x128xbf16, #tpu.memory_space<vmem>>, vector<32x128xbf16>,
    %c0_31 = arith.constant 0 : index
    %c0_32 = arith.constant 0 : index
    %51 = vector.load %arg9[%c0_31, %c0_32] : memref<128x128xbf16, #tpu.memory_space<vmem>>, vector<128x128xbf16>
    %cst_33 = arith.constant dense<0.000000e+00> : vector<32x128xf32>
    %52 = tpu.matmul %24, %51, %cst_33 {dimension_numbers = #tpu.dot_dimension_numbers<[1], [0], [0], [1], [0, 0, 1, 1], [], []>} : vector<32x128xbf16>, vector<128x128xbf16>, vector<32x128xf32> -> vector<32x128xf32>
    %53 = arith.truncf %52 : vector<32x128xf32> to vector<32x128xbf16>
    %c0_34 = arith.constant 0 : index
    %c0_35 = arith.constant 0 : index
    %54 = vector.load %arg12[%c0_34, %c0_35] : memref<32x128xbf16, #tpu.memory_space<vmem>>, vector<32x128xbf16>
    tpu.vector_store %arg12[%c0_34, %c0_35], %53 {strides = array<i32>} : memref<32x128xbf16, #tpu.memory_space<vmem>>, vector<32x128xbf16>,
    return
  }
  func.func @transform_0(%arg0: i32) -> (i32, i32) {
    %c0_i32 = arith.constant 0 : i32
    %c0_i32_0 = arith.constant 0 : i32
    return %arg0, %c0_i32 : i32, i32
  }
  func.func @transform_1(%arg0: i32) -> (i32, i32) {
    %c0_i32 = arith.constant 0 : i32
    %c0_i32_0 = arith.constant 0 : i32
    %c0_i32_1 = arith.constant 0 : i32
    return %c0_i32, %c0_i32_0 : i32, i32
  }
  func.func @transform_2(%arg0: i32) -> (i32, i32) {
    %c0_i32 = arith.constant 0 : i32
    %c0_i32_0 = arith.constant 0 : i32
    %c0_i32_1 = arith.constant 0 : i32
    return %c0_i32, %c0_i32_0 : i32, i32
  }
  func.func @transform_3(%arg0: i32) -> (i32, i32) {
    %c0_i32 = arith.constant 0 : i32
    %c0_i32_0 = arith.constant 0 : i32
    %c0_i32_1 = arith.constant 0 : i32
    return %c0_i32, %c0_i32_0 : i32, i32
  }
  func.func @transform_4(%arg0: i32) -> (i32, i32) {
    %c0_i32 = arith.constant 0 : i32
    %c0_i32_0 = arith.constant 0 : i32
    %c0_i32_1 = arith.constant 0 : i32
    return %c0_i32, %c0_i32_0 : i32, i32
  }
  func.func @transform_5(%arg0: i32) -> (i32, i32) {
    %c0_i32 = arith.constant 0 : i32
    %c0_i32_0 = arith.constant 0 : i32
    %c0_i32_1 = arith.constant 0 : i32
    return %c0_i32, %c0_i32_0 : i32, i32
  }
  func.func @transform_6(%arg0: i32) -> (i32, i32) {
    %c0_i32 = arith.constant 0 : i32
    %c0_i32_0 = arith.constant 0 : i32
    %c0_i32_1 = arith.constant 0 : i32
    return %c0_i32, %c0_i32_0 : i32, i32
  }
  func.func @transform_7(%arg0: i32) -> (i32, i32) {
    %c0_i32 = arith.constant 0 : i32
    %c0_i32_0 = arith.constant 0 : i32
    %c0_i32_1 = arith.constant 0 : i32
    return %c0_i32, %c0_i32_0 : i32, i32
  }
  func.func @transform_8(%arg0: i32) -> (i32, i32) {
    %c0_i32 = arith.constant 0 : i32
    %c0_i32_0 = arith.constant 0 : i32
    %c0_i32_1 = arith.constant 0 : i32
    return %c0_i32, %c0_i32_0 : i32, i32
  }
  func.func @transform_9(%arg0: i32) -> (i32, i32) {
    %c0_i32 = arith.constant 0 : i32
    %c0_i32_0 = arith.constant 0 : i32
    return %arg0, %c0_i32 : i32, i32
  }
  func.func @transform_10(%arg0: i32) -> (i32, i32) {
    %c0_i32 = arith.constant 0 : i32
    %c0_i32_0 = arith.constant 0 : i32
    return %arg0, %c0_i32 : i32, i32
  }
  func.func @transform_11(%arg0: i32) -> (i32, i32) {
    %c0_i32 = arith.constant 0 : i32
    %c0_i32_0 = arith.constant 0 : i32
    return %arg0, %c0_i32 : i32, i32
  }
}

</mosaic_0001>

<llo_original>
// kernel: _lambda_.2
$region0: #{_lambda_.2}
  #allocation0 [shape = 'u32[]', space=smem, size = 0x4, offset = 0x4, fixed_abs, tag = 'smem constant byte address 0x4 - core index']
  #allocation1 [shape = 'u32[144,128]{1,0:T(1,128)}', space=vmem, size = 0x12000, scoped, tag = 'internal scratch']
  %s0 = inlined_call_operand.vmem [shape: f32[32,128], index: 0, kind: input, shape index: {}]
  %s1 = inlined_call_operand.vmem [shape: f32[1,128], index: 1, kind: input, shape index: {}]
  %s2 = inlined_call_operand.vmem [shape: f32[4,128], index: 2, kind: input, shape index: {}]
  %s3 = inlined_call_operand.vmem [shape: f32[128,4], index: 3, kind: input, shape index: {}]
  %s4 = inlined_call_operand.vmem [shape: f32[1,128], index: 4, kind: input, shape index: {}, may-alias: {4,5}]
  %s5 = inlined_call_operand.vmem [shape: f32[1,128], index: 5, kind: input, shape index: {}, may-alias: {4,5}]
  %s6 = inlined_call_operand.vmem [shape: bf16[128,128], index: 6, kind: input, shape index: {}]
  %s7 = inlined_call_operand.vmem [shape: bf16[128,128], index: 7, kind: input, shape index: {}]
  %s8 = inlined_call_operand.hbm [shape: bf16[128,128], index: 8, kind: input, shape index: {}]
  %s9 = inlined_call_operand.vmem [shape: bf16[32,128], index: 9, kind: output, shape index: {0}]
  %s10 = inlined_call_operand.vmem [shape: bf16[32,128], index: 10, kind: output, shape index: {1}]
  %s11 = inlined_call_operand.vmem [shape: bf16[32,128], index: 11, kind: output, shape index: {2}]
  %12 = xla_tuple %s9, %s10, %s11
  %s13 = sld [smem:[#allocation0]]
  $region66: #{_lambda_.2} parent=0
    _
  %s15 = ssub.s32 1, %s13
  %s16 = scalar_select 0, %s15, %s13
  $region1: #{_lambda_.2} parent=0
    #allocation2 [shape = 'u8[32768]{0}', space=vmem, size = 0x8000, scoped, tag = 'input window, operand 8, single buffered']
    #allocation3 [shape = 's32[1]{0}', space=sflag, size = 0x4, scoped, tag = 'scoped memory for _lambda_.2']
    %17 = vsyncpa [#allocation3], 0
    // Predicated region
    $region2: #{_lambda_.2} parent=1 // pred_check
      _
    $region3: #{_lambda_.2} parent=1 // pred_check_branch
      %19 = sbr.rel (0) target = $region5
    $region4: #{_lambda_.2} parent=1 // pred_region
      _
    $region5: #{_lambda_.2} parent=1 // pred_fallthru
      _
    // Predicated region
    $region6: #{_lambda_.2} parent=1 // pred_check
      _
    $region7: #{_lambda_.2} parent=1 // pred_check_branch
      %21 = sbr.rel (0) target = $region9
    $region8: #{_lambda_.2} parent=1 // pred_region
      _
    $region9: #{_lambda_.2} parent=1 // pred_fallthru
      _
    // Predicated region
    $region10: #{_lambda_.2} parent=1 // pred_check
      _
    $region11: #{_lambda_.2} parent=1 // pred_check_branch
      %23 = sbr.rel (0) target = $region13
    $region12: #{_lambda_.2} parent=1 // pred_region
      _
    $region13: #{_lambda_.2} parent=1 // pred_fallthru
      _
    // Predicated region
    $region14: #{_lambda_.2} parent=1 // pred_check
      _
    $region15: #{_lambda_.2} parent=1 // pred_check_branch
      %25 = sbr.rel (0) target = $region17
    $region16: #{_lambda_.2} parent=1 // pred_region
      _
    $region17: #{_lambda_.2} parent=1 // pred_fallthru
      _
    // Predicated region
    $region18: #{_lambda_.2} parent=1 // pred_check
      _
    $region19: #{_lambda_.2} parent=1 // pred_check_branch
      %27 = sbr.rel (0) target = $region21
    $region20: #{_lambda_.2} parent=1 // pred_region
      _
    $region21: #{_lambda_.2} parent=1 // pred_fallthru
      _
    // Predicated region
    $region22: #{_lambda_.2} parent=1 // pred_check
      _
    $region23: #{_lambda_.2} parent=1 // pred_check_branch
      %29 = sbr.rel (0) target = $region25
    $region24: #{_lambda_.2} parent=1 // pred_region
      _
    $region25: #{_lambda_.2} parent=1 // pred_fallthru
      _
    // Predicated region
    $region26: #{_lambda_.2} parent=1 // pred_check
      _
    $region27: #{_lambda_.2} parent=1 // pred_check_branch
      %31 = sbr.rel (0) target = $region29
    $region28: #{_lambda_.2} parent=1 // pred_region
      _
    $region29: #{_lambda_.2} parent=1 // pred_fallthru
      _
    // Predicated region
    $region30: #{_lambda_.2} parent=1 // pred_check
      _
    $region31: #{_lambda_.2} parent=1 // pred_check_branch
      %33 = sbr.rel (0) target = $region33
    $region32: #{_lambda_.2} parent=1 // pred_region
      _
    $region33: #{_lambda_.2} parent=1 // pred_fallthru
      _
    // Predicated region
    $region34: #{_lambda_.2} parent=1 // pred_check
      _
    $region35: #{_lambda_.2} parent=1 // pred_check_branch
      %35 = sbr.rel (0) target = $region37
    $region36: #{_lambda_.2} parent=1 // pred_region
      %s37 = ssub.s32 1024, 1024
      %38 = vsyncadd [#allocation3], %s37
      %s39 = sshll.u32 [#allocation2], 4
      %s40 = int_to_ptr.vmem [resolvable:$true] %s39
      %45 = dma.hbm_to_vmem [thread:$0]  %s8, 1024, %s40, [#allocation3], 64, 64, 4
    $region37: #{_lambda_.2} parent=1 // pred_fallthru
      _
    // Predicated region
    $region38: #{_lambda_.2} parent=1 // pred_check
      _
    $region39: #{_lambda_.2} parent=1 // pred_check_branch
      %47 = sbr.rel (0) target = $region41
    $region40: #{_lambda_.2} parent=1 // pred_region
      %48 = dma.done [#allocation3], 1024
    $region41: #{_lambda_.2} parent=1 // pred_fallthru
      _
    %v50 = vld [vmem:[%s0] sm:$0xff]
    %v51 = vld [vmem:[%s0 + $0x8] sm:$0xff]
    %v52 = vld [vmem:[%s0 + $0x10] sm:$0xff]
    %v53 = vld [vmem:[%s0 + $0x18] sm:$0xff]
    %v54 = vld [vmem:[%s1] sm:$0x1]
    %55 = vadd.xlane.f32.xlu0 %v50
    %v56 = vpop.xlane.xlu0 %55
    %57 = vadd.xlane.f32.xlu0 %v51
    %v58 = vpop.xlane.xlu0 %57
    %59 = vadd.xlane.f32.xlu0 %v52
    %v60 = vpop.xlane.xlu0 %59
    %61 = vadd.xlane.f32.xlu0 %v53
    %v62 = vpop.xlane.xlu0 %61
    %v63 = vrcp.pop 128.0
    %v64 = vmul.f32 %v56, %v63
    %v65 = vmul.f32 %v58, %v63
    %v66 = vmul.f32 %v60, %v63
    %v67 = vmul.f32 %v62, %v63
    %v68 = vsub.f32 %v50, %v64
    %v69 = vsub.f32 %v51, %v65
    %v70 = vsub.f32 %v52, %v66
    %v71 = vsub.f32 %v53, %v67
    %v72 = vmul.f32 %v68, %v68
    %v73 = vmul.f32 %v69, %v69
    %v74 = vmul.f32 %v70, %v70
    %v75 = vmul.f32 %v71, %v71
    %76 = vadd.xlane.f32.xlu0 %v72
    %v77 = vpop.xlane.xlu0 %76
    %78 = vadd.xlane.f32.xlu0 %v73
    %v79 = vpop.xlane.xlu0 %78
    %80 = vadd.xlane.f32.xlu0 %v74
    %v81 = vpop.xlane.xlu0 %80
    %82 = vadd.xlane.f32.xlu0 %v75
    %v83 = vpop.xlane.xlu0 %82
    %v84 = vmul.f32 %v77, %v63
    %v85 = vmul.f32 %v79, %v63
    %v86 = vmul.f32 %v81, %v63
    %v87 = vmul.f32 %v83, %v63
    %v88 = vadd.f32 %v84, 1e-05
    %v89 = vadd.f32 %v85, 1e-05
    %v90 = vadd.f32 %v86, 1e-05
    %v91 = vadd.f32 %v87, 1e-05
    %v92 = vrsqrt.pop %v88
    %v93 = vrsqrt.pop %v89
    %v94 = vrsqrt.pop %v90
    %v95 = vrsqrt.pop %v91
    %v96 = vmul.f32 %v68, %v92
    %v97 = vmul.f32 %v69, %v93
    %v98 = vmul.f32 %v70, %v94
    %v99 = vmul.f32 %v71, %v95
    %v101 = vlaneseq
    %v102 = vshrl.u32 %v101, 7
    %v103 = vsub.s32 0, %v102
    %v104 = vrot.slane %v54, %v103
    %v106 = vmul.f32 %v96, %v104
    %v107 = vmul.f32 %v97, %v104
    %v108 = vmul.f32 %v98, %v104
    %v109 = vmul.f32 %v99, %v104
    %v110 = vld [vmem:[%s2] sm:$0xf]
    %v111 = vld [vmem:[%s3] sm:$0xff]
    %v112 = vld [vmem:[%s3 + $0x8] sm:$0xff]
    %v113 = vld [vmem:[%s3 + $0x10] sm:$0xff]
    %v114 = vld [vmem:[%s3 + $0x18] sm:$0xff]
    %v115 = vld [vmem:[%s3 + $0x20] sm:$0xff]
    %v116 = vld [vmem:[%s3 + $0x28] sm:$0xff]
    %v117 = vld [vmem:[%s3 + $0x30] sm:$0xff]
    %v118 = vld [vmem:[%s3 + $0x38] sm:$0xff]
    %v119 = vld [vmem:[%s3 + $0x40] sm:$0xff]
    %v120 = vld [vmem:[%s3 + $0x48] sm:$0xff]
    %v121 = vld [vmem:[%s3 + $0x50] sm:$0xff]
    %v122 = vld [vmem:[%s3 + $0x58] sm:$0xff]
    %v123 = vld [vmem:[%s3 + $0x60] sm:$0xff]
    %v124 = vld [vmem:[%s3 + $0x68] sm:$0xff]
    %v125 = vld [vmem:[%s3 + $0x70] sm:$0xff]
    %v126 = vld [vmem:[%s3 + $0x78] sm:$0xff]
    %v127 = vld [vmem:[%s4] sm:$0x1]
    %v128 = vld [vmem:[%s5] sm:$0x1]
    %v129 = vpack.c.bf16 %v107, %v106
    %v130 = vpack.c.bf16 %v109, %v108
    %v131 = vld [vmem:[%s6] sm:$0xf]
    %v132 = vld [vmem:[%s6 + $0x4] sm:$0xf]
    %v133 = vld [vmem:[%s6 + $0x8] sm:$0xf]
    %v134 = vld [vmem:[%s6 + $0xc] sm:$0xf]
    %v135 = vld [vmem:[%s6 + $0x10] sm:$0xf]
    %v136 = vld [vmem:[%s6 + $0x14] sm:$0xf]
    %v137 = vld [vmem:[%s6 + $0x18] sm:$0xf]
    %v138 = vld [vmem:[%s6 + $0x1c] sm:$0xf]
    %v139 = vld [vmem:[%s6 + $0x20] sm:$0xf]
    %v140 = vld [vmem:[%s6 + $0x24] sm:$0xf]
    %v141 = vld [vmem:[%s6 + $0x28] sm:$0xf]
    %v142 = vld [vmem:[%s6 + $0x2c] sm:$0xf]
    %v143 = vld [vmem:[%s6 + $0x30] sm:$0xf]
    %v144 = vld [vmem:[%s6 + $0x34] sm:$0xf]
    %v145 = vld [vmem:[%s6 + $0x38] sm:$0xf]
    %v146 = vld [vmem:[%s6 + $0x3c] sm:$0xf]
    %v163 = vunpack.c.l.b16 %v131
    %v164 = vunpack.c.l.b16 %v132
    %v165 = vunpack.c.l.b16 %v133
    %v166 = vunpack.c.l.b16 %v134
    %v167 = vunpack.c.l.b16 %v135
    %v168 = vunpack.c.l.b16 %v136
    %v169 = vunpack.c.l.b16 %v137
    %v170 = vunpack.c.l.b16 %v138
    %v171 = vunpack.c.l.b16 %v139
    %v172 = vunpack.c.l.b16 %v140
    %v173 = vunpack.c.l.b16 %v141
    %v174 = vunpack.c.l.b16 %v142
    %v175 = vunpack.c.l.b16 %v143
    %v176 = vunpack.c.l.b16 %v144
    %v177 = vunpack.c.l.b16 %v145
    %v178 = vunpack.c.l.b16 %v146
    %v179 = vpack.c.b16 %v164, %v163
    %v180 = vpack.c.b16 %v166, %v165
    %v181 = vpack.c.b16 %v168, %v167
    %v182 = vpack.c.b16 %v170, %v169
    %v183 = vpack.c.b16 %v172, %v171
    %v184 = vpack.c.b16 %v174, %v173
    %v185 = vpack.c.b16 %v176, %v175
    %v186 = vpack.c.b16 %v178, %v177
    %195 = vmatprep.subr.bf16.mxu0 0
    %196 = vmatpush1.bf16.msra.mxu0 %v179
    %197 = vmatprep.subr.bf16.mxu0 0
    %198 = vmatpush1.bf16.msra.mxu0 %v180
    %199 = vmatprep.subr.bf16.mxu0 0
    %200 = vmatpush1.bf16.msra.mxu0 %v181
    %201 = vmatprep.subr.bf16.mxu0 0
    %202 = vmatpush1.bf16.msra.mxu0 %v182
    %203 = vmatprep.subr.bf16.mxu0 0
    %204 = vmatpush1.bf16.msra.mxu0 %v183
    %205 = vmatprep.subr.bf16.mxu0 0
    %206 = vmatpush1.bf16.msra.mxu0 %v184
    %207 = vmatprep.subr.bf16.mxu0 0
    %208 = vmatpush1.bf16.msra.mxu0 %v185
    %209 = vmatprep.subr.bf16.mxu0 0
    %210 = vmatpush1.bf16.msra.mxu0 %v186
    %211 = vmatprep.subr.bf16.mxu0 0
    %212 = vmatpush1.bf16.msra.mxu0 0
    %213 = vmatprep.subr.bf16.mxu0 0
    %214 = vmatpush1.bf16.msra.mxu0 0
    %215 = vmatprep.subr.bf16.mxu0 0
    %216 = vmatpush1.bf16.msra.mxu0 0
    %217 = vmatprep.subr.bf16.mxu0 0
    %218 = vmatpush1.bf16.msra.mxu0 0
    %219 = vmatprep.subr.bf16.mxu0 0
    %220 = vmatpush1.bf16.msra.mxu0 0
    %221 = vmatprep.subr.bf16.mxu0 0
    %222 = vmatpush1.bf16.msra.mxu0 0
    %223 = vmatprep.subr.bf16.mxu0 0
    %224 = vmatpush1.bf16.msra.mxu0 0
    %225 = vmatprep.subr.bf16.mxu0 0
    %226 = vmatpush1.bf16.msra.mxu0 0
    %227 = vmatprep.mubr.bf16.mxu0 0
    %228 = vmatmul.mubr.bf16.gmra.mrb[0].mxu0 %v129
    %v229 = vpop.f32.mrb[0].mxu0
    %v230 = vadd.f32 0.0, %v229
    %v231 = vpop.f32.mrb[0].mxu0
    %v232 = vpop.f32.mrb[0].mxu0
    %v233 = vadd.f32 0.0, %v232
    %v234 = vpop.f32.mrb[0].mxu0
    %235 = vmatprep.mubr.bf16.mxu0 0
    %236 = vmatmul.mubr.bf16.gmra.mrb[0].mxu0 %v130
    %v237 = vpop.f32.mrb[0].mxu0
    %v238 = vadd.f32 0.0, %v237
    %v239 = vpop.f32.mrb[0].mxu0
    %v240 = vpop.f32.mrb[0].mxu0
    %v241 = vadd.f32 0.0, %v240
    %v242 = vpop.f32.mrb[0].mxu0
    %243 = vdwg.mxu0
    %v244 = vmul.f32 %v230, %v230
    %v245 = vmul.f32 %v233, %v233
    %v246 = vmul.f32 %v238, %v238
    %v247 = vmul.f32 %v241, %v241
    %248 = vmatprep.subr.mxu0 0.0
    %249 = vmatpush1.msra.mxu0 %v111
    %250 = vmatprep.subr.mxu0 0.0
    %251 = vmatpush1.msra.mxu0 %v112
    %252 = vmatprep.subr.mxu0 0.0
    %253 = vmatpush1.msra.mxu0 %v113
    %254 = vmatprep.subr.mxu0 0.0
    %255 = vmatpush1.msra.mxu0 %v114
    %256 = vmatprep.subr.mxu0 0.0
    %257 = vmatpush1.msra.mxu0 %v115
    %258 = vmatprep.subr.mxu0 0.0
    %259 = vmatpush1.msra.mxu0 %v116
    %260 = vmatprep.subr.mxu0 0.0
    %261 = vmatpush1.msra.mxu0 %v117
    %262 = vmatprep.subr.mxu0 0.0
    %263 = vmatpush1.msra.mxu0 %v118
    %264 = vmatprep.subr.mxu0 0.0
    %265 = vmatpush1.msra.mxu0 %v119
    %266 = vmatprep.subr.mxu0 0.0
    %267 = vmatpush1.msra.mxu0 %v120
    %268 = vmatprep.subr.mxu0 0.0
    %269 = vmatpush1.msra.mxu0 %v121
    %270 = vmatprep.subr.mxu0 0.0
    %271 = vmatpush1.msra.mxu0 %v122
    %272 = vmatprep.subr.mxu0 0.0
    %273 = vmatpush1.msra.mxu0 %v123
    %274 = vmatprep.subr.mxu0 0.0
    %275 = vmatpush1.msra.mxu0 %v124
    %276 = vmatprep.subr.mxu0 0.0
    %277 = vmatpush1.msra.mxu0 %v125
    %278 = vmatprep.subr.mxu0 0.0
    %279 = vmatpush1.msra.mxu0 %v126
    %280 = vmatprep.subr.mxu0 0.0
    %281 = vmatpush1.msra.mxu0 0.0
    %282 = vmatprep.subr.mxu0 0.0
    %283 = vmatpush1.msra.mxu0 0.0
    %284 = vmatprep.subr.mxu0 0.0
    %285 = vmatpush1.msra.mxu0 0.0
    %286 = vmatprep.subr.mxu0 0.0
    %287 = vmatpush1.msra.mxu0 0.0
    %288 = vmatprep.subr.mxu0 0.0
    %289 = vmatpush1.msra.mxu0 0.0
    %290 = vmatprep.subr.mxu0 0.0
    %291 = vmatpush1.msra.mxu0 0.0
    %292 = vmatprep.subr.mxu0 0.0
    %293 = vmatpush1.msra.mxu0 0.0
    %294 = vmatprep.subr.mxu0 0.0
    %295 = vmatpush1.msra.mxu0 0.0
    %296 = vmatprep.subr.mxu0 0.0
    %297 = vmatpush1.msra.mxu0 0.0
    %298 = vmatprep.subr.mxu0 0.0
    %299 = vmatpush1.msra.mxu0 0.0
    %300 = vmatprep.subr.mxu0 0.0
    %301 = vmatpush1.msra.mxu0 0.0
    %302 = vmatprep.subr.mxu0 0.0
    %303 = vmatpush1.msra.mxu0 0.0
    %304 = vmatprep.subr.mxu0 0.0
    %305 = vmatpush1.msra.mxu0 0.0
    %306 = vmatprep.subr.mxu0 0.0
    %307 = vmatpush1.msra.mxu0 0.0
    %308 = vmatprep.subr.mxu0 0.0
    %309 = vmatpush1.msra.mxu0 0.0
    %310 = vmatprep.subr.mxu0 0.0
    %311 = vmatpush1.msra.mxu0 0.0
    %312 = vmatprep.mubr.f32.mxu0 0.0
    %313 = vmatmul.mubr.f32.gmra.mrb[0].mxu0 %v244
    %v314 = vpop.f32.mrb[0].mxu0
    %v315 = vadd.f32 0.0, %v314
    %v316 = vpop.f32.mrb[0].mxu0
    %317 = vmatprep.mubr.f32.mxu0 0.0
    %318 = vmatmul.mubr.f32.gmra.mrb[0].mxu0 %v245
    %v319 = vpop.f32.mrb[0].mxu0
    %v320 = vadd.f32 0.0, %v319
    %v321 = vpop.f32.mrb[0].mxu0
    %322 = vmatprep.mubr.f32.mxu0 0.0
    %323 = vmatmul.mubr.f32.gmra.mrb[0].mxu0 %v246
    %v324 = vpop.f32.mrb[0].mxu0
    %v325 = vadd.f32 0.0, %v324
    %v326 = vpop.f32.mrb[0].mxu0
    %327 = vmatprep.mubr.f32.mxu0 0.0
    %328 = vmatmul.mubr.f32.gmra.mrb[0].mxu0 %v247
    %v329 = vpop.f32.mrb[0].mxu0
    %v330 = vadd.f32 0.0, %v329
    %v331 = vpop.f32.mrb[0].mxu0
    %332 = vdwg.mxu0
    %vm333 = vcmask 31744
    %v335 = vsel %vm333, %v315, 0
    %v338 = vsel %vm333, %v320, 0
    %v341 = vsel %vm333, %v325, 0
    %v344 = vsel %vm333, %v330, 0
    %vm346 = vcmask 1043456
    %v348 = vsel %vm346, %v110, 0
    %350 = vmatprep.subr.mxu0 0.0
    %351 = vmatpush1.msra.mxu0 %v348
    %352 = vmatprep.subr.mxu0 0.0
    %353 = vmatpush1.msra.mxu0 0.0
    %354 = vmatprep.subr.mxu0 0.0
    %355 = vmatpush1.msra.mxu0 0.0
    %356 = vmatprep.subr.mxu0 0.0
    %357 = vmatpush1.msra.mxu0 0.0
    %358 = vmatprep.subr.mxu0 0.0
    %359 = vmatpush1.msra.mxu0 0.0
    %360 = vmatprep.subr.mxu0 0.0
    %361 = vmatpush1.msra.mxu0 0.0
    %362 = vmatprep.subr.mxu0 0.0
    %363 = vmatpush1.msra.mxu0 0.0
    %364 = vmatprep.subr.mxu0 0.0
    %365 = vmatpush1.msra.mxu0 0.0
    %366 = vmatprep.subr.mxu0 0.0
    %367 = vmatpush1.msra.mxu0 0.0
    %368 = vmatprep.subr.mxu0 0.0
    %369 = vmatpush1.msra.mxu0 0.0
    %370 = vmatprep.subr.mxu0 0.0
    %371 = vmatpush1.msra.mxu0 0.0
    %372 = vmatprep.subr.mxu0 0.0
    %373 = vmatpush1.msra.mxu0 0.0
    %374 = vmatprep.subr.mxu0 0.0
    %375 = vmatpush1.msra.mxu0 0.0
    %376 = vmatprep.subr.mxu0 0.0
    %377 = vmatpush1.msra.mxu0 0.0
    %378 = vmatprep.subr.mxu0 0.0
    %379 = vmatpush1.msra.mxu0 0.0
    %380 = vmatprep.subr.mxu0 0.0
    %381 = vmatpush1.msra.mxu0 0.0
    %382 = vmatprep.subr.mxu0 0.0
    %383 = vmatpush1.msra.mxu0 0.0
    %384 = vmatprep.subr.mxu0 0.0
    %385 = vmatpush1.msra.mxu0 0.0
    %386 = vmatprep.subr.mxu0 0.0
    %387 = vmatpush1.msra.mxu0 0.0
    %388 = vmatprep.subr.mxu0 0.0
    %389 = vmatpush1.msra.mxu0 0.0
    %390 = vmatprep.subr.mxu0 0.0
    %391 = vmatpush1.msra.mxu0 0.0
    %392 = vmatprep.subr.mxu0 0.0
    %393 = vmatpush1.msra.mxu0 0.0
    %394 = vmatprep.subr.mxu0 0.0
    %395 = vmatpush1.msra.mxu0 0.0
    %396 = vmatprep.subr.mxu0 0.0
    %397 = vmatpush1.msra.mxu0 0.0
    %398 = vmatprep.subr.mxu0 0.0
    %399 = vmatpush1.msra.mxu0 0.0
    %400 = vmatprep.subr.mxu0 0.0
    %401 = vmatpush1.msra.mxu0 0.0
    %402 = vmatprep.subr.mxu0 0.0
    %403 = vmatpush1.msra.mxu0 0.0
    %404 = vmatprep.subr.mxu0 0.0
    %405 = vmatpush1.msra.mxu0 0.0
    %406 = vmatprep.subr.mxu0 0.0
    %407 = vmatpush1.msra.mxu0 0.0
    %408 = vmatprep.subr.mxu0 0.0
    %409 = vmatpush1.msra.mxu0 0.0
    %410 = vmatprep.subr.mxu0 0.0
    %411 = vmatpush1.msra.mxu0 0.0
    %412 = vmatprep.subr.mxu0 0.0
    %413 = vmatpush1.msra.mxu0 0.0
    %414 = vmatprep.mubr.f32.mxu0 0.0
    %415 = vmatmul.mubr.f32.gmra.mrb[0].mxu0 %v335
    %v416 = vpop.f32.mrb[0].mxu0
    %v417 = vadd.f32 0.0, %v416
    %v418 = vpop.f32.mrb[0].mxu0
    %419 = vmatprep.mubr.f32.mxu0 0.0
    %420 = vmatmul.mubr.f32.gmra.mrb[0].mxu0 %v338
    %v421 = vpop.f32.mrb[0].mxu0
    %v422 = vadd.f32 0.0, %v421
    %v423 = vpop.f32.mrb[0].mxu0
    %424 = vmatprep.mubr.f32.mxu0 0.0
    %425 = vmatmul.mubr.f32.gmra.mrb[0].mxu0 %v341
    %v426 = vpop.f32.mrb[0].mxu0
    %v427 = vadd.f32 0.0, %v426
    %v428 = vpop.f32.mrb[0].mxu0
    %429 = vmatprep.mubr.f32.mxu0 0.0
    %430 = vmatmul.mubr.f32.gmra.mrb[0].mxu0 %v344
    %v431 = vpop.f32.mrb[0].mxu0
    %v432 = vadd.f32 0.0, %v431
    %v433 = vpop.f32.mrb[0].mxu0
    %434 = vdwg.mxu0
    %v435 = vmax.f32 %v417, 1e-24
    %v436 = vmax.f32 %v422, 1e-24
    %v437 = vmax.f32 %v427, 1e-24
    %v438 = vmax.f32 %v432, 1e-24
    %v439 = vrsqrt.pop %v435
    %v440 = vrsqrt.pop %v436
    %v441 = vrsqrt.pop %v437
    %v442 = vrsqrt.pop %v438
    %v443 = vmul.f32 %v230, %v439
    %v444 = vmul.f32 %v233, %v440
    %v445 = vmul.f32 %v238, %v441
    %v446 = vmul.f32 %v241, %v442
    %v448 = vlaneseq
    %v449 = vshrl.u32 %v448, 7
    %v450 = vsub.s32 0, %v449
    %v451 = vrot.slane %v127, %v450
    %v453 = vmul.f32 %v443, %v451
    %v454 = vmul.f32 %v444, %v451
    %v455 = vmul.f32 %v445, %v451
    %v456 = vmul.f32 %v446, %v451
    %v457 = vpack.c.bf16 %v454, %v453
    %v458 = vpack.c.bf16 %v456, %v455
    %v461 = vunpack.c.l.b16 %v457
    %v462 = vunpack.c.h.b16 %v457
    %v463 = vunpack.c.l.b16 %v458
    %v464 = vunpack.c.h.b16 %v458
    %v465 = vpack.c.b16 %v461, %v461
    %v466 = vpack.c.b16 %v462, %v462
    %v467 = vpack.c.b16 %v463, %v463
    %v468 = vpack.c.b16 %v464, %v464
    %473 = vst [vmem:[%s9] sm:$0xf] %v465
    %474 = vst [vmem:[%s9 + $0x4] sm:$0xf] %v466
    %475 = vst [vmem:[%s9 + $0x8] sm:$0xf] %v467
    %476 = vst [vmem:[%s9 + $0xc] sm:$0xf] %v468
    %v477 = vld [vmem:[%s7] sm:$0xf]
    %v478 = vld [vmem:[%s7 + $0x4] sm:$0xf]
    %v479 = vld [vmem:[%s7 + $0x8] sm:$0xf]
    %v480 = vld [vmem:[%s7 + $0xc] sm:$0xf]
    %v481 = vld [vmem:[%s7 + $0x10] sm:$0xf]
    %v482 = vld [vmem:[%s7 + $0x14] sm:$0xf]
    %v483 = vld [vmem:[%s7 + $0x18] sm:$0xf]
    %v484 = vld [vmem:[%s7 + $0x1c] sm:$0xf]
    %v485 = vld [vmem:[%s7 + $0x20] sm:$0xf]
    %v486 = vld [vmem:[%s7 + $0x24] sm:$0xf]
    %v487 = vld [vmem:[%s7 + $0x28] sm:$0xf]
    %v488 = vld [vmem:[%s7 + $0x2c] sm:$0xf]
    %v489 = vld [vmem:[%s7 + $0x30] sm:$0xf]
    %v490 = vld [vmem:[%s7 + $0x34] sm:$0xf]
    %v491 = vld [vmem:[%s7 + $0x38] sm:$0xf]
    %v492 = vld [vmem:[%s7 + $0x3c] sm:$0xf]
    %v509 = vunpack.c.l.b16 %v477
    %v510 = vunpack.c.l.b16 %v478
    %v511 = vunpack.c.l.b16 %v479
    %v512 = vunpack.c.l.b16 %v480
    %v513 = vunpack.c.l.b16 %v481
    %v514 = vunpack.c.l.b16 %v482
    %v515 = vunpack.c.l.b16 %v483
    %v516 = vunpack.c.l.b16 %v484
    %v517 = vunpack.c.l.b16 %v485
    %v518 = vunpack.c.l.b16 %v486
    %v519 = vunpack.c.l.b16 %v487
    %v520 = vunpack.c.l.b16 %v488
    %v521 = vunpack.c.l.b16 %v489
    %v522 = vunpack.c.l.b16 %v490
    %v523 = vunpack.c.l.b16 %v491
    %v524 = vunpack.c.l.b16 %v492
    %v525 = vpack.c.b16 %v510, %v509
    %v526 = vpack.c.b16 %v512, %v511
    %v527 = vpack.c.b16 %v514, %v513
    %v528 = vpack.c.b16 %v516, %v515
    %v529 = vpack.c.b16 %v518, %v517
    %v530 = vpack.c.b16 %v520, %v519
    %v531 = vpack.c.b16 %v522, %v521
    %v532 = vpack.c.b16 %v524, %v523
    %541 = vmatprep.subr.bf16.mxu0 0
    %542 = vmatpush1.bf16.msra.mxu0 %v525
    %543 = vmatprep.subr.bf16.mxu0 0
    %544 = vmatpush1.bf16.msra.mxu0 %v526
    %545 = vmatprep.subr.bf16.mxu0 0
    %546 = vmatpush1.bf16.msra.mxu0 %v527
    %547 = vmatprep.subr.bf16.mxu0 0
    %548 = vmatpush1.bf16.msra.mxu0 %v528
    %549 = vmatprep.subr.bf16.mxu0 0
    %550 = vmatpush1.bf16.msra.mxu0 %v529
    %551 = vmatprep.subr.bf16.mxu0 0
    %552 = vmatpush1.bf16.msra.mxu0 %v530
    %553 = vmatprep.subr.bf16.mxu0 0
    %554 = vmatpush1.bf16.msra.mxu0 %v531
    %555 = vmatprep.subr.bf16.mxu0 0
    %556 = vmatpush1.bf16.msra.mxu0 %v532
    %557 = vmatprep.subr.bf16.mxu0 0
    %558 = vmatpush1.bf16.msra.mxu0 0
    %559 = vmatprep.subr.bf16.mxu0 0
    %560 = vmatpush1.bf16.msra.mxu0 0
    %561 = vmatprep.subr.bf16.mxu0 0
    %562 = vmatpush1.bf16.msra.mxu0 0
    %563 = vmatprep.subr.bf16.mxu0 0
    %564 = vmatpush1.bf16.msra.mxu0 0
    %565 = vmatprep.subr.bf16.mxu0 0
    %566 = vmatpush1.bf16.msra.mxu0 0
    %567 = vmatprep.subr.bf16.mxu0 0
    %568 = vmatpush1.bf16.msra.mxu0 0
    %569 = vmatprep.subr.bf16.mxu0 0
    %570 = vmatpush1.bf16.msra.mxu0 0
    %571 = vmatprep.subr.bf16.mxu0 0
    %572 = vmatpush1.bf16.msra.mxu0 0
    %573 = vmatprep.mubr.bf16.mxu0 0
    %574 = vmatmul.mubr.bf16.gmra.mrb[0].mxu0 %v129
    %v575 = vpop.f32.mrb[0].mxu0
    %v576 = vadd.f32 0.0, %v575
    %v577 = vpop.f32.mrb[0].mxu0
    %v578 = vpop.f32.mrb[0].mxu0
    %v579 = vadd.f32 0.0, %v578
    %v580 = vpop.f32.mrb[0].mxu0
    %581 = vmatprep.mubr.bf16.mxu0 0
    %582 = vmatmul.mubr.bf16.gmra.mrb[0].mxu0 %v130
    %v583 = vpop.f32.mrb[0].mxu0
    %v584 = vadd.f32 0.0, %v583
    %v585 = vpop.f32.mrb[0].mxu0
    %v586 = vpop.f32.mrb[0].mxu0
    %v587 = vadd.f32 0.0, %v586
    %v588 = vpop.f32.mrb[0].mxu0
    %589 = vdwg.mxu0
    %v590 = vmul.f32 %v576, %v576
    %v591 = vmul.f32 %v579, %v579
    %v592 = vmul.f32 %v584, %v584
    %v593 = vmul.f32 %v587, %v587
    %594 = vmatprep.subr.mxu0 0.0
    %595 = vmatpush1.msra.mxu0 %v111
    %596 = vmatprep.subr.mxu0 0.0
    %597 = vmatpush1.msra.mxu0 %v112
    %598 = vmatprep.subr.mxu0 0.0
    %599 = vmatpush1.msra.mxu0 %v113
    %600 = vmatprep.subr.mxu0 0.0
    %601 = vmatpush1.msra.mxu0 %v114
    %602 = vmatprep.subr.mxu0 0.0
    %603 = vmatpush1.msra.mxu0 %v115
    %604 = vmatprep.subr.mxu0 0.0
    %605 = vmatpush1.msra.mxu0 %v116
    %606 = vmatprep.subr.mxu0 0.0
    %607 = vmatpush1.msra.mxu0 %v117
    %608 = vmatprep.subr.mxu0 0.0
    %609 = vmatpush1.msra.mxu0 %v118
    %610 = vmatprep.subr.mxu0 0.0
    %611 = vmatpush1.msra.mxu0 %v119
    %612 = vmatprep.subr.mxu0 0.0
    %613 = vmatpush1.msra.mxu0 %v120
    %614 = vmatprep.subr.mxu0 0.0
    %615 = vmatpush1.msra.mxu0 %v121
    %616 = vmatprep.subr.mxu0 0.0
    %617 = vmatpush1.msra.mxu0 %v122
    %618 = vmatprep.subr.mxu0 0.0
    %619 = vmatpush1.msra.mxu0 %v123
    %620 = vmatprep.subr.mxu0 0.0
    %621 = vmatpush1.msra.mxu0 %v124
    %622 = vmatprep.subr.mxu0 0.0
    %623 = vmatpush1.msra.mxu0 %v125
    %624 = vmatprep.subr.mxu0 0.0
    %625 = vmatpush1.msra.mxu0 %v126
    %626 = vmatprep.subr.mxu0 0.0
    %627 = vmatpush1.msra.mxu0 0.0
    %628 = vmatprep.subr.mxu0 0.0
    %629 = vmatpush1.msra.mxu0 0.0
    %630 = vmatprep.subr.mxu0 0.0
    %631 = vmatpush1.msra.mxu0 0.0
    %632 = vmatprep.subr.mxu0 0.0
    %633 = vmatpush1.msra.mxu0 0.0
    %634 = vmatprep.subr.mxu0 0.0
    %635 = vmatpush1.msra.mxu0 0.0
    %636 = vmatprep.subr.mxu0 0.0
    %637 = vmatpush1.msra.mxu0 0.0
    %638 = vmatprep.subr.mxu0 0.0
    %639 = vmatpush1.msra.mxu0 0.0
    %640 = vmatprep.subr.mxu0 0.0
    %641 = vmatpush1.msra.mxu0 0.0
    %642 = vmatprep.subr.mxu0 0.0
    %643 = vmatpush1.msra.mxu0 0.0
    %644 = vmatprep.subr.mxu0 0.0
    %645 = vmatpush1.msra.mxu0 0.0
    %646 = vmatprep.subr.mxu0 0.0
    %647 = vmatpush1.msra.mxu0 0.0
    %648 = vmatprep.subr.mxu0 0.0
    %649 = vmatpush1.msra.mxu0 0.0
    %650 = vmatprep.subr.mxu0 0.0
    %651 = vmatpush1.msra.mxu0 0.0
    %652 = vmatprep.subr.mxu0 0.0
    %653 = vmatpush1.msra.mxu0 0.0
    %654 = vmatprep.subr.mxu0 0.0
    %655 = vmatpush1.msra.mxu0 0.0
    %656 = vmatprep.subr.mxu0 0.0
    %657 = vmatpush1.msra.mxu0 0.0
    %658 = vmatprep.mubr.f32.mxu0 0.0
    %659 = vmatmul.mubr.f32.gmra.mrb[0].mxu0 %v590
    %v660 = vpop.f32.mrb[0].mxu0
    %v661 = vadd.f32 0.0, %v660
    %v662 = vpop.f32.mrb[0].mxu0
    %663 = vmatprep.mubr.f32.mxu0 0.0
    %664 = vmatmul.mubr.f32.gmra.mrb[0].mxu0 %v591
    %v665 = vpop.f32.mrb[0].mxu0
    %v666 = vadd.f32 0.0, %v665
    %v667 = vpop.f32.mrb[0].mxu0
    %668 = vmatprep.mubr.f32.mxu0 0.0
    %669 = vmatmul.mubr.f32.gmra.mrb[0].mxu0 %v592
    %v670 = vpop.f32.mrb[0].mxu0
    %v671 = vadd.f32 0.0, %v670
    %v672 = vpop.f32.mrb[0].mxu0
    %673 = vmatprep.mubr.f32.mxu0 0.0
    %674 = vmatmul.mubr.f32.gmra.mrb[0].mxu0 %v593
    %v675 = vpop.f32.mrb[0].mxu0
    %v676 = vadd.f32 0.0, %v675
    %v677 = vpop.f32.mrb[0].mxu0
    %678 = vdwg.mxu0
    %v680 = vsel %vm333, %v661, 0
    %v683 = vsel %vm333, %v666, 0
    %v686 = vsel %vm333, %v671, 0
    %v689 = vsel %vm333, %v676, 0
    %691 = vmatprep.subr.mxu0 0.0
    %692 = vmatpush1.msra.mxu0 %v348
    %693 = vmatprep.subr.mxu0 0.0
    %694 = vmatpush1.msra.mxu0 0.0
    %695 = vmatprep.subr.mxu0 0.0
    %696 = vmatpush1.msra.mxu0 0.0
    %697 = vmatprep.subr.mxu0 0.0
    %698 = vmatpush1.msra.mxu0 0.0
    %699 = vmatprep.subr.mxu0 0.0
    %700 = vmatpush1.msra.mxu0 0.0
    %701 = vmatprep.subr.mxu0 0.0
    %702 = vmatpush1.msra.mxu0 0.0
    %703 = vmatprep.subr.mxu0 0.0
    %704 = vmatpush1.msra.mxu0 0.0
    %705 = vmatprep.subr.mxu0 0.0
    %706 = vmatpush1.msra.mxu0 0.0
    %707 = vmatprep.subr.mxu0 0.0
    %708 = vmatpush1.msra.mxu0 0.0
    %709 = vmatprep.subr.mxu0 0.0
    %710 = vmatpush1.msra.mxu0 0.0
    %711 = vmatprep.subr.mxu0 0.0
    %712 = vmatpush1.msra.mxu0 0.0
    %713 = vmatprep.subr.mxu0 0.0
    %714 = vmatpush1.msra.mxu0 0.0
    %715 = vmatprep.subr.mxu0 0.0
    %716 = vmatpush1.msra.mxu0 0.0
    %717 = vmatprep.subr.mxu0 0.0
    %718 = vmatpush1.msra.mxu0 0.0
    %719 = vmatprep.subr.mxu0 0.0
    %720 = vmatpush1.msra.mxu0 0.0
    %721 = vmatprep.subr.mxu0 0.0
    %722 = vmatpush1.msra.mxu0 0.0
    %723 = vmatprep.subr.mxu0 0.0
    %724 = vmatpush1.msra.mxu0 0.0
    %725 = vmatprep.subr.mxu0 0.0
    %726 = vmatpush1.msra.mxu0 0.0
    %727 = vmatprep.subr.mxu0 0.0
    %728 = vmatpush1.msra.mxu0 0.0
    %729 = vmatprep.subr.mxu0 0.0
    %730 = vmatpush1.msra.mxu0 0.0
    %731 = vmatprep.subr.mxu0 0.0
    %732 = vmatpush1.msra.mxu0 0.0
    %733 = vmatprep.subr.mxu0 0.0
    %734 = vmatpush1.msra.mxu0 0.0
    %735 = vmatprep.subr.mxu0 0.0
    %736 = vmatpush1.msra.mxu0 0.0
    %737 = vmatprep.subr.mxu0 0.0
    %738 = vmatpush1.msra.mxu0 0.0
    %739 = vmatprep.subr.mxu0 0.0
    %740 = vmatpush1.msra.mxu0 0.0
    %741 = vmatprep.subr.mxu0 0.0
    %742 = vmatpush1.msra.mxu0 0.0
    %743 = vmatprep.subr.mxu0 0.0
    %744 = vmatpush1.msra.mxu0 0.0
    %745 = vmatprep.subr.mxu0 0.0
    %746 = vmatpush1.msra.mxu0 0.0
    %747 = vmatprep.subr.mxu0 0.0
    %748 = vmatpush1.msra.mxu0 0.0
    %749 = vmatprep.subr.mxu0 0.0
    %750 = vmatpush1.msra.mxu0 0.0
    %751 = vmatprep.subr.mxu0 0.0
    %752 = vmatpush1.msra.mxu0 0.0
    %753 = vmatprep.subr.mxu0 0.0
    %754 = vmatpush1.msra.mxu0 0.0
    %755 = vmatprep.mubr.f32.mxu0 0.0
    %756 = vmatmul.mubr.f32.gmra.mrb[0].mxu0 %v680
    %v757 = vpop.f32.mrb[0].mxu0
    %v758 = vadd.f32 0.0, %v757
    %v759 = vpop.f32.mrb[0].mxu0
    %760 = vmatprep.mubr.f32.mxu0 0.0
    %761 = vmatmul.mubr.f32.gmra.mrb[0].mxu0 %v683
    %v762 = vpop.f32.mrb[0].mxu0
    %v763 = vadd.f32 0.0, %v762
    %v764 = vpop.f32.mrb[0].mxu0
    %765 = vmatprep.mubr.f32.mxu0 0.0
    %766 = vmatmul.mubr.f32.gmra.mrb[0].mxu0 %v686
    %v767 = vpop.f32.mrb[0].mxu0
    %v768 = vadd.f32 0.0, %v767
    %v769 = vpop.f32.mrb[0].mxu0
    %770 = vmatprep.mubr.f32.mxu0 0.0
    %771 = vmatmul.mubr.f32.gmra.mrb[0].mxu0 %v689
    %v772 = vpop.f32.mrb[0].mxu0
    %v773 = vadd.f32 0.0, %v772
    %v774 = vpop.f32.mrb[0].mxu0
    %775 = vdwg.mxu0
    %v776 = vmax.f32 %v758, 1e-24
    %v777 = vmax.f32 %v763, 1e-24
    %v778 = vmax.f32 %v768, 1e-24
    %v779 = vmax.f32 %v773, 1e-24
    %v780 = vrsqrt.pop %v776
    %v781 = vrsqrt.pop %v777
    %v782 = vrsqrt.pop %v778
    %v783 = vrsqrt.pop %v779
    %v784 = vmul.f32 %v576, %v780
    %v785 = vmul.f32 %v579, %v781
    %v786 = vmul.f32 %v584, %v782
    %v787 = vmul.f32 %v587, %v783
    %v789 = vlaneseq
    %v790 = vshrl.u32 %v789, 7
    %v791 = vsub.s32 0, %v790
    %v792 = vrot.slane %v128, %v791
    %v794 = vmul.f32 %v784, %v792
    %v795 = vmul.f32 %v785, %v792
    %v796 = vmul.f32 %v786, %v792
    %v797 = vmul.f32 %v787, %v792
    %v798 = vpack.c.bf16 %v795, %v794
    %v799 = vpack.c.bf16 %v797, %v796
    %v802 = vunpack.c.l.b16 %v798
    %v803 = vunpack.c.h.b16 %v798
    %v804 = vunpack.c.l.b16 %v799
    %v805 = vunpack.c.h.b16 %v799
    %v806 = vpack.c.b16 %v802, %v802
    %v807 = vpack.c.b16 %v803, %v803
    %v808 = vpack.c.b16 %v804, %v804
    %v809 = vpack.c.b16 %v805, %v805
    %814 = vst [vmem:[%s10] sm:$0xf] %v806
    %815 = vst [vmem:[%s10 + $0x4] sm:$0xf] %v807
    %816 = vst [vmem:[%s10 + $0x8] sm:$0xf] %v808
    %817 = vst [vmem:[%s10 + $0xc] sm:$0xf] %v809
    %v818 = vld [vmem:[#allocation2] sm:$0xf]
    %v819 = vld [vmem:[#allocation2 + $0x4] sm:$0xf]
    %v820 = vld [vmem:[#allocation2 + $0x8] sm:$0xf]
    %v821 = vld [vmem:[#allocation2 + $0xc] sm:$0xf]
    %v822 = vld [vmem:[#allocation2 + $0x10] sm:$0xf]
    %v823 = vld [vmem:[#allocation2 + $0x14] sm:$0xf]
    %v824 = vld [vmem:[#allocation2 + $0x18] sm:$0xf]
    %v825 = vld [vmem:[#allocation2 + $0x1c] sm:$0xf]
    %v826 = vld [vmem:[#allocation2 + $0x20] sm:$0xf]
    %v827 = vld [vmem:[#allocation2 + $0x24] sm:$0xf]
    %v828 = vld [vmem:[#allocation2 + $0x28] sm:$0xf]
    %v829 = vld [vmem:[#allocation2 + $0x2c] sm:$0xf]
    %v830 = vld [vmem:[#allocation2 + $0x30] sm:$0xf]
    %v831 = vld [vmem:[#allocation2 + $0x34] sm:$0xf]
    %v832 = vld [vmem:[#allocation2 + $0x38] sm:$0xf]
    %v833 = vld [vmem:[#allocation2 + $0x3c] sm:$0xf]
    %v850 = vunpack.c.l.b16 %v818
    %v851 = vunpack.c.l.b16 %v819
    %v852 = vunpack.c.l.b16 %v820
    %v853 = vunpack.c.l.b16 %v821
    %v854 = vunpack.c.l.b16 %v822
    %v855 = vunpack.c.l.b16 %v823
    %v856 = vunpack.c.l.b16 %v824
    %v857 = vunpack.c.l.b16 %v825
    %v858 = vunpack.c.l.b16 %v826
    %v859 = vunpack.c.l.b16 %v827
    %v860 = vunpack.c.l.b16 %v828
    %v861 = vunpack.c.l.b16 %v829
    %v862 = vunpack.c.l.b16 %v830
    %v863 = vunpack.c.l.b16 %v831
    %v864 = vunpack.c.l.b16 %v832
    %v865 = vunpack.c.l.b16 %v833
    %v866 = vpack.c.b16 %v851, %v850
    %v867 = vpack.c.b16 %v853, %v852
    %v868 = vpack.c.b16 %v855, %v854
    %v869 = vpack.c.b16 %v857, %v856
    %v870 = vpack.c.b16 %v859, %v858
    %v871 = vpack.c.b16 %v861, %v860
    %v872 = vpack.c.b16 %v863, %v862
    %v873 = vpack.c.b16 %v865, %v864
    %882 = vmatprep.subr.bf16.mxu0 0
    %883 = vmatpush1.bf16.msra.mxu0 %v866
    %884 = vmatprep.subr.bf16.mxu0 0
    %885 = vmatpush1.bf16.msra.mxu0 %v867
    %886 = vmatprep.subr.bf16.mxu0 0
    %887 = vmatpush1.bf16.msra.mxu0 %v868
    %888 = vmatprep.subr.bf16.mxu0 0
    %889 = vmatpush1.bf16.msra.mxu0 %v869
    %890 = vmatprep.subr.bf16.mxu0 0
    %891 = vmatpush1.bf16.msra.mxu0 %v870
    %892 = vmatprep.subr.bf16.mxu0 0
    %893 = vmatpush1.bf16.msra.mxu0 %v871
    %894 = vmatprep.subr.bf16.mxu0 0
    %895 = vmatpush1.bf16.msra.mxu0 %v872
    %896 = vmatprep.subr.bf16.mxu0 0
    %897 = vmatpush1.bf16.msra.mxu0 %v873
    %898 = vmatprep.subr.bf16.mxu0 0
    %899 = vmatpush1.bf16.msra.mxu0 0
    %900 = vmatprep.subr.bf16.mxu0 0
    %901 = vmatpush1.bf16.msra.mxu0 0
    %902 = vmatprep.subr.bf16.mxu0 0
    %903 = vmatpush1.bf16.msra.mxu0 0
    %904 = vmatprep.subr.bf16.mxu0 0
    %905 = vmatpush1.bf16.msra.mxu0 0
    %906 = vmatprep.subr.bf16.mxu0 0
    %907 = vmatpush1.bf16.msra.mxu0 0
    %908 = vmatprep.subr.bf16.mxu0 0
    %909 = vmatpush1.bf16.msra.mxu0 0
    %910 = vmatprep.subr.bf16.mxu0 0
    %911 = vmatpush1.bf16.msra.mxu0 0
    %912 = vmatprep.subr.bf16.mxu0 0
    %913 = vmatpush1.bf16.msra.mxu0 0
    %914 = vmatprep.mubr.bf16.mxu0 0
    %915 = vmatmul.mubr.bf16.gmra.mrb[0].mxu0 %v129
    %v916 = vpop.f32.mrb[0].mxu0
    %v917 = vadd.f32 0.0, %v916
    %v918 = vpop.f32.mrb[0].mxu0
    %v919 = vpop.f32.mrb[0].mxu0
    %v920 = vadd.f32 0.0, %v919
    %v921 = vpop.f32.mrb[0].mxu0
    %922 = vmatprep.mubr.bf16.mxu0 0
    %923 = vmatmul.mubr.bf16.gmra.mrb[0].mxu0 %v130
    %v924 = vpop.f32.mrb[0].mxu0
    %v925 = vadd.f32 0.0, %v924
    %v926 = vpop.f32.mrb[0].mxu0
    %v927 = vpop.f32.mrb[0].mxu0
    %v928 = vadd.f32 0.0, %v927
    %v929 = vpop.f32.mrb[0].mxu0
    %930 = vdwg.mxu0
    %v931 = vpack.c.bf16 %v920, %v917
    %v932 = vpack.c.bf16 %v928, %v925
    %v935 = vunpack.c.l.b16 %v931
    %v936 = vunpack.c.h.b16 %v931
    %v937 = vunpack.c.l.b16 %v932
    %v938 = vunpack.c.h.b16 %v932
    %v939 = vpack.c.b16 %v935, %v935
    %v940 = vpack.c.b16 %v936, %v936
    %v941 = vpack.c.b16 %v937, %v937
    %v942 = vpack.c.b16 %v938, %v938
    %947 = vst [vmem:[%s11] sm:$0xf] %v939
    %948 = vst [vmem:[%s11 + $0x4] sm:$0xf] %v940
    %949 = vst [vmem:[%s11 + $0x8] sm:$0xf] %v941
    %950 = vst [vmem:[%s11 + $0xc] sm:$0xf] %v942
    // Predicated region
    $region42: #{_lambda_.2} parent=1 // pred_check
      _
    $region43: #{_lambda_.2} parent=1 // pred_check_branch
      %952 = sbr.rel (0) target = $region45
    $region44: #{_lambda_.2} parent=1 // pred_region
      _
    $region45: #{_lambda_.2} parent=1 // pred_fallthru
      _
    // Predicated region
    $region46: #{_lambda_.2} parent=1 // pred_check
      _
    $region47: #{_lambda_.2} parent=1 // pred_check_branch
      %954 = sbr.rel (0) target = $region49
    $region48: #{_lambda_.2} parent=1 // pred_region
      _
    $region49: #{_lambda_.2} parent=1 // pred_fallthru
      _
    // Predicated region
    $region50: #{_lambda_.2} parent=1 // pred_check
      _
    $region51: #{_lambda_.2} parent=1 // pred_check_branch
      %956 = sbr.rel (0) target = $region53
    $region52: #{_lambda_.2} parent=1 // pred_region
      _
    $region53: #{_lambda_.2} parent=1 // pred_fallthru
      _
    // Predicated region
    $region54: #{_lambda_.2} parent=1 // pred_check
      _
    $region55: #{_lambda_.2} parent=1 // pred_check_branch
      %958 = sbr.rel (0) target = $region57
    $region56: #{_lambda_.2} parent=1 // pred_region
      _
    $region57: #{_lambda_.2} parent=1 // pred_fallthru
      _
    // Predicated region
    $region58: #{_lambda_.2} parent=1 // pred_check
      _
    $region59: #{_lambda_.2} parent=1 // pred_check_branch
      %960 = sbr.rel (0) target = $region61
    $region60: #{_lambda_.2} parent=1 // pred_region
      _
    $region61: #{_lambda_.2} parent=1 // pred_fallthru
      _
    // Predicated region
    $region62: #{_lambda_.2} parent=1 // pred_check
      _
    $region63: #{_lambda_.2} parent=1 // pred_check_branch
      %962 = sbr.rel (0) target = $region65
    $region64: #{_lambda_.2} parent=1 // pred_region
      _
    $region65: #{_lambda_.2} parent=1 // pred_fallthru
      _
    %963 = vsyncpa [#allocation3], 1

// kernel: _lambda_.3
$region0: #{_lambda_.3}
  #allocation0 [shape = 'u32[]', space=smem, size = 0x4, offset = 0x4, fixed_abs, tag = 'smem constant byte address 0x4 - core index']
  #allocation1 [shape = 'u32[144,128]{1,0:T(1,128)}', space=vmem, size = 0x12000, scoped, tag = 'internal scratch']
  #allocation2 [shape = 'f32[4,16,1]{2,1,0:T(8,128)}', space=vmem, size = 0x8000, scoped, tag = 'scratch operand']
  #allocation3 [shape = 'f32[4,16,1]{2,1,0:T(8,128)}', space=vmem, size = 0x8000, scoped, tag = 'scratch operand']
  #allocation4 [shape = 'f32[16,128]{1,0:T(8,128)}', space=vmem, size = 0x2000, scoped, tag = 'scratch operand']
  %s0 = inlined_call_operand.vmem [shape: bf16[2,16,128], index: 0, kind: input, shape index: {}]
  %s1 = inlined_call_operand.vmem [shape: bf16[2,16,128], index: 1, kind: input, shape index: {}]
  %s2 = inlined_call_operand.vmem [shape: bf16[2,16,128], index: 2, kind: input, shape index: {}]
  %s3 = inlined_call_operand.vmem [shape: s32[2,1,16], index: 3, kind: input, shape index: {}]
  %s4 = inlined_call_operand.vmem [shape: bf16[128,4], index: 4, kind: input, shape index: {}]
  %s5 = inlined_call_operand.vmem [shape: f32[1,128], index: 5, kind: input, shape index: {}]
  %s6 = inlined_call_operand.vmem [shape: f32[4,128], index: 6, kind: input, shape index: {}]
  %s7 = inlined_call_operand.vmem [shape: bf16[128,128], index: 7, kind: input, shape index: {}]
  %s8 = inlined_call_operand.hbm [shape: f32[2,16,128], index: 8, kind: output, shape index: {}]
  %s9 = sld [smem:[#allocation0]]
  $region73: #{_lambda_.3} parent=0
    _
  %s11 = ssub.s32 1, %s9
  %s12 = scalar_select 0, %s11, %s9
  $region1: #{_lambda_.3} parent=0
    #allocation5 [shape = 'u8[16384]{0}', space=vmem, size = 0x4000, scoped, tag = 'output window, operand 0']
    #allocation6 [shape = 's32[2]{0}', space=sflag, size = 0x8, scoped, tag = 'scoped memory for _lambda_.3']
    %13 = vsyncpa [#allocation6], 0
    %s14 = scalar_lea.sflag [#allocation6], 1
    %15 = vsyncpa %s14, 0
    loop: start=0, step=1, limit=4
    $region2: #{_lambda_.3} parent=1 // loop_pre_header
      _
    $region3: #{_lambda_.3} parent=1 // loop_header
      %s17 = sphi 0, %s21
      %p18 = scmp.ge.s32.totalorder %s17, 4
      %s24 = sphi 0, %s43
      %s25 = sphi 0, %s39
      %s26 = sphi 0, %s35
      %s27 = sphi 0, %s24
      %s28 = sphi 0, %s25
      %s29 = sphi 0, %s26
      %s30 = sphi 0, %s27
      %s31 = sphi 0, %s28
      %s32 = sphi 0, %s29
      %s48 = sphi 0, %s50
      %s51 = sphi 0, %s48
      %s52 = sphi 0, %s51
      %s68 = sphi 0, %s52
      %s76 = sphi 0, %s78
      %s79 = sphi 0, %s76
      %s80 = sphi 0, %s79
      %s96 = sphi 0, %s80
      %s104 = sphi 0, %s106
      %s107 = sphi 0, %s104
      %s108 = sphi 0, %s107
      %s124 = sphi 0, %s108
      %s132 = sphi 0, %s134
      %s135 = sphi 0, %s132
      %s136 = sphi 0, %s135
      %s152 = sphi 0, %s136
      %s156 = sphi 0, %s156
      %s158 = sphi 0, %s156
      %s159 = sphi 0, %s158
      %s173 = sphi 0, %s159
      %s177 = sphi 0, %s177
      %s179 = sphi 0, %s177
      %s180 = sphi 0, %s179
      %s194 = sphi 0, %s180
      %s198 = sphi 0, %s198
      %s200 = sphi 0, %s198
      %s201 = sphi 0, %s200
      %s215 = sphi 0, %s201
      %s219 = sphi 0, %s219
      %s221 = sphi 0, %s219
      %s222 = sphi 0, %s221
      %s236 = sphi 0, %s222
      %s244 = sphi 0, %s246
      %s247 = sphi 0, %s244
      %s248 = sphi 0, %s247
      %s264 = sphi 0, %s248
    $region4: #{_lambda_.3} parent=1 // loop_header_branch
      %20 = sbr.rel (%p18) target = $region8
    $region5: #{_lambda_.3} parent=1 // loop_body
      %s22 = ssub.s32 %s17, 1
      %s23 = ssub.s32 %s17, 2
      %s33 = sadd.s32 1, %s26
      %p34 = scmp.ge.s32.totalorder %s33, 1
      %s35 = scalar_select %p34, 0, %s33
      %s36 = sadd.s32 1, %s25
      %s37 = scalar_select %p34, %s36, %s25
      %p38 = scmp.ge.s32.totalorder %s37, 1
      %s39 = scalar_select %p38, 0, %s37
      %s40 = sadd.s32 1, %s24
      %s41 = scalar_select %p38, %s40, %s24
      %p42 = scmp.ge.s32.totalorder %s41, 2
      %s43 = scalar_select %p42, 0, %s41
      %s44 = ssub.s32 %s24, %s43
      %s45 = ssub.s32 %s25, %s39
      %s46 = sor.u32 %s44, %s45
      %p47 = scmp.eq.s32.totalorder %s46, 0
      %s49 = sadd.s32 %s48, 1
      %s50 = scalar_select %p47, %s48, %s49
      %p53 = pneg %p47
      %p54 = scmp.eq.s32.totalorder %s17, 1
      %p55 = por %p53, %p54
      %p56 = scmp.ne.s32.totalorder %s48, %s51
      %p57 = scmp.eq.s32.totalorder %s17, 0
      %p58 = por %p56, %p57
      %p59 = scmp.ne.s32.totalorder %s48, %s51
      %p60 = scmp.eq.s32.totalorder %s22, 1
      %p61 = por %p59, %p60
      %p62 = scmp.ne.s32.totalorder %s51, %s52
      %p63 = scmp.eq.s32.totalorder %s22, 0
      %p64 = por %p62, %p63
      %p65 = scmp.ne.s32.totalorder %s51, %s52
      %p66 = scmp.eq.s32.totalorder %s23, 1
      %p67 = por %p65, %p66
      %p69 = scmp.ne.s32.totalorder %s52, %s68
      %p70 = scmp.eq.s32.totalorder %s23, 0
      %p71 = por %p69, %p70
      %s72 = ssub.s32 %s24, %s43
      %s73 = ssub.s32 %s26, %s35
      %s74 = sor.u32 %s72, %s73
      %p75 = scmp.eq.s32.totalorder %s74, 0
      %s77 = sadd.s32 %s76, 1
      %s78 = scalar_select %p75, %s76, %s77
      %p81 = pneg %p75
      %p82 = scmp.eq.s32.totalorder %s17, 1
      %p83 = por %p81, %p82
      %p84 = scmp.ne.s32.totalorder %s76, %s79
      %p85 = scmp.eq.s32.totalorder %s17, 0
      %p86 = por %p84, %p85
      %p87 = scmp.ne.s32.totalorder %s76, %s79
      %p88 = scmp.eq.s32.totalorder %s22, 1
      %p89 = por %p87, %p88
      %p90 = scmp.ne.s32.totalorder %s79, %s80
      %p91 = scmp.eq.s32.totalorder %s22, 0
      %p92 = por %p90, %p91
      %p93 = scmp.ne.s32.totalorder %s79, %s80
      %p94 = scmp.eq.s32.totalorder %s23, 1
      %p95 = por %p93, %p94
      %p97 = scmp.ne.s32.totalorder %s80, %s96
      %p98 = scmp.eq.s32.totalorder %s23, 0
      %p99 = por %p97, %p98
      %s100 = ssub.s32 %s24, %s43
      %s101 = ssub.s32 %s26, %s35
      %s102 = sor.u32 %s100, %s101
      %p103 = scmp.eq.s32.totalorder %s102, 0
      %s105 = sadd.s32 %s104, 1
      %s106 = scalar_select %p103, %s104, %s105
      %p109 = pneg %p103
      %p110 = scmp.eq.s32.totalorder %s17, 1
      %p111 = por %p109, %p110
      %p112 = scmp.ne.s32.totalorder %s104, %s107
      %p113 = scmp.eq.s32.totalorder %s17, 0
      %p114 = por %p112, %p113
      %p115 = scmp.ne.s32.totalorder %s104, %s107
      %p116 = scmp.eq.s32.totalorder %s22, 1
      %p117 = por %p115, %p116
      %p118 = scmp.ne.s32.totalorder %s107, %s108
      %p119 = scmp.eq.s32.totalorder %s22, 0
      %p120 = por %p118, %p119
      %p121 = scmp.ne.s32.totalorder %s107, %s108
      %p122 = scmp.eq.s32.totalorder %s23, 1
      %p123 = por %p121, %p122
      %p125 = scmp.ne.s32.totalorder %s108, %s124
      %p126 = scmp.eq.s32.totalorder %s23, 0
      %p127 = por %p125, %p126
      %s128 = ssub.s32 %s24, %s43
      %s129 = ssub.s32 %s26, %s35
      %s130 = sor.u32 %s128, %s129
      %p131 = scmp.eq.s32.totalorder %s130, 0
      %s133 = sadd.s32 %s132, 1
      %s134 = scalar_select %p131, %s132, %s133
      %p137 = pneg %p131
      %p138 = scmp.eq.s32.totalorder %s17, 1
      %p139 = por %p137, %p138
      %p140 = scmp.ne.s32.totalorder %s132, %s135
      %p141 = scmp.eq.s32.totalorder %s17, 0
      %p142 = por %p140, %p141
      %p143 = scmp.ne.s32.totalorder %s132, %s135
      %p144 = scmp.eq.s32.totalorder %s22, 1
      %p145 = por %p143, %p144
      %p146 = scmp.ne.s32.totalorder %s135, %s136
      %p147 = scmp.eq.s32.totalorder %s22, 0
      %p148 = por %p146, %p147
      %p149 = scmp.ne.s32.totalorder %s135, %s136
      %p150 = scmp.eq.s32.totalorder %s23, 1
      %p151 = por %p149, %p150
      %p153 = scmp.ne.s32.totalorder %s136, %s152
      %p154 = scmp.eq.s32.totalorder %s23, 0
      %p155 = por %p153, %p154
      %s157 = sadd.s32 %s156, 1
      %p160 = scmp.eq.s32.totalorder %s17, 1
      %p161 = scmp.ne.s32.totalorder %s156, %s158
      %p162 = scmp.eq.s32.totalorder %s17, 0
      %p163 = por %p161, %p162
      %p164 = scmp.ne.s32.totalorder %s156, %s158
      %p165 = scmp.eq.s32.totalorder %s22, 1
      %p166 = por %p164, %p165
      %p167 = scmp.ne.s32.totalorder %s158, %s159
      %p168 = scmp.eq.s32.totalorder %s22, 0
      %p169 = por %p167, %p168
      %p170 = scmp.ne.s32.totalorder %s158, %s159
      %p171 = scmp.eq.s32.totalorder %s23, 1
      %p172 = por %p170, %p171
      %p174 = scmp.ne.s32.totalorder %s159, %s173
      %p175 = scmp.eq.s32.totalorder %s23, 0
      %p176 = por %p174, %p175
      %s178 = sadd.s32 %s177, 1
      %p181 = scmp.eq.s32.totalorder %s17, 1
      %p182 = scmp.ne.s32.totalorder %s177, %s179
      %p183 = scmp.eq.s32.totalorder %s17, 0
      %p184 = por %p182, %p183
      %p185 = scmp.ne.s32.totalorder %s177, %s179
      %p186 = scmp.eq.s32.totalorder %s22, 1
      %p187 = por %p185, %p186
      %p188 = scmp.ne.s32.totalorder %s179, %s180
      %p189 = scmp.eq.s32.totalorder %s22, 0
      %p190 = por %p188, %p189
      %p191 = scmp.ne.s32.totalorder %s179, %s180
      %p192 = scmp.eq.s32.totalorder %s23, 1
      %p193 = por %p191, %p192
      %p195 = scmp.ne.s32.totalorder %s180, %s194
      %p196 = scmp.eq.s32.totalorder %s23, 0
      %p197 = por %p195, %p196
      %s199 = sadd.s32 %s198, 1
      %p202 = scmp.eq.s32.totalorder %s17, 1
      %p203 = scmp.ne.s32.totalorder %s198, %s200
      %p204 = scmp.eq.s32.totalorder %s17, 0
      %p205 = por %p203, %p204
      %p206 = scmp.ne.s32.totalorder %s198, %s200
      %p207 = scmp.eq.s32.totalorder %s22, 1
      %p208 = por %p206, %p207
      %p209 = scmp.ne.s32.totalorder %s200, %s201
      %p210 = scmp.eq.s32.totalorder %s22, 0
      %p211 = por %p209, %p210
      %p212 = scmp.ne.s32.totalorder %s200, %s201
      %p213 = scmp.eq.s32.totalorder %s23, 1
      %p214 = por %p212, %p213
      %p216 = scmp.ne.s32.totalorder %s201, %s215
      %p217 = scmp.eq.s32.totalorder %s23, 0
      %p218 = por %p216, %p217
      %s220 = sadd.s32 %s219, 1
      %p223 = scmp.eq.s32.totalorder %s17, 1
      %p224 = scmp.ne.s32.totalorder %s219, %s221
      %p225 = scmp.eq.s32.totalorder %s17, 0
      %p226 = por %p224, %p225
      %p227 = scmp.ne.s32.totalorder %s219, %s221
      %p228 = scmp.eq.s32.totalorder %s22, 1
      %p229 = por %p227, %p228
      %p230 = scmp.ne.s32.totalorder %s221, %s222
      %p231 = scmp.eq.s32.totalorder %s22, 0
      %p232 = por %p230, %p231
      %p233 = scmp.ne.s32.totalorder %s221, %s222
      %p234 = scmp.eq.s32.totalorder %s23, 1
      %p235 = por %p233, %p234
      %p237 = scmp.ne.s32.totalorder %s222, %s236
      %p238 = scmp.eq.s32.totalorder %s23, 0
      %p239 = por %p237, %p238
      %s240 = ssub.s32 %s24, %s43
      %s241 = ssub.s32 %s25, %s39
      %s242 = sor.u32 %s240, %s241
      %p243 = scmp.eq.s32.totalorder %s242, 0
      %s245 = sadd.s32 %s244, 1
      %s246 = scalar_select %p243, %s244, %s245
      %p249 = pneg %p243
      %p250 = scmp.eq.s32.totalorder %s17, 1
      %p251 = por %p249, %p250
      %p252 = scmp.ne.s32.totalorder %s244, %s247
      %p253 = scmp.eq.s32.totalorder %s17, 0
      %p254 = por %p252, %p253
      %p255 = scmp.ne.s32.totalorder %s244, %s247
      %p256 = scmp.eq.s32.totalorder %s22, 1
      %p257 = por %p255, %p256
      %p258 = scmp.ne.s32.totalorder %s247, %s248
      %p259 = scmp.eq.s32.totalorder %s22, 0
      %p260 = por %p258, %p259
      %p261 = scmp.ne.s32.totalorder %s247, %s248
      %p262 = scmp.eq.s32.totalorder %s23, 1
      %p263 = por %p261, %p262
      %p265 = scmp.ne.s32.totalorder %s248, %s264
      %p266 = scmp.eq.s32.totalorder %s23, 0
      %p267 = por %p265, %p266
      %p268 = scmp.le.s32.totalorder 1, %s17
      %p269 = scmp.lt.s32.totalorder %s17, 3
      %p270 = pnand %p268, %p269
      %p271 = pneg %p270
      // Predicated region
      $region9: #{_lambda_.3} parent=5 // pred_check
        _
      $region10: #{_lambda_.3} parent=5 // pred_check_branch
        %273 = sbr.rel (%p270) target = $region12
      $region11: #{_lambda_.3} parent=5 // pred_region
        %s274 = ssub.s32 %s17, 1
        // Predicated region
        $region13: #{_lambda_.3} parent=11 // pred_check
          %p275 = pneg %p169
        $region14: #{_lambda_.3} parent=11 // pred_check_branch
          %277 = sbr.rel (%p275) target = $region16
        $region15: #{_lambda_.3} parent=11 // pred_region
          _
        $region16: #{_lambda_.3} parent=11 // pred_fallthru
          _
        // Predicated region
        $region17: #{_lambda_.3} parent=11 // pred_check
          %p278 = pneg %p190
        $region18: #{_lambda_.3} parent=11 // pred_check_branch
          %280 = sbr.rel (%p278) target = $region20
        $region19: #{_lambda_.3} parent=11 // pred_region
          _
        $region20: #{_lambda_.3} parent=11 // pred_fallthru
          _
        // Predicated region
        $region21: #{_lambda_.3} parent=11 // pred_check
          %p281 = pneg %p211
        $region22: #{_lambda_.3} parent=11 // pred_check_branch
          %283 = sbr.rel (%p281) target = $region24
        $region23: #{_lambda_.3} parent=11 // pred_region
          _
        $region24: #{_lambda_.3} parent=11 // pred_fallthru
          _
        // Predicated region
        $region25: #{_lambda_.3} parent=11 // pred_check
          %p284 = pneg %p232
        $region26: #{_lambda_.3} parent=11 // pred_check_branch
          %286 = sbr.rel (%p284) target = $region28
        $region27: #{_lambda_.3} parent=11 // pred_region
          _
        $region28: #{_lambda_.3} parent=11 // pred_fallthru
          _
      $region12: #{_lambda_.3} parent=5 // pred_fallthru
        _
      %p287 = scmp.lt.s32.totalorder %s17, 2
      // Predicated region
      $region29: #{_lambda_.3} parent=5 // pred_check
        %p288 = pneg %p287
      $region30: #{_lambda_.3} parent=5 // pred_check_branch
        %290 = sbr.rel (%p288) target = $region32
      $region31: #{_lambda_.3} parent=5 // pred_region
        // Predicated region
        $region33: #{_lambda_.3} parent=31 // pred_check
          %p291 = pneg %p58
        $region34: #{_lambda_.3} parent=31 // pred_check_branch
          %293 = sbr.rel (%p291) target = $region36
        $region35: #{_lambda_.3} parent=31 // pred_region
          %s294 = smul.u32 2, %s25
          %p295 = scmp.lt.s32.totalorder %s24, 1
          %s296 = scalar_select %p295, %s24, 1
          %p297 = scmp.lt.s32.totalorder %s294, 1
          %s298 = scalar_select %p297, %s294, 1
          %s299 = smul.addr %s296, 2
          %s300 = sadd.s32 %s298, %s299
          %s301 = smul.addr %s300, 4
          %s302 = scalar_lea.vmem %s0, %s301
          %s303 = smul.u32 2, %s25
        $region36: #{_lambda_.3} parent=31 // pred_fallthru
          _
        // Predicated region
        $region37: #{_lambda_.3} parent=31 // pred_check
          %p304 = pneg %p86
        $region38: #{_lambda_.3} parent=31 // pred_check_branch
          %306 = sbr.rel (%p304) target = $region40
        $region39: #{_lambda_.3} parent=31 // pred_region
          %s307 = smul.u32 2, %s26
          %p308 = scmp.lt.s32.totalorder %s24, 1
          %s309 = scalar_select %p308, %s24, 1
          %p310 = scmp.lt.s32.totalorder %s307, 1
          %s311 = scalar_select %p310, %s307, 1
          %s312 = smul.addr %s309, 2
          %s313 = sadd.s32 %s311, %s312
          %s314 = smul.addr %s313, 4
          %s315 = scalar_lea.vmem %s1, %s314
          %s316 = smul.u32 2, %s26
        $region40: #{_lambda_.3} parent=31 // pred_fallthru
          _
        // Predicated region
        $region41: #{_lambda_.3} parent=31 // pred_check
          %p317 = pneg %p114
        $region42: #{_lambda_.3} parent=31 // pred_check_branch
          %319 = sbr.rel (%p317) target = $region44
        $region43: #{_lambda_.3} parent=31 // pred_region
          %s320 = smul.u32 2, %s26
          %p321 = scmp.lt.s32.totalorder %s24, 1
          %s322 = scalar_select %p321, %s24, 1
          %p323 = scmp.lt.s32.totalorder %s320, 1
          %s324 = scalar_select %p323, %s320, 1
          %s325 = smul.addr %s322, 2
          %s326 = sadd.s32 %s324, %s325
          %s327 = smul.addr %s326, 4
          %s328 = scalar_lea.vmem %s2, %s327
          %s329 = smul.u32 2, %s26
        $region44: #{_lambda_.3} parent=31 // pred_fallthru
          _
        // Predicated region
        $region45: #{_lambda_.3} parent=31 // pred_check
          %p330 = pneg %p142
        $region46: #{_lambda_.3} parent=31 // pred_check_branch
          %332 = sbr.rel (%p330) target = $region48
        $region47: #{_lambda_.3} parent=31 // pred_region
          %p333 = scmp.lt.s32.totalorder %s24, 1
          %s334 = scalar_select %p333, %s24, 1
          %p335 = scmp.lt.s32.totalorder %s26, 0
          %s336 = scalar_select %p335, %s26, 0
          %s337 = sadd.s32 %s336, %s334
          %s338 = scalar_lea.vmem %s3, %s337
        $region48: #{_lambda_.3} parent=31 // pred_fallthru
          _
      $region32: #{_lambda_.3} parent=5 // pred_fallthru
        _
      %p339 = scmp.le.s32.totalorder 1, %s17
      %p340 = scmp.lt.s32.totalorder %s17, 3
      %p341 = pnand %p339, %p340
      %p342 = pneg %p341
      // Predicated region
      $region49: #{_lambda_.3} parent=5 // pred_check
        _
      $region50: #{_lambda_.3} parent=5 // pred_check_branch
        %344 = sbr.rel (%p341) target = $region52
      $region51: #{_lambda_.3} parent=5 // pred_region
        %s345 = ssub.s32 %s17, 1
        %s346 = smul.u32 2, %s28
        %p347 = scmp.lt.s32.totalorder %s27, 1
        %s348 = scalar_select %p347, %s27, 1
        %p349 = scmp.lt.s32.totalorder %s346, 1
        %s350 = scalar_select %p349, %s346, 1
        %s351 = smul.addr %s348, 2
        %s352 = sadd.s32 %s350, %s351
        %s353 = smul.addr %s352, 4
        %s354 = scalar_lea.vmem %s0, %s353
        %p355 = pneg %p64
        %p356 = pneg %p61
        %s357 = smul.u32 2, %s29
        %p358 = scmp.lt.s32.totalorder %s27, 1
        %s359 = scalar_select %p358, %s27, 1
        %p360 = scmp.lt.s32.totalorder %s357, 1
        %s361 = scalar_select %p360, %s357, 1
        %s362 = smul.addr %s359, 2
        %s363 = sadd.s32 %s361, %s362
        %s364 = smul.addr %s363, 4
        %s365 = scalar_lea.vmem %s1, %s364
        %p366 = pneg %p92
        %p367 = pneg %p89
        %s368 = smul.u32 2, %s29
        %p369 = scmp.lt.s32.totalorder %s27, 1
        %s370 = scalar_select %p369, %s27, 1
        %p371 = scmp.lt.s32.totalorder %s368, 1
        %s372 = scalar_select %p371, %s368, 1
        %s373 = smul.addr %s370, 2
        %s374 = sadd.s32 %s372, %s373
        %s375 = smul.addr %s374, 4
        %s376 = scalar_lea.vmem %s2, %s375
        %p377 = pneg %p120
        %p378 = pneg %p117
        %p379 = scmp.lt.s32.totalorder %s27, 1
        %s380 = scalar_select %p379, %s27, 1
        %p381 = scmp.lt.s32.totalorder %s29, 0
        %s382 = scalar_select %p381, %s29, 0
        %s383 = sadd.s32 %s382, %s380
        %s384 = scalar_lea.vmem %s3, %s383
        %p385 = pneg %p148
        %p386 = pneg %p145
        %p387 = pneg %p169
        %p388 = pneg %p166
        %p389 = pneg %p190
        %p390 = pneg %p187
        %p391 = pneg %p211
        %p392 = pneg %p208
        %p393 = pneg %p232
        %p394 = pneg %p229
        %p395 = pneg %p260
        %p396 = pneg %p257
        %s397 = sand.u32 %s247, 1
        %s398 = scalar_lea.sflag [#allocation6], %s397
        %s399 = sand.u32 %s247, 1
        %s400 = smul.addr %s399, 16
        %s401 = scalar_lea.vmem [#allocation5], %s400
        %s402 = smul.u32 2, %s28
        %p403 = scmp.lt.s32.totalorder %s27, 1
        %s404 = scalar_select %p403, %s27, 1
        %p405 = scmp.lt.s32.totalorder %s402, 1
        %s406 = scalar_select %p405, %s402, 1
        %s407 = smul.addr %s404, 2
        %s408 = sadd.s32 %s406, %s407
        %s409 = smul.addr %s408, 4
        %s410 = scalar_lea.vmem %s0, %s409
        %s411 = smul.u32 2, %s28
        %s412 = smul.u32 2, %s29
        %p413 = scmp.lt.s32.totalorder %s27, 1
        %s414 = scalar_select %p413, %s27, 1
        %p415 = scmp.lt.s32.totalorder %s412, 1
        %s416 = scalar_select %p415, %s412, 1
        %s417 = smul.addr %s414, 2
        %s418 = sadd.s32 %s416, %s417
        %s419 = smul.addr %s418, 4
        %s420 = scalar_lea.vmem %s1, %s419
        %s421 = smul.u32 2, %s29
        %s422 = smul.u32 2, %s29
        %p423 = scmp.lt.s32.totalorder %s27, 1
        %s424 = scalar_select %p423, %s27, 1
        %p425 = scmp.lt.s32.totalorder %s422, 1
        %s426 = scalar_select %p425, %s422, 1
        %s427 = smul.addr %s424, 2
        %s428 = sadd.s32 %s426, %s427
        %s429 = smul.addr %s428, 4
        %s430 = scalar_lea.vmem %s2, %s429
        %s431 = smul.u32 2, %s29
        %p432 = scmp.lt.s32.totalorder %s27, 1
        %s433 = scalar_select %p432, %s27, 1
        %p434 = scmp.lt.s32.totalorder %s29, 0
        %s435 = scalar_select %p434, %s29, 0
        %s436 = sadd.s32 %s435, %s433
        %s437 = scalar_lea.vmem %s3, %s436
        %s438 = smul.u32 2, %s28
        %p440 = scmp.eq.s32.totalorder %s29, 0
        // Predicated region
        $region53: #{_lambda_.3} parent=51 // pred_check
          %p441 = pneg %p440
        $region54: #{_lambda_.3} parent=51 // pred_check_branch
          %443 = sbr.rel (%p441) target = $region56
        $region55: #{_lambda_.3} parent=51 // pred_region
          %v444 = vld [vmem:[%s410] sm:$0xf]
          %v445 = vld [vmem:[%s410 + $0x4] sm:$0xf]
          %v446 = vld [vmem:[%s4] sm:$0xf]
          %v447 = vld [vmem:[%s4 + $0x4] sm:$0xf]
          %v448 = vld [vmem:[%s4 + $0x8] sm:$0xf]
          %v449 = vld [vmem:[%s4 + $0xc] sm:$0xf]
          %v450 = vld [vmem:[%s4 + $0x10] sm:$0xf]
          %v451 = vld [vmem:[%s4 + $0x14] sm:$0xf]
          %v452 = vld [vmem:[%s4 + $0x18] sm:$0xf]
          %v453 = vld [vmem:[%s4 + $0x1c] sm:$0xf]
          %v454 = vld [vmem:[%s4 + $0x20] sm:$0xf]
          %v455 = vld [vmem:[%s4 + $0x24] sm:$0xf]
          %v456 = vld [vmem:[%s4 + $0x28] sm:$0xf]
          %v457 = vld [vmem:[%s4 + $0x2c] sm:$0xf]
          %v458 = vld [vmem:[%s4 + $0x30] sm:$0xf]
          %v459 = vld [vmem:[%s4 + $0x34] sm:$0xf]
          %v460 = vld [vmem:[%s4 + $0x38] sm:$0xf]
          %v461 = vld [vmem:[%s4 + $0x3c] sm:$0xf]
          %v464 = vunpack.c.l.b16 %v444
          %v465 = vunpack.c.l.b16 %v445
          %v466 = vpack.c.b16 %v465, %v464
          %v484 = vunpack.c.l.b16 %v446
          %v485 = vunpack.c.l.b16 %v447
          %v486 = vunpack.c.l.b16 %v448
          %v487 = vunpack.c.l.b16 %v449
          %v488 = vunpack.c.l.b16 %v450
          %v489 = vunpack.c.l.b16 %v451
          %v490 = vunpack.c.l.b16 %v452
          %v491 = vunpack.c.l.b16 %v453
          %v492 = vunpack.c.l.b16 %v454
          %v493 = vunpack.c.l.b16 %v455
          %v494 = vunpack.c.l.b16 %v456
          %v495 = vunpack.c.l.b16 %v457
          %v496 = vunpack.c.l.b16 %v458
          %v497 = vunpack.c.l.b16 %v459
          %v498 = vunpack.c.l.b16 %v460
          %v499 = vunpack.c.l.b16 %v461
          %v500 = vpack.c.b16 %v485, %v484
          %v501 = vpack.c.b16 %v487, %v486
          %v502 = vpack.c.b16 %v489, %v488
          %v503 = vpack.c.b16 %v491, %v490
          %v504 = vpack.c.b16 %v493, %v492
          %v505 = vpack.c.b16 %v495, %v494
          %v506 = vpack.c.b16 %v497, %v496
          %v507 = vpack.c.b16 %v499, %v498
          %516 = vmatprep.subr.bf16.mxu0 0
          %517 = vmatpush1.bf16.msra.mxu0 %v500
          %518 = vmatprep.subr.bf16.mxu0 0
          %519 = vmatpush1.bf16.msra.mxu0 %v501
          %520 = vmatprep.subr.bf16.mxu0 0
          %521 = vmatpush1.bf16.msra.mxu0 %v502
          %522 = vmatprep.subr.bf16.mxu0 0
          %523 = vmatpush1.bf16.msra.mxu0 %v503
          %524 = vmatprep.subr.bf16.mxu0 0
          %525 = vmatpush1.bf16.msra.mxu0 %v504
          %526 = vmatprep.subr.bf16.mxu0 0
          %527 = vmatpush1.bf16.msra.mxu0 %v505
          %528 = vmatprep.subr.bf16.mxu0 0
          %529 = vmatpush1.bf16.msra.mxu0 %v506
          %530 = vmatprep.subr.bf16.mxu0 0
          %531 = vmatpush1.bf16.msra.mxu0 %v507
          %532 = vmatprep.subr.bf16.mxu0 0
          %533 = vmatpush1.bf16.msra.mxu0 0
          %534 = vmatprep.subr.bf16.mxu0 0
          %535 = vmatpush1.bf16.msra.mxu0 0
          %536 = vmatprep.subr.bf16.mxu0 0
          %537 = vmatpush1.bf16.msra.mxu0 0
          %538 = vmatprep.subr.bf16.mxu0 0
          %539 = vmatpush1.bf16.msra.mxu0 0
          %540 = vmatprep.subr.bf16.mxu0 0
          %541 = vmatpush1.bf16.msra.mxu0 0
          %542 = vmatprep.subr.bf16.mxu0 0
          %543 = vmatpush1.bf16.msra.mxu0 0
          %544 = vmatprep.subr.bf16.mxu0 0
          %545 = vmatpush1.bf16.msra.mxu0 0
          %546 = vmatprep.subr.bf16.mxu0 0
          %547 = vmatpush1.bf16.msra.mxu0 0
          %548 = vmatprep.mubr.bf16.mxu0 0
          %549 = vmatmul.mubr.bf16.gmra.mrb[0].mxu0 %v466
          %v550 = vpop.f32.mrb[0].mxu0
          %v551 = vadd.f32 0.0, %v550
          %v552 = vpop.f32.mrb[0].mxu0
          %v553 = vpop.f32.mrb[0].mxu0
          %v554 = vadd.f32 0.0, %v553
          %v555 = vpop.f32.mrb[0].mxu0
          %556 = vdwg.mxu0
          %vm557 = vcmask 7168
          %558 = vst.msk [vmem:[#allocation2] sm:$0xff] %vm557, %v551
          %559 = vst.msk [vmem:[#allocation2 + $0x8] sm:$0xff] %vm557, %v554
          %560 = vst.msk [vmem:[#allocation3] sm:$0xff] %vm557, 1.0
          %561 = vst.msk [vmem:[#allocation3 + $0x8] sm:$0xff] %vm557, 1.0
          %564 = vrot.lane.b32.xlu0 %v551, 127
          %v565 = vpop.permute.xlu0 %564
          %566 = vrot.lane.b32.xlu0 %v554, 127
          %v567 = vpop.permute.xlu0 %566
          %s570 = scalar_lea.vmem [#allocation2], 16
          %571 = vst.msk [vmem:[%s570] sm:$0xff] %vm557, %v565
          %572 = vst.msk [vmem:[%s570 + $0x8] sm:$0xff] %vm557, %v567
          %s573 = scalar_lea.vmem [#allocation3], 16
          %574 = vst.msk [vmem:[%s573] sm:$0xff] %vm557, 1.0
          %575 = vst.msk [vmem:[%s573 + $0x8] sm:$0xff] %vm557, 1.0
          %576 = vrot.lane.b32.xlu0 %v551, 126
          %v577 = vpop.permute.xlu0 %576
          %578 = vrot.lane.b32.xlu0 %v554, 126
          %v579 = vpop.permute.xlu0 %578
          %s582 = scalar_lea.vmem [#allocation2], 32
          %583 = vst.msk [vmem:[%s582] sm:$0xff] %vm557, %v577
          %584 = vst.msk [vmem:[%s582 + $0x8] sm:$0xff] %vm557, %v579
          %s585 = scalar_lea.vmem [#allocation3], 32
          %586 = vst.msk [vmem:[%s585] sm:$0xff] %vm557, 1.0
          %587 = vst.msk [vmem:[%s585 + $0x8] sm:$0xff] %vm557, 1.0
          %588 = vrot.lane.b32.xlu0 %v551, 125
          %v589 = vpop.permute.xlu0 %588
          %590 = vrot.lane.b32.xlu0 %v554, 125
          %v591 = vpop.permute.xlu0 %590
          %s594 = scalar_lea.vmem [#allocation2], 48
          %595 = vst.msk [vmem:[%s594] sm:$0xff] %vm557, %v589
          %596 = vst.msk [vmem:[%s594 + $0x8] sm:$0xff] %vm557, %v591
          %s597 = scalar_lea.vmem [#allocation3], 48
          %598 = vst.msk [vmem:[%s597] sm:$0xff] %vm557, 1.0
          %599 = vst.msk [vmem:[%s597 + $0x8] sm:$0xff] %vm557, 1.0
          %v600 = vld [vmem:[%s5] sm:$0x1]
          %v602 = vlaneseq
          %v603 = vshrl.u32 %v602, 7
          %v604 = vsub.s32 0, %v603
          %v605 = vrot.slane %v600, %v604
          %607 = vst [vmem:[#allocation4] sm:$0xff] %v605
          %608 = vst [vmem:[#allocation4 + $0x8] sm:$0xff] %v605
        $region56: #{_lambda_.3} parent=51 // pred_fallthru
          _
        %v609 = vld [vmem:[%s437] sm:$0x1]
        %vm610 = vcmp.ne.s32.totalorder %v609, 0
        %v611 = vld [vmem:[%s410] sm:$0xf]
        %v612 = vld [vmem:[%s410 + $0x4] sm:$0xf]
        %v613 = vld [vmem:[%s420] sm:$0xf]
        %v614 = vld [vmem:[%s420 + $0x4] sm:$0xf]
        %v615 = vld [vmem:[%s430] sm:$0xf]
        %v616 = vld [vmem:[%s430 + $0x4] sm:$0xf]
        %v619 = vunpack.c.l.b16 %v611
        %v620 = vunpack.c.l.b16 %v612
        %v621 = vpack.c.b16 %v620, %v619
        %v624 = vunpack.c.l.b16 %v613
        %v625 = vunpack.c.l.b16 %v614
        %v626 = vpack.c.b16 %v625, %v624
        %vm627 = vcmask 261120
        %v629 = vsel %vm627, %v621, 0
        %v632 = vsel %vm627, %v626, 0
        %634 = vmatprep.subr.bf16.mxu0 0
        %635 = vmatpush1.bf16.xpose.msra.mxu0 %v632
        %636 = vmatprep.subr.bf16.mxu0 0
        %637 = vmatpush1.bf16.xpose.msra.mxu0 0
        %638 = vmatprep.subr.bf16.mxu0 0
        %639 = vmatpush1.bf16.xpose.msra.mxu0 0
        %640 = vmatprep.subr.bf16.mxu0 0
        %641 = vmatpush1.bf16.xpose.msra.mxu0 0
        %642 = vmatprep.subr.bf16.mxu0 0
        %643 = vmatpush1.bf16.xpose.msra.mxu0 0
        %644 = vmatprep.subr.bf16.mxu0 0
        %645 = vmatpush1.bf16.xpose.msra.mxu0 0
        %646 = vmatprep.subr.bf16.mxu0 0
        %647 = vmatpush1.bf16.xpose.msra.mxu0 0
        %648 = vmatprep.subr.bf16.mxu0 0
        %649 = vmatpush1.bf16.xpose.msra.mxu0 0
        %650 = vmatprep.subr.bf16.mxu0 0
        %651 = vmatpush1.bf16.xpose.msra.mxu0 0
        %652 = vmatprep.subr.bf16.mxu0 0
        %653 = vmatpush1.bf16.xpose.msra.mxu0 0
        %654 = vmatprep.subr.bf16.mxu0 0
        %655 = vmatpush1.bf16.xpose.msra.mxu0 0
        %656 = vmatprep.subr.bf16.mxu0 0
        %657 = vmatpush1.bf16.xpose.msra.mxu0 0
        %658 = vmatprep.subr.bf16.mxu0 0
        %659 = vmatpush1.bf16.xpose.msra.mxu0 0
        %660 = vmatprep.subr.bf16.mxu0 0
        %661 = vmatpush1.bf16.xpose.msra.mxu0 0
        %662 = vmatprep.subr.bf16.mxu0 0
        %663 = vmatpush1.bf16.xpose.msra.mxu0 0
        %664 = vmatprep.subr.bf16.mxu0 0
        %665 = vmatpush1.bf16.xpose.msra.mxu0 0
        %666 = vmatprep.mubr.bf16.mxu0 0
        %667 = vmatmul.mubr.bf16.gmra.mrb[0].mxu0 %v629
        %v668 = vpop.f32.mrb[0].mxu0
        %v669 = vadd.f32 0.0, %v668
        %v670 = vpop.f32.mrb[0].mxu0
        %v671 = vpop.f32.mrb[0].mxu0
        %v672 = vadd.f32 0.0, %v671
        %v673 = vpop.f32.mrb[0].mxu0
        %674 = vdwg.mxu0
        %v675 = vsel %vm610, 1, 0
        %v676 = vlaneseq
        %v677 = vshrl.u32 %v676, 7
        %v678 = vsub.s32 0, %v677
        %v679 = vrot.slane %v675, %v678
        %vm680 = vcmp.eq.s32.totalorder %v679, 1
        %v681 = vsel %vm680, %v669, -3.4028235e+38
        %v682 = vsel %vm680, %v672, -3.4028235e+38
        %v683 = vld [vmem:[#allocation2] sm:$0xff]
        %v684 = vld [vmem:[#allocation2 + $0x8] sm:$0xff]
        %vm685 = vcmask 130048
        %v686 = vsel %vm685, %v681, -inf
        %687 = vmax.xlane.f32.xlu0 %v686
        %v688 = vpop.xlane.xlu0 %687
        %v689 = vsel %vm685, %v682, -inf
        %690 = vmax.xlane.f32.xlu0 %v689
        %v691 = vpop.xlane.xlu0 %690
        %v692 = vmax.f32 %v683, %v688
        %v693 = vmax.f32 %v684, %v691
        %v694 = vsub.f32 %v683, %v692
        %v695 = vsub.f32 %v684, %v693
        %v696 = vmul.f32 %v694, 1.442695
        %v697 = vpow.pop %v696
        %v698 = vmul.f32 %v695, 1.442695
        %v699 = vpow.pop %v698
        %701 = vset.pattern.permute.xlu0 0
        %702 = vperm.xlu0 %701, %v692
        %v703 = vpop.permute.xlu0 %702
        %706 = vset.pattern.permute.xlu0 0
        %707 = vperm.xlu0 %706, %v693
        %v708 = vpop.permute.xlu0 %707
        %v710 = vsub.f32 %v681, %v703
        %v711 = vsub.f32 %v682, %v708
        %v712 = vmul.f32 %v710, 1.442695
        %v713 = vpow.pop %v712
        %v714 = vmul.f32 %v711, 1.442695
        %v715 = vpow.pop %v714
        %v716 = vld [vmem:[#allocation3] sm:$0xff]
        %v717 = vld [vmem:[#allocation3 + $0x8] sm:$0xff]
        %v718 = vmul.f32 %v697, %v716
        %v719 = vmul.f32 %v699, %v717
        %v720 = vsel %vm685, %v713, 0.0
        %721 = vadd.xlane.f32.xlu0 %v720
        %v722 = vpop.xlane.xlu0 %721
        %v723 = vsel %vm685, %v715, 0.0
        %724 = vadd.xlane.f32.xlu0 %v723
        %v725 = vpop.xlane.xlu0 %724
        %v726 = vadd.f32 %v718, %v722
        %v727 = vadd.f32 %v719, %v725
        %vm728 = vcmask 7168
        %729 = vst.msk [vmem:[#allocation3] sm:$0xff] %vm728, %v726
        %730 = vst.msk [vmem:[#allocation3 + $0x8] sm:$0xff] %vm728, %v727
        %v731 = vpack.c.bf16 %v715, %v713
        %v734 = vunpack.c.l.b16 %v615
        %v735 = vunpack.c.l.b16 %v616
        %v736 = vpack.c.b16 %v735, %v734
        %v739 = vsel %vm685, %v731, 0
        %741 = vmatprep.subr.bf16.mxu0 0
        %742 = vmatpush1.bf16.msra.mxu0 %v736
        %743 = vmatprep.subr.bf16.mxu0 0
        %744 = vmatpush1.bf16.msra.mxu0 0
        %745 = vmatprep.subr.bf16.mxu0 0
        %746 = vmatpush1.bf16.msra.mxu0 0
        %747 = vmatprep.subr.bf16.mxu0 0
        %748 = vmatpush1.bf16.msra.mxu0 0
        %749 = vmatprep.subr.bf16.mxu0 0
        %750 = vmatpush1.bf16.msra.mxu0 0
        %751 = vmatprep.subr.bf16.mxu0 0
        %752 = vmatpush1.bf16.msra.mxu0 0
        %753 = vmatprep.subr.bf16.mxu0 0
        %754 = vmatpush1.bf16.msra.mxu0 0
        %755 = vmatprep.subr.bf16.mxu0 0
        %756 = vmatpush1.bf16.msra.mxu0 0
        %757 = vmatprep.subr.bf16.mxu0 0
        %758 = vmatpush1.bf16.msra.mxu0 0
        %759 = vmatprep.subr.bf16.mxu0 0
        %760 = vmatpush1.bf16.msra.mxu0 0
        %761 = vmatprep.subr.bf16.mxu0 0
        %762 = vmatpush1.bf16.msra.mxu0 0
        %763 = vmatprep.subr.bf16.mxu0 0
        %764 = vmatpush1.bf16.msra.mxu0 0
        %765 = vmatprep.subr.bf16.mxu0 0
        %766 = vmatpush1.bf16.msra.mxu0 0
        %767 = vmatprep.subr.bf16.mxu0 0
        %768 = vmatpush1.bf16.msra.mxu0 0
        %769 = vmatprep.subr.bf16.mxu0 0
        %770 = vmatpush1.bf16.msra.mxu0 0
        %771 = vmatprep.subr.bf16.mxu0 0
        %772 = vmatpush1.bf16.msra.mxu0 0
        %773 = vmatprep.mubr.bf16.mxu0 0
        %774 = vmatmul.mubr.bf16.gmra.mrb[0].mxu0 %v739
        %v775 = vpop.f32.mrb[0].mxu0
        %v776 = vadd.f32 0.0, %v775
        %v777 = vpop.f32.mrb[0].mxu0
        %v778 = vpop.f32.mrb[0].mxu0
        %v779 = vadd.f32 0.0, %v778
        %v780 = vpop.f32.mrb[0].mxu0
        %781 = vdwg.mxu0
        %v782 = vld [vmem:[#allocation4] sm:$0xff]
        %v783 = vld [vmem:[#allocation4 + $0x8] sm:$0xff]
        %785 = vset.pattern.permute.xlu0 0
        %786 = vperm.xlu0 %785, %v697
        %v787 = vpop.permute.xlu0 %786
        %790 = vset.pattern.permute.xlu0 0
        %791 = vperm.xlu0 %790, %v699
        %v792 = vpop.permute.xlu0 %791
        %v794 = vmul.f32 %v787, %v782
        %v795 = vmul.f32 %v792, %v783
        %v796 = vadd.f32 %v794, %v776
        %v797 = vadd.f32 %v795, %v779
        %798 = vst.msk [vmem:[#allocation4] sm:$0xff] %vm627, %v796
        %799 = vst.msk [vmem:[#allocation4 + $0x8] sm:$0xff] %vm627, %v797
        %800 = vst.msk [vmem:[#allocation2] sm:$0xff] %vm728, %v692
        %801 = vst.msk [vmem:[#allocation2 + $0x8] sm:$0xff] %vm728, %v693
        %v802 = vld [vmem:[%s410] sm:$0xf]
        %v803 = vld [vmem:[%s410 + $0x4] sm:$0xf]
        %v804 = vld [vmem:[%s420] sm:$0xf]
        %v805 = vld [vmem:[%s420 + $0x4] sm:$0xf]
        %v806 = vld [vmem:[%s430] sm:$0xf]
        %v807 = vld [vmem:[%s430 + $0x4] sm:$0xf]
        %v810 = vunpack.c.l.b16 %v802
        %v811 = vunpack.c.l.b16 %v803
        %v812 = vpack.c.b16 %v811, %v810
        %813 = vrot.lane.b32.xlu0 %v812, 96
        %v814 = vpop.permute.xlu0 %813
        %v817 = vunpack.c.l.b16 %v804
        %v818 = vunpack.c.l.b16 %v805
        %v819 = vpack.c.b16 %v818, %v817
        %820 = vrot.lane.b32.xlu0 %v819, 96
        %v821 = vpop.permute.xlu0 %820
        %v823 = vsel %vm627, %v814, 0
        %v826 = vsel %vm627, %v821, 0
        %828 = vmatprep.subr.bf16.mxu0 0
        %829 = vmatpush1.bf16.xpose.msra.mxu0 %v826
        %830 = vmatprep.subr.bf16.mxu0 0
        %831 = vmatpush1.bf16.xpose.msra.mxu0 0
        %832 = vmatprep.subr.bf16.mxu0 0
        %833 = vmatpush1.bf16.xpose.msra.mxu0 0
        %834 = vmatprep.subr.bf16.mxu0 0
        %835 = vmatpush1.bf16.xpose.msra.mxu0 0
        %836 = vmatprep.subr.bf16.mxu0 0
        %837 = vmatpush1.bf16.xpose.msra.mxu0 0
        %838 = vmatprep.subr.bf16.mxu0 0
        %839 = vmatpush1.bf16.xpose.msra.mxu0 0
        %840 = vmatprep.subr.bf16.mxu0 0
        %841 = vmatpush1.bf16.xpose.msra.mxu0 0
        %842 = vmatprep.subr.bf16.mxu0 0
        %843 = vmatpush1.bf16.xpose.msra.mxu0 0
        %844 = vmatprep.subr.bf16.mxu0 0
        %845 = vmatpush1.bf16.xpose.msra.mxu0 0
        %846 = vmatprep.subr.bf16.mxu0 0
        %847 = vmatpush1.bf16.xpose.msra.mxu0 0
        %848 = vmatprep.subr.bf16.mxu0 0
        %849 = vmatpush1.bf16.xpose.msra.mxu0 0
        %850 = vmatprep.subr.bf16.mxu0 0
        %851 = vmatpush1.bf16.xpose.msra.mxu0 0
        %852 = vmatprep.subr.bf16.mxu0 0
        %853 = vmatpush1.bf16.xpose.msra.mxu0 0
        %854 = vmatprep.subr.bf16.mxu0 0
        %855 = vmatpush1.bf16.xpose.msra.mxu0 0
        %856 = vmatprep.subr.bf16.mxu0 0
        %857 = vmatpush1.bf16.xpose.msra.mxu0 0
        %858 = vmatprep.subr.bf16.mxu0 0
        %859 = vmatpush1.bf16.xpose.msra.mxu0 0
        %860 = vmatprep.mubr.bf16.mxu0 0
        %861 = vmatmul.mubr.bf16.gmra.mrb[0].mxu0 %v823
        %v862 = vpop.f32.mrb[0].mxu0
        %v863 = vadd.f32 0.0, %v862
        %v864 = vpop.f32.mrb[0].mxu0
        %v865 = vpop.f32.mrb[0].mxu0
        %v866 = vadd.f32 0.0, %v865
        %v867 = vpop.f32.mrb[0].mxu0
        %868 = vdwg.mxu0
        %v869 = vsel %vm680, %v863, -3.4028235e+38
        %v870 = vsel %vm680, %v866, -3.4028235e+38
        %s871 = scalar_lea.vmem [#allocation2], 16
        %v872 = vld [vmem:[%s871] sm:$0xff]
        %v873 = vld [vmem:[%s871 + $0x8] sm:$0xff]
        %v874 = vsel %vm685, %v869, -inf
        %875 = vmax.xlane.f32.xlu0 %v874
        %v876 = vpop.xlane.xlu0 %875
        %v877 = vsel %vm685, %v870, -inf
        %878 = vmax.xlane.f32.xlu0 %v877
        %v879 = vpop.xlane.xlu0 %878
        %v880 = vmax.f32 %v872, %v876
        %v881 = vmax.f32 %v873, %v879
        %v882 = vsub.f32 %v872, %v880
        %v883 = vsub.f32 %v873, %v881
        %v884 = vmul.f32 %v882, 1.442695
        %v885 = vpow.pop %v884
        %v886 = vmul.f32 %v883, 1.442695
        %v887 = vpow.pop %v886
        %889 = vset.pattern.permute.xlu0 0
        %890 = vperm.xlu0 %889, %v880
        %v891 = vpop.permute.xlu0 %890
        %894 = vset.pattern.permute.xlu0 0
        %895 = vperm.xlu0 %894, %v881
        %v896 = vpop.permute.xlu0 %895
        %v898 = vsub.f32 %v869, %v891
        %v899 = vsub.f32 %v870, %v896
        %v900 = vmul.f32 %v898, 1.442695
        %v901 = vpow.pop %v900
        %v902 = vmul.f32 %v899, 1.442695
        %v903 = vpow.pop %v902
        %s904 = scalar_lea.vmem [#allocation3], 16
        %v905 = vld [vmem:[%s904] sm:$0xff]
        %v906 = vld [vmem:[%s904 + $0x8] sm:$0xff]
        %v907 = vmul.f32 %v885, %v905
        %v908 = vmul.f32 %v887, %v906
        %v909 = vsel %vm685, %v901, 0.0
        %910 = vadd.xlane.f32.xlu0 %v909
        %v911 = vpop.xlane.xlu0 %910
        %v912 = vsel %vm685, %v903, 0.0
        %913 = vadd.xlane.f32.xlu0 %v912
        %v914 = vpop.xlane.xlu0 %913
        %v915 = vadd.f32 %v907, %v911
        %v916 = vadd.f32 %v908, %v914
        %917 = vst.msk [vmem:[%s904] sm:$0xff] %vm728, %v915
        %918 = vst.msk [vmem:[%s904 + $0x8] sm:$0xff] %vm728, %v916
        %v919 = vpack.c.bf16 %v903, %v901
        %v922 = vunpack.c.l.b16 %v806
        %v923 = vunpack.c.l.b16 %v807
        %v924 = vpack.c.b16 %v923, %v922
        %925 = vrot.lane.b32.xlu0 %v924, 96
        %v926 = vpop.permute.xlu0 %925
        %v929 = vsel %vm685, %v919, 0
        %931 = vmatprep.subr.bf16.mxu0 0
        %932 = vmatpush1.bf16.msra.mxu0 %v926
        %933 = vmatprep.subr.bf16.mxu0 0
        %934 = vmatpush1.bf16.msra.mxu0 0
        %935 = vmatprep.subr.bf16.mxu0 0
        %936 = vmatpush1.bf16.msra.mxu0 0
        %937 = vmatprep.subr.bf16.mxu0 0
        %938 = vmatpush1.bf16.msra.mxu0 0
        %939 = vmatprep.subr.bf16.mxu0 0
        %940 = vmatpush1.bf16.msra.mxu0 0
        %941 = vmatprep.subr.bf16.mxu0 0
        %942 = vmatpush1.bf16.msra.mxu0 0
        %943 = vmatprep.subr.bf16.mxu0 0
        %944 = vmatpush1.bf16.msra.mxu0 0
        %945 = vmatprep.subr.bf16.mxu0 0
        %946 = vmatpush1.bf16.msra.mxu0 0
        %947 = vmatprep.subr.bf16.mxu0 0
        %948 = vmatpush1.bf16.msra.mxu0 0
        %949 = vmatprep.subr.bf16.mxu0 0
        %950 = vmatpush1.bf16.msra.mxu0 0
        %951 = vmatprep.subr.bf16.mxu0 0
        %952 = vmatpush1.bf16.msra.mxu0 0
        %953 = vmatprep.subr.bf16.mxu0 0
        %954 = vmatpush1.bf16.msra.mxu0 0
        %955 = vmatprep.subr.bf16.mxu0 0
        %956 = vmatpush1.bf16.msra.mxu0 0
        %957 = vmatprep.subr.bf16.mxu0 0
        %958 = vmatpush1.bf16.msra.mxu0 0
        %959 = vmatprep.subr.bf16.mxu0 0
        %960 = vmatpush1.bf16.msra.mxu0 0
        %961 = vmatprep.subr.bf16.mxu0 0
        %962 = vmatpush1.bf16.msra.mxu0 0
        %963 = vmatprep.mubr.bf16.mxu0 0
        %964 = vmatmul.mubr.bf16.gmra.mrb[0].mxu0 %v929
        %v965 = vpop.f32.mrb[0].mxu0
        %v966 = vadd.f32 0.0, %v965
        %v967 = vpop.f32.mrb[0].mxu0
        %v968 = vpop.f32.mrb[0].mxu0
        %v969 = vadd.f32 0.0, %v968
        %v970 = vpop.f32.mrb[0].mxu0
        %971 = vdwg.mxu0
        %v972 = vld [vmem:[#allocation4] sm:$0xff]
        %v973 = vld [vmem:[#allocation4 + $0x8] sm:$0xff]
        %975 = vset.pattern.permute.xlu0 0
        %976 = vperm.xlu0 %975, %v885
        %v977 = vpop.permute.xlu0 %976
        %980 = vset.pattern.permute.xlu0 0
        %981 = vperm.xlu0 %980, %v887
        %v982 = vpop.permute.xlu0 %981
        %v984 = vmul.f32 %v977, %v972
        %v985 = vmul.f32 %v982, %v973
        %988 = vrot.lane.b32.xlu0 %v966, 32
        %v989 = vpop.permute.xlu0 %988
        %990 = vrot.lane.b32.xlu0 %v969, 32
        %v991 = vpop.permute.xlu0 %990
        %v994 = vadd.f32 %v984, %v989
        %v995 = vadd.f32 %v985, %v991
        %vm996 = vcmask 523520
        %997 = vst.msk [vmem:[#allocation4] sm:$0xff] %vm996, %v994
        %998 = vst.msk [vmem:[#allocation4 + $0x8] sm:$0xff] %vm996, %v995
        %999 = vst.msk [vmem:[%s871] sm:$0xff] %vm728, %v880
        %1000 = vst.msk [vmem:[%s871 + $0x8] sm:$0xff] %vm728, %v881
        %v1001 = vld [vmem:[%s410] sm:$0xf]
        %v1002 = vld [vmem:[%s410 + $0x4] sm:$0xf]
        %v1003 = vld [vmem:[%s420] sm:$0xf]
        %v1004 = vld [vmem:[%s420 + $0x4] sm:$0xf]
        %v1005 = vld [vmem:[%s430] sm:$0xf]
        %v1006 = vld [vmem:[%s430 + $0x4] sm:$0xf]
        %v1009 = vunpack.c.l.b16 %v1001
        %v1010 = vunpack.c.l.b16 %v1002
        %v1011 = vpack.c.b16 %v1010, %v1009
        %1012 = vrot.lane.b32.xlu0 %v1011, 64
        %v1013 = vpop.permute.xlu0 %1012
        %v1016 = vunpack.c.l.b16 %v1003
        %v1017 = vunpack.c.l.b16 %v1004
        %v1018 = vpack.c.b16 %v1017, %v1016
        %1019 = vrot.lane.b32.xlu0 %v1018, 64
        %v1020 = vpop.permute.xlu0 %1019
        %v1022 = vsel %vm627, %v1013, 0
        %v1025 = vsel %vm627, %v1020, 0
        %1027 = vmatprep.subr.bf16.mxu0 0
        %1028 = vmatpush1.bf16.xpose.msra.mxu0 %v1025
        %1029 = vmatprep.subr.bf16.mxu0 0
        %1030 = vmatpush1.bf16.xpose.msra.mxu0 0
        %1031 = vmatprep.subr.bf16.mxu0 0
        %1032 = vmatpush1.bf16.xpose.msra.mxu0 0
        %1033 = vmatprep.subr.bf16.mxu0 0
        %1034 = vmatpush1.bf16.xpose.msra.mxu0 0
        %1035 = vmatprep.subr.bf16.mxu0 0
        %1036 = vmatpush1.bf16.xpose.msra.mxu0 0
        %1037 = vmatprep.subr.bf16.mxu0 0
        %1038 = vmatpush1.bf16.xpose.msra.mxu0 0
        %1039 = vmatprep.subr.bf16.mxu0 0
        %1040 = vmatpush1.bf16.xpose.msra.mxu0 0
        %1041 = vmatprep.subr.bf16.mxu0 0
        %1042 = vmatpush1.bf16.xpose.msra.mxu0 0
        %1043 = vmatprep.subr.bf16.mxu0 0
        %1044 = vmatpush1.bf16.xpose.msra.mxu0 0
        %1045 = vmatprep.subr.bf16.mxu0 0
        %1046 = vmatpush1.bf16.xpose.msra.mxu0 0
        %1047 = vmatprep.subr.bf16.mxu0 0
        %1048 = vmatpush1.bf16.xpose.msra.mxu0 0
        %1049 = vmatprep.subr.bf16.mxu0 0
        %1050 = vmatpush1.bf16.xpose.msra.mxu0 0
        %1051 = vmatprep.subr.bf16.mxu0 0
        %1052 = vmatpush1.bf16.xpose.msra.mxu0 0
        %1053 = vmatprep.subr.bf16.mxu0 0
        %1054 = vmatpush1.bf16.xpose.msra.mxu0 0
        %1055 = vmatprep.subr.bf16.mxu0 0
        %1056 = vmatpush1.bf16.xpose.msra.mxu0 0
        %1057 = vmatprep.subr.bf16.mxu0 0
        %1058 = vmatpush1.bf16.xpose.msra.mxu0 0
        %1059 = vmatprep.mubr.bf16.mxu0 0
        %1060 = vmatmul.mubr.bf16.gmra.mrb[0].mxu0 %v1022
        %v1061 = vpop.f32.mrb[0].mxu0
        %v1062 = vadd.f32 0.0, %v1061
        %v1063 = vpop.f32.mrb[0].mxu0
        %v1064 = vpop.f32.mrb[0].mxu0
        %v1065 = vadd.f32 0.0, %v1064
        %v1066 = vpop.f32.mrb[0].mxu0
        %1067 = vdwg.mxu0
        %v1068 = vsel %vm680, %v1062, -3.4028235e+38
        %v1069 = vsel %vm680, %v1065, -3.4028235e+38
        %s1070 = scalar_lea.vmem [#allocation2], 32
        %v1071 = vld [vmem:[%s1070] sm:$0xff]
        %v1072 = vld [vmem:[%s1070 + $0x8] sm:$0xff]
        %v1073 = vsel %vm685, %v1068, -inf
        %1074 = vmax.xlane.f32.xlu0 %v1073
        %v1075 = vpop.xlane.xlu0 %1074
        %v1076 = vsel %vm685, %v1069, -inf
        %1077 = vmax.xlane.f32.xlu0 %v1076
        %v1078 = vpop.xlane.xlu0 %1077
        %v1079 = vmax.f32 %v1071, %v1075
        %v1080 = vmax.f32 %v1072, %v1078
        %v1081 = vsub.f32 %v1071, %v1079
        %v1082 = vsub.f32 %v1072, %v1080
        %v1083 = vmul.f32 %v1081, 1.442695
        %v1084 = vpow.pop %v1083
        %v1085 = vmul.f32 %v1082, 1.442695
        %v1086 = vpow.pop %v1085
        %1088 = vset.pattern.permute.xlu0 0
        %1089 = vperm.xlu0 %1088, %v1079
        %v1090 = vpop.permute.xlu0 %1089
        %1093 = vset.pattern.permute.xlu0 0
        %1094 = vperm.xlu0 %1093, %v1080
        %v1095 = vpop.permute.xlu0 %1094
        %v1097 = vsub.f32 %v1068, %v1090
        %v1098 = vsub.f32 %v1069, %v1095
        %v1099 = vmul.f32 %v1097, 1.442695
        %v1100 = vpow.pop %v1099
        %v1101 = vmul.f32 %v1098, 1.442695
        %v1102 = vpow.pop %v1101
        %s1103 = scalar_lea.vmem [#allocation3], 32
        %v1104 = vld [vmem:[%s1103] sm:$0xff]
        %v1105 = vld [vmem:[%s1103 + $0x8] sm:$0xff]
        %v1106 = vmul.f32 %v1084, %v1104
        %v1107 = vmul.f32 %v1086, %v1105
        %v1108 = vsel %vm685, %v1100, 0.0
        %1109 = vadd.xlane.f32.xlu0 %v1108
        %v1110 = vpop.xlane.xlu0 %1109
        %v1111 = vsel %vm685, %v1102, 0.0
        %1112 = vadd.xlane.f32.xlu0 %v1111
        %v1113 = vpop.xlane.xlu0 %1112
        %v1114 = vadd.f32 %v1106, %v1110
        %v1115 = vadd.f32 %v1107, %v1113
        %1116 = vst.msk [vmem:[%s1103] sm:$0xff] %vm728, %v1114
        %1117 = vst.msk [vmem:[%s1103 + $0x8] sm:$0xff] %vm728, %v1115
        %v1118 = vpack.c.bf16 %v1102, %v1100
        %v1121 = vunpack.c.l.b16 %v1005
        %v1122 = vunpack.c.l.b16 %v1006
        %v1123 = vpack.c.b16 %v1122, %v1121
        %1124 = vrot.lane.b32.xlu0 %v1123, 64
        %v1125 = vpop.permute.xlu0 %1124
        %v1128 = vsel %vm685, %v1118, 0
        %1130 = vmatprep.subr.bf16.mxu0 0
        %1131 = vmatpush1.bf16.msra.mxu0 %v1125
        %1132 = vmatprep.subr.bf16.mxu0 0
        %1133 = vmatpush1.bf16.msra.mxu0 0
        %1134 = vmatprep.subr.bf16.mxu0 0
        %1135 = vmatpush1.bf16.msra.mxu0 0
        %1136 = vmatprep.subr.bf16.mxu0 0
        %1137 = vmatpush1.bf16.msra.mxu0 0
        %1138 = vmatprep.subr.bf16.mxu0 0
        %1139 = vmatpush1.bf16.msra.mxu0 0
        %1140 = vmatprep.subr.bf16.mxu0 0
        %1141 = vmatpush1.bf16.msra.mxu0 0
        %1142 = vmatprep.subr.bf16.mxu0 0
        %1143 = vmatpush1.bf16.msra.mxu0 0
        %1144 = vmatprep.subr.bf16.mxu0 0
        %1145 = vmatpush1.bf16.msra.mxu0 0
        %1146 = vmatprep.subr.bf16.mxu0 0
        %1147 = vmatpush1.bf16.msra.mxu0 0
        %1148 = vmatprep.subr.bf16.mxu0 0
        %1149 = vmatpush1.bf16.msra.mxu0 0
        %1150 = vmatprep.subr.bf16.mxu0 0
        %1151 = vmatpush1.bf16.msra.mxu0 0
        %1152 = vmatprep.subr.bf16.mxu0 0
        %1153 = vmatpush1.bf16.msra.mxu0 0
        %1154 = vmatprep.subr.bf16.mxu0 0
        %1155 = vmatpush1.bf16.msra.mxu0 0
        %1156 = vmatprep.subr.bf16.mxu0 0
        %1157 = vmatpush1.bf16.msra.mxu0 0
        %1158 = vmatprep.subr.bf16.mxu0 0
        %1159 = vmatpush1.bf16.msra.mxu0 0
        %1160 = vmatprep.subr.bf16.mxu0 0
        %1161 = vmatpush1.bf16.msra.mxu0 0
        %1162 = vmatprep.mubr.bf16.mxu0 0
        %1163 = vmatmul.mubr.bf16.gmra.mrb[0].mxu0 %v1128
        %v1164 = vpop.f32.mrb[0].mxu0
        %v1165 = vadd.f32 0.0, %v1164
        %v1166 = vpop.f32.mrb[0].mxu0
        %v1167 = vpop.f32.mrb[0].mxu0
        %v1168 = vadd.f32 0.0, %v1167
        %v1169 = vpop.f32.mrb[0].mxu0
        %1170 = vdwg.mxu0
        %v1171 = vld [vmem:[#allocation4] sm:$0xff]
        %v1172 = vld [vmem:[#allocation4 + $0x8] sm:$0xff]
        %1174 = vset.pattern.permute.xlu0 0
        %1175 = vperm.xlu0 %1174, %v1084
        %v1176 = vpop.permute.xlu0 %1175
        %1179 = vset.pattern.permute.xlu0 0
        %1180 = vperm.xlu0 %1179, %v1086
        %v1181 = vpop.permute.xlu0 %1180
        %v1183 = vmul.f32 %v1176, %v1171
        %v1184 = vmul.f32 %v1181, %v1172
        %1187 = vrot.lane.b32.xlu0 %v1165, 64
        %v1188 = vpop.permute.xlu0 %1187
        %1189 = vrot.lane.b32.xlu0 %v1168, 64
        %v1190 = vpop.permute.xlu0 %1189
        %v1193 = vadd.f32 %v1183, %v1188
        %v1194 = vadd.f32 %v1184, %v1190
        %vm1195 = vcmask 785920
        %1196 = vst.msk [vmem:[#allocation4] sm:$0xff] %vm1195, %v1193
        %1197 = vst.msk [vmem:[#allocation4 + $0x8] sm:$0xff] %vm1195, %v1194
        %1198 = vst.msk [vmem:[%s1070] sm:$0xff] %vm728, %v1079
        %1199 = vst.msk [vmem:[%s1070 + $0x8] sm:$0xff] %vm728, %v1080
        %v1200 = vld [vmem:[%s410] sm:$0xf]
        %v1201 = vld [vmem:[%s410 + $0x4] sm:$0xf]
        %v1202 = vld [vmem:[%s420] sm:$0xf]
        %v1203 = vld [vmem:[%s420 + $0x4] sm:$0xf]
        %v1204 = vld [vmem:[%s430] sm:$0xf]
        %v1205 = vld [vmem:[%s430 + $0x4] sm:$0xf]
        %v1208 = vunpack.c.l.b16 %v1200
        %v1209 = vunpack.c.l.b16 %v1201
        %v1210 = vpack.c.b16 %v1209, %v1208
        %1211 = vrot.lane.b32.xlu0 %v1210, 32
        %v1212 = vpop.permute.xlu0 %1211
        %v1215 = vunpack.c.l.b16 %v1202
        %v1216 = vunpack.c.l.b16 %v1203
        %v1217 = vpack.c.b16 %v1216, %v1215
        %1218 = vrot.lane.b32.xlu0 %v1217, 32
        %v1219 = vpop.permute.xlu0 %1218
        %v1221 = vsel %vm627, %v1212, 0
        %v1224 = vsel %vm627, %v1219, 0
        %1226 = vmatprep.subr.bf16.mxu0 0
        %1227 = vmatpush1.bf16.xpose.msra.mxu0 %v1224
        %1228 = vmatprep.subr.bf16.mxu0 0
        %1229 = vmatpush1.bf16.xpose.msra.mxu0 0
        %1230 = vmatprep.subr.bf16.mxu0 0
        %1231 = vmatpush1.bf16.xpose.msra.mxu0 0
        %1232 = vmatprep.subr.bf16.mxu0 0
        %1233 = vmatpush1.bf16.xpose.msra.mxu0 0
        %1234 = vmatprep.subr.bf16.mxu0 0
        %1235 = vmatpush1.bf16.xpose.msra.mxu0 0
        %1236 = vmatprep.subr.bf16.mxu0 0
        %1237 = vmatpush1.bf16.xpose.msra.mxu0 0
        %1238 = vmatprep.subr.bf16.mxu0 0
        %1239 = vmatpush1.bf16.xpose.msra.mxu0 0
        %1240 = vmatprep.subr.bf16.mxu0 0
        %1241 = vmatpush1.bf16.xpose.msra.mxu0 0
        %1242 = vmatprep.subr.bf16.mxu0 0
        %1243 = vmatpush1.bf16.xpose.msra.mxu0 0
        %1244 = vmatprep.subr.bf16.mxu0 0
        %1245 = vmatpush1.bf16.xpose.msra.mxu0 0
        %1246 = vmatprep.subr.bf16.mxu0 0
        %1247 = vmatpush1.bf16.xpose.msra.mxu0 0
        %1248 = vmatprep.subr.bf16.mxu0 0
        %1249 = vmatpush1.bf16.xpose.msra.mxu0 0
        %1250 = vmatprep.subr.bf16.mxu0 0
        %1251 = vmatpush1.bf16.xpose.msra.mxu0 0
        %1252 = vmatprep.subr.bf16.mxu0 0
        %1253 = vmatpush1.bf16.xpose.msra.mxu0 0
        %1254 = vmatprep.subr.bf16.mxu0 0
        %1255 = vmatpush1.bf16.xpose.msra.mxu0 0
        %1256 = vmatprep.subr.bf16.mxu0 0
        %1257 = vmatpush1.bf16.xpose.msra.mxu0 0
        %1258 = vmatprep.mubr.bf16.mxu0 0
        %1259 = vmatmul.mubr.bf16.gmra.mrb[0].mxu0 %v1221
        %v1260 = vpop.f32.mrb[0].mxu0
        %v1261 = vadd.f32 0.0, %v1260
        %v1262 = vpop.f32.mrb[0].mxu0
        %v1263 = vpop.f32.mrb[0].mxu0
        %v1264 = vadd.f32 0.0, %v1263
        %v1265 = vpop.f32.mrb[0].mxu0
        %1266 = vdwg.mxu0
        %v1267 = vsel %vm680, %v1261, -3.4028235e+38
        %v1268 = vsel %vm680, %v1264, -3.4028235e+38
        %s1269 = scalar_lea.vmem [#allocation2], 48
        %v1270 = vld [vmem:[%s1269] sm:$0xff]
        %v1271 = vld [vmem:[%s1269 + $0x8] sm:$0xff]
        %v1272 = vsel %vm685, %v1267, -inf
        %1273 = vmax.xlane.f32.xlu0 %v1272
        %v1274 = vpop.xlane.xlu0 %1273
        %v1275 = vsel %vm685, %v1268, -inf
        %1276 = vmax.xlane.f32.xlu0 %v1275
        %v1277 = vpop.xlane.xlu0 %1276
        %v1278 = vmax.f32 %v1270, %v1274
        %v1279 = vmax.f32 %v1271, %v1277
        %v1280 = vsub.f32 %v1270, %v1278
        %v1281 = vsub.f32 %v1271, %v1279
        %v1282 = vmul.f32 %v1280, 1.442695
        %v1283 = vpow.pop %v1282
        %v1284 = vmul.f32 %v1281, 1.442695
        %v1285 = vpow.pop %v1284
        %1287 = vset.pattern.permute.xlu0 0
        %1288 = vperm.xlu0 %1287, %v1278
        %v1289 = vpop.permute.xlu0 %1288
        %1292 = vset.pattern.permute.xlu0 0
        %1293 = vperm.xlu0 %1292, %v1279
        %v1294 = vpop.permute.xlu0 %1293
        %v1296 = vsub.f32 %v1267, %v1289
        %v1297 = vsub.f32 %v1268, %v1294
        %v1298 = vmul.f32 %v1296, 1.442695
        %v1299 = vpow.pop %v1298
        %v1300 = vmul.f32 %v1297, 1.442695
        %v1301 = vpow.pop %v1300
        %s1302 = scalar_lea.vmem [#allocation3], 48
        %v1303 = vld [vmem:[%s1302] sm:$0xff]
        %v1304 = vld [vmem:[%s1302 + $0x8] sm:$0xff]
        %v1305 = vmul.f32 %v1283, %v1303
        %v1306 = vmul.f32 %v1285, %v1304
        %v1307 = vsel %vm685, %v1299, 0.0
        %1308 = vadd.xlane.f32.xlu0 %v1307
        %v1309 = vpop.xlane.xlu0 %1308
        %v1310 = vsel %vm685, %v1301, 0.0
        %1311 = vadd.xlane.f32.xlu0 %v1310
        %v1312 = vpop.xlane.xlu0 %1311
        %v1313 = vadd.f32 %v1305, %v1309
        %v1314 = vadd.f32 %v1306, %v1312
        %1315 = vst.msk [vmem:[%s1302] sm:$0xff] %vm728, %v1313
        %1316 = vst.msk [vmem:[%s1302 + $0x8] sm:$0xff] %vm728, %v1314
        %v1317 = vpack.c.bf16 %v1301, %v1299
        %v1320 = vunpack.c.l.b16 %v1204
        %v1321 = vunpack.c.l.b16 %v1205
        %v1322 = vpack.c.b16 %v1321, %v1320
        %1323 = vrot.lane.b32.xlu0 %v1322, 32
        %v1324 = vpop.permute.xlu0 %1323
        %v1327 = vsel %vm685, %v1317, 0
        %1329 = vmatprep.subr.bf16.mxu0 0
        %1330 = vmatpush1.bf16.msra.mxu0 %v1324
        %1331 = vmatprep.subr.bf16.mxu0 0
        %1332 = vmatpush1.bf16.msra.mxu0 0
        %1333 = vmatprep.subr.bf16.mxu0 0
        %1334 = vmatpush1.bf16.msra.mxu0 0
        %1335 = vmatprep.subr.bf16.mxu0 0
        %1336 = vmatpush1.bf16.msra.mxu0 0
        %1337 = vmatprep.subr.bf16.mxu0 0
        %1338 = vmatpush1.bf16.msra.mxu0 0
        %1339 = vmatprep.subr.bf16.mxu0 0
        %1340 = vmatpush1.bf16.msra.mxu0 0
        %1341 = vmatprep.subr.bf16.mxu0 0
        %1342 = vmatpush1.bf16.msra.mxu0 0
        %1343 = vmatprep.subr.bf16.mxu0 0
        %1344 = vmatpush1.bf16.msra.mxu0 0
        %1345 = vmatprep.subr.bf16.mxu0 0
        %1346 = vmatpush1.bf16.msra.mxu0 0
        %1347 = vmatprep.subr.bf16.mxu0 0
        %1348 = vmatpush1.bf16.msra.mxu0 0
        %1349 = vmatprep.subr.bf16.mxu0 0
        %1350 = vmatpush1.bf16.msra.mxu0 0
        %1351 = vmatprep.subr.bf16.mxu0 0
        %1352 = vmatpush1.bf16.msra.mxu0 0
        %1353 = vmatprep.subr.bf16.mxu0 0
        %1354 = vmatpush1.bf16.msra.mxu0 0
        %1355 = vmatprep.subr.bf16.mxu0 0
        %1356 = vmatpush1.bf16.msra.mxu0 0
        %1357 = vmatprep.subr.bf16.mxu0 0
        %1358 = vmatpush1.bf16.msra.mxu0 0
        %1359 = vmatprep.subr.bf16.mxu0 0
        %1360 = vmatpush1.bf16.msra.mxu0 0
        %1361 = vmatprep.mubr.bf16.mxu0 0
        %1362 = vmatmul.mubr.bf16.gmra.mrb[0].mxu0 %v1327
        %v1363 = vpop.f32.mrb[0].mxu0
        %v1364 = vadd.f32 0.0, %v1363
        %v1365 = vpop.f32.mrb[0].mxu0
        %v1366 = vpop.f32.mrb[0].mxu0
        %v1367 = vadd.f32 0.0, %v1366
        %v1368 = vpop.f32.mrb[0].mxu0
        %1369 = vdwg.mxu0
        %v1370 = vld [vmem:[#allocation4] sm:$0xff]
        %v1371 = vld [vmem:[#allocation4 + $0x8] sm:$0xff]
        %1373 = vset.pattern.permute.xlu0 0
        %1374 = vperm.xlu0 %1373, %v1283
        %v1375 = vpop.permute.xlu0 %1374
        %1378 = vset.pattern.permute.xlu0 0
        %1379 = vperm.xlu0 %1378, %v1285
        %v1380 = vpop.permute.xlu0 %1379
        %v1382 = vmul.f32 %v1375, %v1370
        %v1383 = vmul.f32 %v1380, %v1371
        %1386 = vrot.lane.b32.xlu0 %v1364, 96
        %v1387 = vpop.permute.xlu0 %1386
        %1388 = vrot.lane.b32.xlu0 %v1367, 96
        %v1389 = vpop.permute.xlu0 %1388
        %v1392 = vadd.f32 %v1382, %v1387
        %v1393 = vadd.f32 %v1383, %v1389
        %vm1394 = vcmask 1048320
        %1395 = vst.msk [vmem:[#allocation4] sm:$0xff] %vm1394, %v1392
        %1396 = vst.msk [vmem:[#allocation4 + $0x8] sm:$0xff] %vm1394, %v1393
        %1397 = vst.msk [vmem:[%s1269] sm:$0xff] %vm728, %v1278
        %1398 = vst.msk [vmem:[%s1269 + $0x8] sm:$0xff] %vm728, %v1279
        // Predicated region
        $region57: #{_lambda_.3} parent=51 // pred_check
          %p1399 = pneg %p440
        $region58: #{_lambda_.3} parent=51 // pred_check_branch
          %1401 = sbr.rel (%p1399) target = $region60
        $region59: #{_lambda_.3} parent=51 // pred_region
          %v1402 = vld [vmem:[#allocation3] sm:$0xff]
          %v1403 = vld [vmem:[#allocation3 + $0x8] sm:$0xff]
          %v1404 = vld [vmem:[%s904] sm:$0xff]
          %v1405 = vld [vmem:[%s904 + $0x8] sm:$0xff]
          %v1406 = vld [vmem:[%s1103] sm:$0xff]
          %v1407 = vld [vmem:[%s1103 + $0x8] sm:$0xff]
          %v1408 = vld [vmem:[%s1302] sm:$0xff]
          %v1409 = vld [vmem:[%s1302 + $0x8] sm:$0xff]
          %1412 = vrot.lane.b32.xlu0 %v1404, 1
          %v1413 = vpop.permute.xlu0 %1412
          %1414 = vrot.lane.b32.xlu0 %v1405, 1
          %v1415 = vpop.permute.xlu0 %1414
          %1420 = vrot.lane.b32.xlu0 %v1406, 2
          %v1421 = vpop.permute.xlu0 %1420
          %1422 = vrot.lane.b32.xlu0 %v1407, 2
          %v1423 = vpop.permute.xlu0 %1422
          %1428 = vrot.lane.b32.xlu0 %v1408, 3
          %v1429 = vpop.permute.xlu0 %1428
          %1430 = vrot.lane.b32.xlu0 %v1409, 3
          %v1431 = vpop.permute.xlu0 %1430
          %v1434 = vsel %vm728, %v1402, %v1413
          %v1435 = vsel %vm728, %v1403, %v1415
          %vm1436 = vcmask 15360
          %v1437 = vsel %vm1436, %v1434, %v1421
          %v1438 = vsel %vm1436, %v1435, %v1423
          %vm1439 = vcmask 23552
          %v1440 = vsel %vm1439, %v1437, %v1429
          %v1441 = vsel %vm1439, %v1438, %v1431
          %v1442 = vld [vmem:[%s6] sm:$0xf]
          %vm1443 = vcmask 31744
          %v1445 = vsel %vm1443, %v1440, 0
          %v1448 = vsel %vm1443, %v1441, 0
          %vm1450 = vcmask 1043456
          %v1452 = vsel %vm1450, %v1442, 0
          %1454 = vmatprep.subr.mxu0 0.0
          %1455 = vmatpush1.msra.mxu0 %v1452
          %1456 = vmatprep.subr.mxu0 0.0
          %1457 = vmatpush1.msra.mxu0 0.0
          %1458 = vmatprep.subr.mxu0 0.0
          %1459 = vmatpush1.msra.mxu0 0.0
          %1460 = vmatprep.subr.mxu0 0.0
          %1461 = vmatpush1.msra.mxu0 0.0
          %1462 = vmatprep.subr.mxu0 0.0
          %1463 = vmatpush1.msra.mxu0 0.0
          %1464 = vmatprep.subr.mxu0 0.0
          %1465 = vmatpush1.msra.mxu0 0.0
          %1466 = vmatprep.subr.mxu0 0.0
          %1467 = vmatpush1.msra.mxu0 0.0
          %1468 = vmatprep.subr.mxu0 0.0
          %1469 = vmatpush1.msra.mxu0 0.0
          %1470 = vmatprep.subr.mxu0 0.0
          %1471 = vmatpush1.msra.mxu0 0.0
          %1472 = vmatprep.subr.mxu0 0.0
          %1473 = vmatpush1.msra.mxu0 0.0
          %1474 = vmatprep.subr.mxu0 0.0
          %1475 = vmatpush1.msra.mxu0 0.0
          %1476 = vmatprep.subr.mxu0 0.0
          %1477 = vmatpush1.msra.mxu0 0.0
          %1478 = vmatprep.subr.mxu0 0.0
          %1479 = vmatpush1.msra.mxu0 0.0
          %1480 = vmatprep.subr.mxu0 0.0
          %1481 = vmatpush1.msra.mxu0 0.0
          %1482 = vmatprep.subr.mxu0 0.0
          %1483 = vmatpush1.msra.mxu0 0.0
          %1484 = vmatprep.subr.mxu0 0.0
          %1485 = vmatpush1.msra.mxu0 0.0
          %1486 = vmatprep.subr.mxu0 0.0
          %1487 = vmatpush1.msra.mxu0 0.0
          %1488 = vmatprep.subr.mxu0 0.0
          %1489 = vmatpush1.msra.mxu0 0.0
          %1490 = vmatprep.subr.mxu0 0.0
          %1491 = vmatpush1.msra.mxu0 0.0
          %1492 = vmatprep.subr.mxu0 0.0
          %1493 = vmatpush1.msra.mxu0 0.0
          %1494 = vmatprep.subr.mxu0 0.0
          %1495 = vmatpush1.msra.mxu0 0.0
          %1496 = vmatprep.subr.mxu0 0.0
          %1497 = vmatpush1.msra.mxu0 0.0
          %1498 = vmatprep.subr.mxu0 0.0
          %1499 = vmatpush1.msra.mxu0 0.0
          %1500 = vmatprep.subr.mxu0 0.0
          %1501 = vmatpush1.msra.mxu0 0.0
          %1502 = vmatprep.subr.mxu0 0.0
          %1503 = vmatpush1.msra.mxu0 0.0
          %1504 = vmatprep.subr.mxu0 0.0
          %1505 = vmatpush1.msra.mxu0 0.0
          %1506 = vmatprep.subr.mxu0 0.0
          %1507 = vmatpush1.msra.mxu0 0.0
          %1508 = vmatprep.subr.mxu0 0.0
          %1509 = vmatpush1.msra.mxu0 0.0
          %1510 = vmatprep.subr.mxu0 0.0
          %1511 = vmatpush1.msra.mxu0 0.0
          %1512 = vmatprep.subr.mxu0 0.0
          %1513 = vmatpush1.msra.mxu0 0.0
          %1514 = vmatprep.subr.mxu0 0.0
          %1515 = vmatpush1.msra.mxu0 0.0
          %1516 = vmatprep.subr.mxu0 0.0
          %1517 = vmatpush1.msra.mxu0 0.0
          %1518 = vmatprep.mubr.f32.mxu0 0.0
          %1519 = vmatmul.mubr.f32.gmra.mrb[0].mxu0 %v1445
          %v1520 = vpop.f32.mrb[0].mxu0
          %v1521 = vadd.f32 0.0, %v1520
          %v1522 = vpop.f32.mrb[0].mxu0
          %1523 = vmatprep.mubr.f32.mxu0 0.0
          %1524 = vmatmul.mubr.f32.gmra.mrb[0].mxu0 %v1448
          %v1525 = vpop.f32.mrb[0].mxu0
          %v1526 = vadd.f32 0.0, %v1525
          %v1527 = vpop.f32.mrb[0].mxu0
          %1528 = vdwg.mxu0
          %v1529 = vld [vmem:[#allocation4] sm:$0xff]
          %v1530 = vld [vmem:[#allocation4 + $0x8] sm:$0xff]
          %v1531 = vrcp.pop %v1521
          %v1532 = vrcp.pop %v1526
          %v1533 = vmul.f32 %v1529, %v1531
          %v1534 = vmul.f32 %v1530, %v1532
          %v1535 = vpack.c.bf16 %v1534, %v1533
          %v1536 = vld [vmem:[%s7] sm:$0xf]
          %v1537 = vld [vmem:[%s7 + $0x4] sm:$0xf]
          %v1538 = vld [vmem:[%s7 + $0x8] sm:$0xf]
          %v1539 = vld [vmem:[%s7 + $0xc] sm:$0xf]
          %v1540 = vld [vmem:[%s7 + $0x10] sm:$0xf]
          %v1541 = vld [vmem:[%s7 + $0x14] sm:$0xf]
          %v1542 = vld [vmem:[%s7 + $0x18] sm:$0xf]
          %v1543 = vld [vmem:[%s7 + $0x1c] sm:$0xf]
          %v1544 = vld [vmem:[%s7 + $0x20] sm:$0xf]
          %v1545 = vld [vmem:[%s7 + $0x24] sm:$0xf]
          %v1546 = vld [vmem:[%s7 + $0x28] sm:$0xf]
          %v1547 = vld [vmem:[%s7 + $0x2c] sm:$0xf]
          %v1548 = vld [vmem:[%s7 + $0x30] sm:$0xf]
          %v1549 = vld [vmem:[%s7 + $0x34] sm:$0xf]
          %v1550 = vld [vmem:[%s7 + $0x38] sm:$0xf]
          %v1551 = vld [vmem:[%s7 + $0x3c] sm:$0xf]
          %v1568 = vunpack.c.l.b16 %v1536
          %v1569 = vunpack.c.l.b16 %v1537
          %v1570 = vunpack.c.l.b16 %v1538
          %v1571 = vunpack.c.l.b16 %v1539
          %v1572 = vunpack.c.l.b16 %v1540
          %v1573 = vunpack.c.l.b16 %v1541
          %v1574 = vunpack.c.l.b16 %v1542
          %v1575 = vunpack.c.l.b16 %v1543
          %v1576 = vunpack.c.l.b16 %v1544
          %v1577 = vunpack.c.l.b16 %v1545
          %v1578 = vunpack.c.l.b16 %v1546
          %v1579 = vunpack.c.l.b16 %v1547
          %v1580 = vunpack.c.l.b16 %v1548
          %v1581 = vunpack.c.l.b16 %v1549
          %v1582 = vunpack.c.l.b16 %v1550
          %v1583 = vunpack.c.l.b16 %v1551
          %v1584 = vpack.c.b16 %v1569, %v1568
          %v1585 = vpack.c.b16 %v1571, %v1570
          %v1586 = vpack.c.b16 %v1573, %v1572
          %v1587 = vpack.c.b16 %v1575, %v1574
          %v1588 = vpack.c.b16 %v1577, %v1576
          %v1589 = vpack.c.b16 %v1579, %v1578
          %v1590 = vpack.c.b16 %v1581, %v1580
          %v1591 = vpack.c.b16 %v1583, %v1582
          %1600 = vmatprep.subr.bf16.mxu0 0
          %1601 = vmatpush1.bf16.msra.mxu0 %v1584
          %1602 = vmatprep.subr.bf16.mxu0 0
          %1603 = vmatpush1.bf16.msra.mxu0 %v1585
          %1604 = vmatprep.subr.bf16.mxu0 0
          %1605 = vmatpush1.bf16.msra.mxu0 %v1586
          %1606 = vmatprep.subr.bf16.mxu0 0
          %1607 = vmatpush1.bf16.msra.mxu0 %v1587
          %1608 = vmatprep.subr.bf16.mxu0 0
          %1609 = vmatpush1.bf16.msra.mxu0 %v1588
          %1610 = vmatprep.subr.bf16.mxu0 0
          %1611 = vmatpush1.bf16.msra.mxu0 %v1589
          %1612 = vmatprep.subr.bf16.mxu0 0
          %1613 = vmatpush1.bf16.msra.mxu0 %v1590
          %1614 = vmatprep.subr.bf16.mxu0 0
          %1615 = vmatpush1.bf16.msra.mxu0 %v1591
          %1616 = vmatprep.subr.bf16.mxu0 0
          %1617 = vmatpush1.bf16.msra.mxu0 0
          %1618 = vmatprep.subr.bf16.mxu0 0
          %1619 = vmatpush1.bf16.msra.mxu0 0
          %1620 = vmatprep.subr.bf16.mxu0 0
          %1621 = vmatpush1.bf16.msra.mxu0 0
          %1622 = vmatprep.subr.bf16.mxu0 0
          %1623 = vmatpush1.bf16.msra.mxu0 0
          %1624 = vmatprep.subr.bf16.mxu0 0
          %1625 = vmatpush1.bf16.msra.mxu0 0
          %1626 = vmatprep.subr.bf16.mxu0 0
          %1627 = vmatpush1.bf16.msra.mxu0 0
          %1628 = vmatprep.subr.bf16.mxu0 0
          %1629 = vmatpush1.bf16.msra.mxu0 0
          %1630 = vmatprep.subr.bf16.mxu0 0
          %1631 = vmatpush1.bf16.msra.mxu0 0
          %1632 = vmatprep.mubr.bf16.mxu0 0
          %1633 = vmatmul.mubr.bf16.gmra.mrb[0].mxu0 %v1535
          %v1634 = vpop.f32.mrb[0].mxu0
          %v1635 = vadd.f32 0.0, %v1634
          %v1636 = vpop.f32.mrb[0].mxu0
          %v1637 = vpop.f32.mrb[0].mxu0
          %v1638 = vadd.f32 0.0, %v1637
          %v1639 = vpop.f32.mrb[0].mxu0
          %1640 = vdwg.mxu0
          %1641 = vst [vmem:[%s401] sm:$0xff] %v1635
          %1642 = vst [vmem:[%s401 + $0x8] sm:$0xff] %v1638
        $region60: #{_lambda_.3} parent=51 // pred_fallthru
          _
        %s1643 = sand.u32 %s247, 1
        %s1644 = scalar_lea.sflag [#allocation6], %s1643
        %s1645 = sand.u32 %s247, 1
        %s1646 = smul.addr %s1645, 16
        %s1647 = scalar_lea.vmem [#allocation5], %s1646
        // Predicated region
        $region61: #{_lambda_.3} parent=51 // pred_check
          %p1648 = pneg %p257
        $region62: #{_lambda_.3} parent=51 // pred_check_branch
          %1650 = sbr.rel (%p1648) target = $region64
        $region63: #{_lambda_.3} parent=51 // pred_region
          %s1651 = smul.u32 2, %s28
          %s1653 = ssub.s32 256, 256
          %1654 = vsyncadd %s1644, %s1653
          %s1655 = smul.addr %s27, 2
          %s1656 = sadd.s32 %s1651, %s1655
          %s1657 = smul.addr %s1656, 128
          %s1658 = scalar_lea.hbm %s8, %s1657
          %s1659 = sshll.u32 %s1647, 4
          %s1660 = int_to_ptr.vmem [resolvable:$true] %s1659
          %1665 = dma.vmem_to_hbm [thread:$0]  %s1660, 256, %s1658, %s1644, 128, 128, 8
        $region64: #{_lambda_.3} parent=51 // pred_fallthru
          _
      $region52: #{_lambda_.3} parent=5 // pred_fallthru
        _
      %p1666 = scmp.le.s32.totalorder 2, %s17
      // Predicated region
      $region65: #{_lambda_.3} parent=5 // pred_check
        %p1667 = pneg %p1666
      $region66: #{_lambda_.3} parent=5 // pred_check_branch
        %1669 = sbr.rel (%p1667) target = $region68
      $region67: #{_lambda_.3} parent=5 // pred_region
        %s1670 = ssub.s32 %s17, 2
        // Predicated region
        $region69: #{_lambda_.3} parent=67 // pred_check
          %p1671 = pneg %p263
        $region70: #{_lambda_.3} parent=67 // pred_check_branch
          %1673 = sbr.rel (%p1671) target = $region72
        $region71: #{_lambda_.3} parent=67 // pred_region
          %s1674 = sand.u32 %s248, 1
          %s1675 = scalar_lea.sflag [#allocation6], %s1674
          %s1676 = sand.u32 %s248, 1
          %s1677 = smul.addr %s1676, 16
          %s1678 = scalar_lea.vmem [#allocation5], %s1677
          %1679 = dma.done %s1675, 256
        $region72: #{_lambda_.3} parent=67 // pred_fallthru
          _
      $region68: #{_lambda_.3} parent=5 // pred_fallthru
        _
    $region6: #{_lambda_.3} parent=1 // loop_footer
      %s21 = sadd.s32 1, %s17
    $region7: #{_lambda_.3} parent=1 // loop_footer_branch
      %16 = sbr.rel target = $region3
    $region8: #{_lambda_.3} parent=1 // loop_exit
      _
    %1680 = vsyncpa [#allocation6], 1
    %s1681 = scalar_lea.sflag [#allocation6], 1
    %1682 = vsyncpa %s1681, 1

</llo_original>
